<compile_context>
chip_gen: v7x
topology: tpu7x:2x2x1
jax: 0.10.0
libtpu: 0.0.40
codegen_flags: <defaults>
</compile_context>

<pallas_src>
import functools

import jax
import jax.numpy as jnp
from jax.experimental import pallas as pl
from jax.experimental.pallas import tpu as pltpu

EPS = 1e-5  # torch.nn.InstanceNorm2d default eps (affine=False, no running stats)


def _double_conv_kernel(x_ref, w1r_ref, w2r_ref, o_ref, *, Ci, Co, H, W):
    # x_ref  : (H, Co*W)       lane-packed input plane for this batch
    #                          (lane = g*W + x; lane group g holds channel g % Ci)
    # w1r_ref: (Ci*9, 1, Co*W) circulant rows: row[d*9+ky*3+kx, 0, g*W+x]
    #                          = w1[g, (g+d) % Ci, ky, kx]
    # w2r_ref: (Co*9, 1, Co*W) same layout with (g+d) % Co for the second conv
    # o_ref  : (H, Co*W)       lane-dense output slab (channel co = lane group co)
    CoW = Co * W
    f32 = jnp.float32

    # Masks / index planes, hoisted out of all loops.
    lane_x = jax.lax.broadcasted_iota(jnp.int32, (H, CoW), 1) % W
    row_y = jax.lax.broadcasted_iota(jnp.int32, (H, CoW), 0)
    ok_xm = lane_x >= 1                  # "x-1" tap in range
    ok_xp = lane_x <= W - 2              # "x+1" tap in range
    ok_ym = row_y >= 1                   # "y-1" tap in range
    ok_yp = row_y <= H - 2               # "y+1" tap in range
    last_in_group = (jax.lax.broadcasted_iota(jnp.int32, (1, CoW), 1) % W) == W - 1
    inv_hw = 1.0 / float(H * W)

    def lroll(v, s):                     # cyclic roll along lanes (XLU)
        return pltpu.roll(v, shift=s % v.shape[1], axis=1)

    def sroll(v, s):                     # cyclic roll along sublanes (XLU)
        return pltpu.roll(v, shift=s % v.shape[0], axis=0)

    def conv3x3(src, n_delta, wr_ref):
        # Circulant 3x3 conv (no bias): output at lane group g is
        #   sum_d w[g, (g+d) % Cin] * channel[(g+d) % Cin]
        # where channel (g+d) is reached by one lane roll of -d*W.
        hm0 = jnp.where(ok_xm, lroll(src, 1), 0.0)    # src[., x-1], border-masked
        hp0 = jnp.where(ok_xp, lroll(src, -1), 0.0)   # src[., x+1], border-masked
        s0 = jnp.zeros((H, CoW), f32)                 # ky = 0 partial accumulator
        s1 = jnp.zeros((H, CoW), f32)                 # ky = 1 partial accumulator
        s2 = jnp.zeros((H, CoW), f32)                 # ky = 2 partial accumulator
        for d in range(n_delta):
            if d == 0:
                t, hm, hp = src, hm0, hp0
            else:
                sh = -d * W               # multiple of W -> x-masks stay valid
                t, hm, hp = lroll(src, sh), lroll(hm0, sh), lroll(hp0, sh)
            k = d * 9
            s0 = s0 + hm * wr_ref[k + 0] + t * wr_ref[k + 1] + hp * wr_ref[k + 2]
            s1 = s1 + hm * wr_ref[k + 3] + t * wr_ref[k + 4] + hp * wr_ref[k + 5]
            s2 = s2 + hm * wr_ref[k + 6] + t * wr_ref[k + 7] + hp * wr_ref[k + 8]
        up = jnp.where(ok_ym, sroll(s0, 1), 0.0)      # s0[y-1]
        dn = jnp.where(ok_yp, sroll(s2, -1), 0.0)     # s2[y+1]
        return up + s1 + dn

    def group_sum_bcast(v):
        # v: (1, Co*W).  Per-W-lane-group sums broadcast back to every lane of
        # the group.  Exact f32: cyclic window sums + select + spread (XLU/VPU).
        a = v
        s = 1
        while s < W:                      # a[l] = sum_{k<W} v[l-k]  (cyclic)
            a = a + lroll(a, s)
            s *= 2
        a = jnp.where(last_in_group, a, 0.0)   # true group sums sit at x == W-1
        s = 1
        while s < W:                      # spread them back over the group
            a = a + lroll(a, -s)
            s *= 2
        return a

    def inorm_relu(y):
        mean = group_sum_bcast(jnp.sum(y, axis=0, keepdims=True)) * inv_hw
        d = y - mean
        var = group_sum_bcast(jnp.sum(d * d, axis=0, keepdims=True)) * inv_hw
        return jnp.maximum(d * jax.lax.rsqrt(var + EPS), 0.0)

    y = conv3x3(x_ref[...].astype(f32), Ci, w1r_ref)
    y = inorm_relu(y)
    y = conv3x3(y, Co, w2r_ref)
    y = inorm_relu(y)
    o_ref[...] = y.astype(o_ref.dtype)


@jax.jit
def double_conv(x, w1, b1, w2, b2):
    """x: (B, Ci, H, W) NCHW float32.  w*: PyTorch layout (Co, Cin, 3, 3).
    b1/b2 are accepted for interface parity but unused: a constant per-channel
    bias is cancelled exactly by InstanceNorm2d's mean subtraction."""
    del b1, b2
    B, Ci, H, W = x.shape
    Co = w1.shape[0]
    CoW = Co * W
    assert W & (W - 1) == 0, "group-sum roll tree assumes power-of-two W"
    assert Co % Ci == 0, "circulant conv1 packing assumes Ci divides Co"

    # Lane-packed input (B, H, Co*W): lane group g holds input channel g % Ci
    # (only a Co/Ci-fold replication instead of the previous Co-fold tile).
    xp = jnp.transpose(x, (0, 2, 1, 3)).reshape(B, H, Ci * W)
    xp = jnp.tile(xp, (1, 1, Co // Ci)).astype(jnp.float32)

    def circulant_rows(w):
        # row[d*9 + ky*3 + kx, 0, g*W + x] = w[g, (g + d) % Cin, ky, kx]
        Cout, Cin = w.shape[0], w.shape[1]
        g = jnp.arange(Cout)
        d = jnp.arange(Cin)
        idx = (g[None, :] + d[:, None]) % Cin            # (Cin, Cout)
        wc = w[g[None, :], idx]                          # (Cin, Cout, 3, 3)
        rows = jnp.transpose(wc, (0, 2, 3, 1)).reshape(Cin * 9, Cout)
        rows = jnp.repeat(rows, W, axis=-1).reshape(Cin * 9, 1, Cout * W)
        return rows.astype(jnp.float32)

    w1r = circulant_rows(w1)
    w2r = circulant_rows(w2)

    kernel = functools.partial(_double_conv_kernel, Ci=Ci, Co=Co, H=H, W=W)
    out = pl.pallas_call(
        kernel,
        out_shape=jax.ShapeDtypeStruct((B, H, CoW), jnp.float32),
        grid_spec=pltpu.PrefetchScalarGridSpec(
            num_scalar_prefetch=0,
            grid=(B,),
            in_specs=[
                pl.BlockSpec((None, H, CoW), lambda b: (b, 0, 0)),
                pl.BlockSpec((Ci * 9, 1, CoW), lambda b: (0, 0, 0)),
                pl.BlockSpec((Co * 9, 1, CoW), lambda b: (0, 0, 0)),
            ],
            out_specs=pl.BlockSpec((None, H, CoW), lambda b: (b, 0, 0)),
        ),
        compiler_params=pltpu.CompilerParams(
            dimension_semantics=("parallel",)),
    )(xp, w1r, w2r)

    # Lane-dense (B, H, Co*W) slab -> NCHW (layout plumbing only).
    return out.reshape(B, H, Co, W).transpose(0, 2, 1, 3).astype(x.dtype)


def _reference_double_conv(x, w1, b1, w2, b2):
    """Pure-JAX reference mirroring the PyTorch module (biases included)."""
    def conv(x, w, b):
        y = jax.lax.conv_general_dilated(
            x, w, window_strides=(1, 1), padding=((1, 1), (1, 1)),
            dimension_numbers=("NCHW", "OIHW", "NCHW"),
            precision=jax.lax.Precision.HIGHEST)
        return y + b[None, :, None, None]

    def inorm_relu(y):
        m = jnp.mean(y, axis=(2, 3), keepdims=True)
        v = jnp.mean((y - m) ** 2, axis=(2, 3), keepdims=True)
        return jnp.maximum((y - m) * jax.lax.rsqrt(v + EPS), 0.0)

    y = inorm_relu(conv(x, w1, b1))
    return inorm_relu(conv(y, w2, b2))


if __name__ == "__main__":
    B, Ci, Co, H, W = 2, 4, 8, 16, 16
    key = jax.random.PRNGKey(0)
    k1, k2, k3, k4, k5 = jax.random.split(key, 5)

    x = jax.random.normal(k1, (B, Ci, H, W), jnp.float32)
    w1 = jax.random.normal(k2, (Co, Ci, 3, 3), jnp.float32) * 0.2
    b1 = jax.random.normal(k3, (Co,), jnp.float32) * 0.1
    w2 = jax.random.normal(k4, (Co, Co, 3, 3), jnp.float32) * 0.2
    b2 = jax.random.normal(k5, (Co,), jnp.float32) * 0.1

    out = jax.block_until_ready(double_conv(x, w1, b1, w2, b2))
    ref = _reference_double_conv(x, w1, b1, w2, b2)

    assert out.shape == (B, Co, H, W)
    max_err = float(jnp.max(jnp.abs(out - ref)))
    assert max_err < 1e-3, f"max abs error too large: {max_err}"

    print("KERNEL_OK")
</pallas_src>

<mosaic_0001>
module attributes {stable_mosaic.version = 11 : i64} {
  func.func @_double_conv_kernel(%arg0: i32, %arg1: memref<1x16x128xf32, #tpu.memory_space<vmem>>, %arg2: memref<36x1x128xf32, #tpu.memory_space<vmem>>, %arg3: memref<72x1x128xf32, #tpu.memory_space<vmem>>, %arg4: memref<1x16x128xf32, #tpu.memory_space<vmem>>) attributes {dimension_semantics = [#tpu.dimension_semantics<parallel>], iteration_bounds = array<i64: 2>, scalar_prefetch = 0 : i64, scratch_operands = 0 : i64, tpu.core_type = #tpu.core_type<tc>, window_params = [{transform_indices = @transform_0, window_bounds = array<i64: 1, 16, 128>}, {pipeline_mode = #tpu.pipeline_mode<synchronous>, transform_indices = @transform_1, window_bounds = array<i64: 36, 1, 128>}, {pipeline_mode = #tpu.pipeline_mode<synchronous>, transform_indices = @transform_2, window_bounds = array<i64: 72, 1, 128>}, {transform_indices = @transform_3, window_bounds = array<i64: 1, 16, 128>}]} {
    %0 = tpu.iota {dimensions = array<i32: 1>} : vector<16x128xi32>
    %c16_i32 = arith.constant 16 : i32
    %c0_i32 = arith.constant 0 : i32
    %1 = arith.cmpi eq, %c16_i32, %c0_i32 : i32
    %c1_i32 = arith.constant 1 : i32
    %2 = arith.select %1, %c1_i32, %c16_i32 : i32
    %3 = vector.broadcast %2 : i32 to vector<16x128xi32>
    %4 = arith.remsi %0, %3 : vector<16x128xi32>
    %c0_i32_0 = arith.constant 0 : i32
    %5 = vector.broadcast %c0_i32_0 : i32 to vector<16x128xi32>
    %6 = arith.cmpi ne, %4, %5 : vector<16x128xi32>
    %c0_i32_1 = arith.constant 0 : i32
    %7 = vector.broadcast %c0_i32_1 : i32 to vector<16x128xi32>
    %8 = arith.cmpi slt, %4, %7 : vector<16x128xi32>
    %c0_i32_2 = arith.constant 0 : i32
    %9 = arith.cmpi slt, %2, %c0_i32_2 : i32
    %10 = vector.broadcast %9 : i1 to vector<16x128xi1>
    %11 = vector.broadcast %10 : vector<16x128xi1> to vector<16x128xi1>
    %12 = arith.xori %8, %11 : vector<16x128xi1>
    %13 = arith.andi %12, %6 : vector<16x128xi1>
    %14 = vector.broadcast %2 : i32 to vector<16x128xi32>
    %15 = arith.addi %4, %14 : vector<16x128xi32>
    %16 = arith.select %13, %15, %4 : vector<16x128xi1>, vector<16x128xi32>
    %17 = tpu.iota {dimensions = array<i32: 0>} : vector<16x128xi32>
    %c1_i32_3 = arith.constant 1 : i32
    %18 = vector.broadcast %c1_i32_3 : i32 to vector<16x128xi32>
    %19 = arith.cmpi sge, %16, %18 : vector<16x128xi32>
    %c14_i32 = arith.constant 14 : i32
    %20 = vector.broadcast %c14_i32 : i32 to vector<16x128xi32>
    %21 = arith.cmpi sle, %16, %20 : vector<16x128xi32>
    %c1_i32_4 = arith.constant 1 : i32
    %22 = vector.broadcast %c1_i32_4 : i32 to vector<16x128xi32>
    %23 = arith.cmpi sge, %17, %22 : vector<16x128xi32>
    %c14_i32_5 = arith.constant 14 : i32
    %24 = vector.broadcast %c14_i32_5 : i32 to vector<16x128xi32>
    %25 = arith.cmpi sle, %17, %24 : vector<16x128xi32>
    %26 = tpu.iota {dimensions = array<i32: 1>} : vector<1x128xi32>
    %c16_i32_6 = arith.constant 16 : i32
    %c0_i32_7 = arith.constant 0 : i32
    %27 = arith.cmpi eq, %c16_i32_6, %c0_i32_7 : i32
    %c1_i32_8 = arith.constant 1 : i32
    %28 = arith.select %27, %c1_i32_8, %c16_i32_6 : i32
    %29 = vector.broadcast %28 : i32 to vector<1x128xi32>
    %30 = arith.remsi %26, %29 : vector<1x128xi32>
    %c0_i32_9 = arith.constant 0 : i32
    %31 = vector.broadcast %c0_i32_9 : i32 to vector<1x128xi32>
    %32 = arith.cmpi ne, %30, %31 : vector<1x128xi32>
    %c0_i32_10 = arith.constant 0 : i32
    %33 = vector.broadcast %c0_i32_10 : i32 to vector<1x128xi32>
    %34 = arith.cmpi slt, %30, %33 : vector<1x128xi32>
    %c0_i32_11 = arith.constant 0 : i32
    %35 = arith.cmpi slt, %28, %c0_i32_11 : i32
    %36 = vector.broadcast %35 : i1 to vector<1x128xi1>
    %37 = vector.broadcast %36 : vector<1x128xi1> to vector<1x128xi1>
    %38 = arith.xori %34, %37 : vector<1x128xi1>
    %39 = arith.andi %38, %32 : vector<1x128xi1>
    %40 = vector.broadcast %28 : i32 to vector<1x128xi32>
    %41 = arith.addi %30, %40 : vector<1x128xi32>
    %42 = arith.select %39, %41, %30 : vector<1x128xi1>, vector<1x128xi32>
    %c15_i32 = arith.constant 15 : i32
    %43 = vector.broadcast %c15_i32 : i32 to vector<1x128xi32>
    %44 = arith.cmpi eq, %42, %43 : vector<1x128xi32>
    %c0 = arith.constant 0 : index
    %c0_12 = arith.constant 0 : index
    %c0_13 = arith.constant 0 : index
    %45 = vector.load %arg1[%c0, %c0_12, %c0_13] : memref<1x16x128xf32, #tpu.memory_space<vmem>>, vector<1x16x128xf32>
    %46 = vector.shape_cast %45 : vector<1x16x128xf32> to vector<16x128xf32>
    %c1_i32_14 = arith.constant 1 : i32
    %47 = tpu.dynamic_rotate %46 by %c1_i32_14 dim 1 : vector<16x128xf32>, i32 -> vector<16x128xf32>
    %cst = arith.constant 0.000000e+00 : f32
    %48 = vector.broadcast %cst : f32 to vector<16x128xf32>
    %49 = arith.select %19, %47, %48 : vector<16x128xi1>, vector<16x128xf32>
    %c127_i32 = arith.constant 127 : i32
    %50 = tpu.dynamic_rotate %46 by %c127_i32 dim 1 : vector<16x128xf32>, i32 -> vector<16x128xf32>
    %cst_15 = arith.constant 0.000000e+00 : f32
    %51 = vector.broadcast %cst_15 : f32 to vector<16x128xf32>
    %52 = arith.select %21, %50, %51 : vector<16x128xi1>, vector<16x128xf32>
    %cst_16 = arith.constant 0.000000e+00 : f32
    %53 = vector.broadcast %cst_16 : f32 to vector<16x128xf32>
    %cst_17 = arith.constant 0.000000e+00 : f32
    %54 = vector.broadcast %cst_17 : f32 to vector<16x128xf32>
    %cst_18 = arith.constant 0.000000e+00 : f32
    %55 = vector.broadcast %cst_18 : f32 to vector<16x128xf32>
    %c0_19 = arith.constant 0 : index
    %c0_20 = arith.constant 0 : index
    %c0_21 = arith.constant 0 : index
    %56 = vector.load %arg2[%c0_19, %c0_20, %c0_21] : memref<36x1x128xf32, #tpu.memory_space<vmem>>, vector<1x1x128xf32>
    %57 = vector.shape_cast %56 : vector<1x1x128xf32> to vector<1x128xf32>
    %58 = vector.broadcast %57 : vector<1x128xf32> to vector<16x128xf32>
    %59 = arith.mulf %49, %58 : vector<16x128xf32>
    %60 = arith.addf %53, %59 : vector<16x128xf32>
    %c1 = arith.constant 1 : index
    %c0_22 = arith.constant 0 : index
    %c0_23 = arith.constant 0 : index
    %61 = vector.load %arg2[%c1, %c0_22, %c0_23] : memref<36x1x128xf32, #tpu.memory_space<vmem>>, vector<1x1x128xf32>
    %62 = vector.shape_cast %61 : vector<1x1x128xf32> to vector<1x128xf32>
    %63 = vector.broadcast %62 : vector<1x128xf32> to vector<16x128xf32>
    %64 = arith.mulf %46, %63 : vector<16x128xf32>
    %65 = arith.addf %60, %64 : vector<16x128xf32>
    %c2 = arith.constant 2 : index
    %c0_24 = arith.constant 0 : index
    %c0_25 = arith.constant 0 : index
    %66 = vector.load %arg2[%c2, %c0_24, %c0_25] : memref<36x1x128xf32, #tpu.memory_space<vmem>>, vector<1x1x128xf32>
    %67 = vector.shape_cast %66 : vector<1x1x128xf32> to vector<1x128xf32>
    %68 = vector.broadcast %67 : vector<1x128xf32> to vector<16x128xf32>
    %69 = arith.mulf %52, %68 : vector<16x128xf32>
    %70 = arith.addf %65, %69 : vector<16x128xf32>
    %c3 = arith.constant 3 : index
    %c0_26 = arith.constant 0 : index
    %c0_27 = arith.constant 0 : index
    %71 = vector.load %arg2[%c3, %c0_26, %c0_27] : memref<36x1x128xf32, #tpu.memory_space<vmem>>, vector<1x1x128xf32>
    %72 = vector.shape_cast %71 : vector<1x1x128xf32> to vector<1x128xf32>
    %73 = vector.broadcast %72 : vector<1x128xf32> to vector<16x128xf32>
    %74 = arith.mulf %49, %73 : vector<16x128xf32>
    %75 = arith.addf %54, %74 : vector<16x128xf32>
    %c4 = arith.constant 4 : index
    %c0_28 = arith.constant 0 : index
    %c0_29 = arith.constant 0 : index
    %76 = vector.load %arg2[%c4, %c0_28, %c0_29] : memref<36x1x128xf32, #tpu.memory_space<vmem>>, vector<1x1x128xf32>
    %77 = vector.shape_cast %76 : vector<1x1x128xf32> to vector<1x128xf32>
    %78 = vector.broadcast %77 : vector<1x128xf32> to vector<16x128xf32>
    %79 = arith.mulf %46, %78 : vector<16x128xf32>
    %80 = arith.addf %75, %79 : vector<16x128xf32>
    %c5 = arith.constant 5 : index
    %c0_30 = arith.constant 0 : index
    %c0_31 = arith.constant 0 : index
    %81 = vector.load %arg2[%c5, %c0_30, %c0_31] : memref<36x1x128xf32, #tpu.memory_space<vmem>>, vector<1x1x128xf32>
    %82 = vector.shape_cast %81 : vector<1x1x128xf32> to vector<1x128xf32>
    %83 = vector.broadcast %82 : vector<1x128xf32> to vector<16x128xf32>
    %84 = arith.mulf %52, %83 : vector<16x128xf32>
    %85 = arith.addf %80, %84 : vector<16x128xf32>
    %c6 = arith.constant 6 : index
    %c0_32 = arith.constant 0 : index
    %c0_33 = arith.constant 0 : index
    %86 = vector.load %arg2[%c6, %c0_32, %c0_33] : memref<36x1x128xf32, #tpu.memory_space<vmem>>, vector<1x1x128xf32>
    %87 = vector.shape_cast %86 : vector<1x1x128xf32> to vector<1x128xf32>
    %88 = vector.broadcast %87 : vector<1x128xf32> to vector<16x128xf32>
    %89 = arith.mulf %49, %88 : vector<16x128xf32>
    %90 = arith.addf %55, %89 : vector<16x128xf32>
    %c7 = arith.constant 7 : index
    %c0_34 = arith.constant 0 : index
    %c0_35 = arith.constant 0 : index
    %91 = vector.load %arg2[%c7, %c0_34, %c0_35] : memref<36x1x128xf32, #tpu.memory_space<vmem>>, vector<1x1x128xf32>
    %92 = vector.shape_cast %91 : vector<1x1x128xf32> to vector<1x128xf32>
    %93 = vector.broadcast %92 : vector<1x128xf32> to vector<16x128xf32>
    %94 = arith.mulf %46, %93 : vector<16x128xf32>
    %95 = arith.addf %90, %94 : vector<16x128xf32>
    %c8 = arith.constant 8 : index
    %c0_36 = arith.constant 0 : index
    %c0_37 = arith.constant 0 : index
    %96 = vector.load %arg2[%c8, %c0_36, %c0_37] : memref<36x1x128xf32, #tpu.memory_space<vmem>>, vector<1x1x128xf32>
    %97 = vector.shape_cast %96 : vector<1x1x128xf32> to vector<1x128xf32>
    %98 = vector.broadcast %97 : vector<1x128xf32> to vector<16x128xf32>
    %99 = arith.mulf %52, %98 : vector<16x128xf32>
    %100 = arith.addf %95, %99 : vector<16x128xf32>
    %c112_i32 = arith.constant 112 : i32
    %101 = tpu.dynamic_rotate %46 by %c112_i32 dim 1 : vector<16x128xf32>, i32 -> vector<16x128xf32>
    %c112_i32_38 = arith.constant 112 : i32
    %102 = tpu.dynamic_rotate %49 by %c112_i32_38 dim 1 : vector<16x128xf32>, i32 -> vector<16x128xf32>
    %c112_i32_39 = arith.constant 112 : i32
    %103 = tpu.dynamic_rotate %52 by %c112_i32_39 dim 1 : vector<16x128xf32>, i32 -> vector<16x128xf32>
    %c9 = arith.constant 9 : index
    %c0_40 = arith.constant 0 : index
    %c0_41 = arith.constant 0 : index
    %104 = vector.load %arg2[%c9, %c0_40, %c0_41] : memref<36x1x128xf32, #tpu.memory_space<vmem>>, vector<1x1x128xf32>
    %105 = vector.shape_cast %104 : vector<1x1x128xf32> to vector<1x128xf32>
    %106 = vector.broadcast %105 : vector<1x128xf32> to vector<16x128xf32>
    %107 = arith.mulf %102, %106 : vector<16x128xf32>
    %108 = arith.addf %70, %107 : vector<16x128xf32>
    %c10 = arith.constant 10 : index
    %c0_42 = arith.constant 0 : index
    %c0_43 = arith.constant 0 : index
    %109 = vector.load %arg2[%c10, %c0_42, %c0_43] : memref<36x1x128xf32, #tpu.memory_space<vmem>>, vector<1x1x128xf32>
    %110 = vector.shape_cast %109 : vector<1x1x128xf32> to vector<1x128xf32>
    %111 = vector.broadcast %110 : vector<1x128xf32> to vector<16x128xf32>
    %112 = arith.mulf %101, %111 : vector<16x128xf32>
    %113 = arith.addf %108, %112 : vector<16x128xf32>
    %c11 = arith.constant 11 : index
    %c0_44 = arith.constant 0 : index
    %c0_45 = arith.constant 0 : index
    %114 = vector.load %arg2[%c11, %c0_44, %c0_45] : memref<36x1x128xf32, #tpu.memory_space<vmem>>, vector<1x1x128xf32>
    %115 = vector.shape_cast %114 : vector<1x1x128xf32> to vector<1x128xf32>
    %116 = vector.broadcast %115 : vector<1x128xf32> to vector<16x128xf32>
    %117 = arith.mulf %103, %116 : vector<16x128xf32>
    %118 = arith.addf %113, %117 : vector<16x128xf32>
    %c12 = arith.constant 12 : index
    %c0_46 = arith.constant 0 : index
    %c0_47 = arith.constant 0 : index
    %119 = vector.load %arg2[%c12, %c0_46, %c0_47] : memref<36x1x128xf32, #tpu.memory_space<vmem>>, vector<1x1x128xf32>
    %120 = vector.shape_cast %119 : vector<1x1x128xf32> to vector<1x128xf32>
    %121 = vector.broadcast %120 : vector<1x128xf32> to vector<16x128xf32>
    %122 = arith.mulf %102, %121 : vector<16x128xf32>
    %123 = arith.addf %85, %122 : vector<16x128xf32>
    %c13 = arith.constant 13 : index
    %c0_48 = arith.constant 0 : index
    %c0_49 = arith.constant 0 : index
    %124 = vector.load %arg2[%c13, %c0_48, %c0_49] : memref<36x1x128xf32, #tpu.memory_space<vmem>>, vector<1x1x128xf32>
    %125 = vector.shape_cast %124 : vector<1x1x128xf32> to vector<1x128xf32>
    %126 = vector.broadcast %125 : vector<1x128xf32> to vector<16x128xf32>
    %127 = arith.mulf %101, %126 : vector<16x128xf32>
    %128 = arith.addf %123, %127 : vector<16x128xf32>
    %c14 = arith.constant 14 : index
    %c0_50 = arith.constant 0 : index
    %c0_51 = arith.constant 0 : index
    %129 = vector.load %arg2[%c14, %c0_50, %c0_51] : memref<36x1x128xf32, #tpu.memory_space<vmem>>, vector<1x1x128xf32>
    %130 = vector.shape_cast %129 : vector<1x1x128xf32> to vector<1x128xf32>
    %131 = vector.broadcast %130 : vector<1x128xf32> to vector<16x128xf32>
    %132 = arith.mulf %103, %131 : vector<16x128xf32>
    %133 = arith.addf %128, %132 : vector<16x128xf32>
    %c15 = arith.constant 15 : index
    %c0_52 = arith.constant 0 : index
    %c0_53 = arith.constant 0 : index
    %134 = vector.load %arg2[%c15, %c0_52, %c0_53] : memref<36x1x128xf32, #tpu.memory_space<vmem>>, vector<1x1x128xf32>
    %135 = vector.shape_cast %134 : vector<1x1x128xf32> to vector<1x128xf32>
    %136 = vector.broadcast %135 : vector<1x128xf32> to vector<16x128xf32>
    %137 = arith.mulf %102, %136 : vector<16x128xf32>
    %138 = arith.addf %100, %137 : vector<16x128xf32>
    %c16 = arith.constant 16 : index
    %c0_54 = arith.constant 0 : index
    %c0_55 = arith.constant 0 : index
    %139 = vector.load %arg2[%c16, %c0_54, %c0_55] : memref<36x1x128xf32, #tpu.memory_space<vmem>>, vector<1x1x128xf32>
    %140 = vector.shape_cast %139 : vector<1x1x128xf32> to vector<1x128xf32>
    %141 = vector.broadcast %140 : vector<1x128xf32> to vector<16x128xf32>
    %142 = arith.mulf %101, %141 : vector<16x128xf32>
    %143 = arith.addf %138, %142 : vector<16x128xf32>
    %c17 = arith.constant 17 : index
    %c0_56 = arith.constant 0 : index
    %c0_57 = arith.constant 0 : index
    %144 = vector.load %arg2[%c17, %c0_56, %c0_57] : memref<36x1x128xf32, #tpu.memory_space<vmem>>, vector<1x1x128xf32>
    %145 = vector.shape_cast %144 : vector<1x1x128xf32> to vector<1x128xf32>
    %146 = vector.broadcast %145 : vector<1x128xf32> to vector<16x128xf32>
    %147 = arith.mulf %103, %146 : vector<16x128xf32>
    %148 = arith.addf %143, %147 : vector<16x128xf32>
    %c96_i32 = arith.constant 96 : i32
    %149 = tpu.dynamic_rotate %46 by %c96_i32 dim 1 : vector<16x128xf32>, i32 -> vector<16x128xf32>
    %c96_i32_58 = arith.constant 96 : i32
    %150 = tpu.dynamic_rotate %49 by %c96_i32_58 dim 1 : vector<16x128xf32>, i32 -> vector<16x128xf32>
    %c96_i32_59 = arith.constant 96 : i32
    %151 = tpu.dynamic_rotate %52 by %c96_i32_59 dim 1 : vector<16x128xf32>, i32 -> vector<16x128xf32>
    %c18 = arith.constant 18 : index
    %c0_60 = arith.constant 0 : index
    %c0_61 = arith.constant 0 : index
    %152 = vector.load %arg2[%c18, %c0_60, %c0_61] : memref<36x1x128xf32, #tpu.memory_space<vmem>>, vector<1x1x128xf32>
    %153 = vector.shape_cast %152 : vector<1x1x128xf32> to vector<1x128xf32>
    %154 = vector.broadcast %153 : vector<1x128xf32> to vector<16x128xf32>
    %155 = arith.mulf %150, %154 : vector<16x128xf32>
    %156 = arith.addf %118, %155 : vector<16x128xf32>
    %c19 = arith.constant 19 : index
    %c0_62 = arith.constant 0 : index
    %c0_63 = arith.constant 0 : index
    %157 = vector.load %arg2[%c19, %c0_62, %c0_63] : memref<36x1x128xf32, #tpu.memory_space<vmem>>, vector<1x1x128xf32>
    %158 = vector.shape_cast %157 : vector<1x1x128xf32> to vector<1x128xf32>
    %159 = vector.broadcast %158 : vector<1x128xf32> to vector<16x128xf32>
    %160 = arith.mulf %149, %159 : vector<16x128xf32>
    %161 = arith.addf %156, %160 : vector<16x128xf32>
    %c20 = arith.constant 20 : index
    %c0_64 = arith.constant 0 : index
    %c0_65 = arith.constant 0 : index
    %162 = vector.load %arg2[%c20, %c0_64, %c0_65] : memref<36x1x128xf32, #tpu.memory_space<vmem>>, vector<1x1x128xf32>
    %163 = vector.shape_cast %162 : vector<1x1x128xf32> to vector<1x128xf32>
    %164 = vector.broadcast %163 : vector<1x128xf32> to vector<16x128xf32>
    %165 = arith.mulf %151, %164 : vector<16x128xf32>
    %166 = arith.addf %161, %165 : vector<16x128xf32>
    %c21 = arith.constant 21 : index
    %c0_66 = arith.constant 0 : index
    %c0_67 = arith.constant 0 : index
    %167 = vector.load %arg2[%c21, %c0_66, %c0_67] : memref<36x1x128xf32, #tpu.memory_space<vmem>>, vector<1x1x128xf32>
    %168 = vector.shape_cast %167 : vector<1x1x128xf32> to vector<1x128xf32>
    %169 = vector.broadcast %168 : vector<1x128xf32> to vector<16x128xf32>
    %170 = arith.mulf %150, %169 : vector<16x128xf32>
    %171 = arith.addf %133, %170 : vector<16x128xf32>
    %c22 = arith.constant 22 : index
    %c0_68 = arith.constant 0 : index
    %c0_69 = arith.constant 0 : index
    %172 = vector.load %arg2[%c22, %c0_68, %c0_69] : memref<36x1x128xf32, #tpu.memory_space<vmem>>, vector<1x1x128xf32>
    %173 = vector.shape_cast %172 : vector<1x1x128xf32> to vector<1x128xf32>
    %174 = vector.broadcast %173 : vector<1x128xf32> to vector<16x128xf32>
    %175 = arith.mulf %149, %174 : vector<16x128xf32>
    %176 = arith.addf %171, %175 : vector<16x128xf32>
    %c23 = arith.constant 23 : index
    %c0_70 = arith.constant 0 : index
    %c0_71 = arith.constant 0 : index
    %177 = vector.load %arg2[%c23, %c0_70, %c0_71] : memref<36x1x128xf32, #tpu.memory_space<vmem>>, vector<1x1x128xf32>
    %178 = vector.shape_cast %177 : vector<1x1x128xf32> to vector<1x128xf32>
    %179 = vector.broadcast %178 : vector<1x128xf32> to vector<16x128xf32>
    %180 = arith.mulf %151, %179 : vector<16x128xf32>
    %181 = arith.addf %176, %180 : vector<16x128xf32>
    %c24 = arith.constant 24 : index
    %c0_72 = arith.constant 0 : index
    %c0_73 = arith.constant 0 : index
    %182 = vector.load %arg2[%c24, %c0_72, %c0_73] : memref<36x1x128xf32, #tpu.memory_space<vmem>>, vector<1x1x128xf32>
    %183 = vector.shape_cast %182 : vector<1x1x128xf32> to vector<1x128xf32>
    %184 = vector.broadcast %183 : vector<1x128xf32> to vector<16x128xf32>
    %185 = arith.mulf %150, %184 : vector<16x128xf32>
    %186 = arith.addf %148, %185 : vector<16x128xf32>
    %c25 = arith.constant 25 : index
    %c0_74 = arith.constant 0 : index
    %c0_75 = arith.constant 0 : index
    %187 = vector.load %arg2[%c25, %c0_74, %c0_75] : memref<36x1x128xf32, #tpu.memory_space<vmem>>, vector<1x1x128xf32>
    %188 = vector.shape_cast %187 : vector<1x1x128xf32> to vector<1x128xf32>
    %189 = vector.broadcast %188 : vector<1x128xf32> to vector<16x128xf32>
    %190 = arith.mulf %149, %189 : vector<16x128xf32>
    %191 = arith.addf %186, %190 : vector<16x128xf32>
    %c26 = arith.constant 26 : index
    %c0_76 = arith.constant 0 : index
    %c0_77 = arith.constant 0 : index
    %192 = vector.load %arg2[%c26, %c0_76, %c0_77] : memref<36x1x128xf32, #tpu.memory_space<vmem>>, vector<1x1x128xf32>
    %193 = vector.shape_cast %192 : vector<1x1x128xf32> to vector<1x128xf32>
    %194 = vector.broadcast %193 : vector<1x128xf32> to vector<16x128xf32>
    %195 = arith.mulf %151, %194 : vector<16x128xf32>
    %196 = arith.addf %191, %195 : vector<16x128xf32>
    %c80_i32 = arith.constant 80 : i32
    %197 = tpu.dynamic_rotate %46 by %c80_i32 dim 1 : vector<16x128xf32>, i32 -> vector<16x128xf32>
    %c80_i32_78 = arith.constant 80 : i32
    %198 = tpu.dynamic_rotate %49 by %c80_i32_78 dim 1 : vector<16x128xf32>, i32 -> vector<16x128xf32>
    %c80_i32_79 = arith.constant 80 : i32
    %199 = tpu.dynamic_rotate %52 by %c80_i32_79 dim 1 : vector<16x128xf32>, i32 -> vector<16x128xf32>
    %c27 = arith.constant 27 : index
    %c0_80 = arith.constant 0 : index
    %c0_81 = arith.constant 0 : index
    %200 = vector.load %arg2[%c27, %c0_80, %c0_81] : memref<36x1x128xf32, #tpu.memory_space<vmem>>, vector<1x1x128xf32>
    %201 = vector.shape_cast %200 : vector<1x1x128xf32> to vector<1x128xf32>
    %202 = vector.broadcast %201 : vector<1x128xf32> to vector<16x128xf32>
    %203 = arith.mulf %198, %202 : vector<16x128xf32>
    %204 = arith.addf %166, %203 : vector<16x128xf32>
    %c28 = arith.constant 28 : index
    %c0_82 = arith.constant 0 : index
    %c0_83 = arith.constant 0 : index
    %205 = vector.load %arg2[%c28, %c0_82, %c0_83] : memref<36x1x128xf32, #tpu.memory_space<vmem>>, vector<1x1x128xf32>
    %206 = vector.shape_cast %205 : vector<1x1x128xf32> to vector<1x128xf32>
    %207 = vector.broadcast %206 : vector<1x128xf32> to vector<16x128xf32>
    %208 = arith.mulf %197, %207 : vector<16x128xf32>
    %209 = arith.addf %204, %208 : vector<16x128xf32>
    %c29 = arith.constant 29 : index
    %c0_84 = arith.constant 0 : index
    %c0_85 = arith.constant 0 : index
    %210 = vector.load %arg2[%c29, %c0_84, %c0_85] : memref<36x1x128xf32, #tpu.memory_space<vmem>>, vector<1x1x128xf32>
    %211 = vector.shape_cast %210 : vector<1x1x128xf32> to vector<1x128xf32>
    %212 = vector.broadcast %211 : vector<1x128xf32> to vector<16x128xf32>
    %213 = arith.mulf %199, %212 : vector<16x128xf32>
    %214 = arith.addf %209, %213 : vector<16x128xf32>
    %c30 = arith.constant 30 : index
    %c0_86 = arith.constant 0 : index
    %c0_87 = arith.constant 0 : index
    %215 = vector.load %arg2[%c30, %c0_86, %c0_87] : memref<36x1x128xf32, #tpu.memory_space<vmem>>, vector<1x1x128xf32>
    %216 = vector.shape_cast %215 : vector<1x1x128xf32> to vector<1x128xf32>
    %217 = vector.broadcast %216 : vector<1x128xf32> to vector<16x128xf32>
    %218 = arith.mulf %198, %217 : vector<16x128xf32>
    %219 = arith.addf %181, %218 : vector<16x128xf32>
    %c31 = arith.constant 31 : index
    %c0_88 = arith.constant 0 : index
    %c0_89 = arith.constant 0 : index
    %220 = vector.load %arg2[%c31, %c0_88, %c0_89] : memref<36x1x128xf32, #tpu.memory_space<vmem>>, vector<1x1x128xf32>
    %221 = vector.shape_cast %220 : vector<1x1x128xf32> to vector<1x128xf32>
    %222 = vector.broadcast %221 : vector<1x128xf32> to vector<16x128xf32>
    %223 = arith.mulf %197, %222 : vector<16x128xf32>
    %224 = arith.addf %219, %223 : vector<16x128xf32>
    %c32 = arith.constant 32 : index
    %c0_90 = arith.constant 0 : index
    %c0_91 = arith.constant 0 : index
    %225 = vector.load %arg2[%c32, %c0_90, %c0_91] : memref<36x1x128xf32, #tpu.memory_space<vmem>>, vector<1x1x128xf32>
    %226 = vector.shape_cast %225 : vector<1x1x128xf32> to vector<1x128xf32>
    %227 = vector.broadcast %226 : vector<1x128xf32> to vector<16x128xf32>
    %228 = arith.mulf %199, %227 : vector<16x128xf32>
    %229 = arith.addf %224, %228 : vector<16x128xf32>
    %c33 = arith.constant 33 : index
    %c0_92 = arith.constant 0 : index
    %c0_93 = arith.constant 0 : index
    %230 = vector.load %arg2[%c33, %c0_92, %c0_93] : memref<36x1x128xf32, #tpu.memory_space<vmem>>, vector<1x1x128xf32>
    %231 = vector.shape_cast %230 : vector<1x1x128xf32> to vector<1x128xf32>
    %232 = vector.broadcast %231 : vector<1x128xf32> to vector<16x128xf32>
    %233 = arith.mulf %198, %232 : vector<16x128xf32>
    %234 = arith.addf %196, %233 : vector<16x128xf32>
    %c34 = arith.constant 34 : index
    %c0_94 = arith.constant 0 : index
    %c0_95 = arith.constant 0 : index
    %235 = vector.load %arg2[%c34, %c0_94, %c0_95] : memref<36x1x128xf32, #tpu.memory_space<vmem>>, vector<1x1x128xf32>
    %236 = vector.shape_cast %235 : vector<1x1x128xf32> to vector<1x128xf32>
    %237 = vector.broadcast %236 : vector<1x128xf32> to vector<16x128xf32>
    %238 = arith.mulf %197, %237 : vector<16x128xf32>
    %239 = arith.addf %234, %238 : vector<16x128xf32>
    %c35 = arith.constant 35 : index
    %c0_96 = arith.constant 0 : index
    %c0_97 = arith.constant 0 : index
    %240 = vector.load %arg2[%c35, %c0_96, %c0_97] : memref<36x1x128xf32, #tpu.memory_space<vmem>>, vector<1x1x128xf32>
    %241 = vector.shape_cast %240 : vector<1x1x128xf32> to vector<1x128xf32>
    %242 = vector.broadcast %241 : vector<1x128xf32> to vector<16x128xf32>
    %243 = arith.mulf %199, %242 : vector<16x128xf32>
    %244 = arith.addf %239, %243 : vector<16x128xf32>
    %c1_i32_98 = arith.constant 1 : i32
    %245 = tpu.dynamic_rotate %214 by %c1_i32_98 dim 0 : vector<16x128xf32>, i32 -> vector<16x128xf32>
    %cst_99 = arith.constant 0.000000e+00 : f32
    %246 = vector.broadcast %cst_99 : f32 to vector<16x128xf32>
    %247 = arith.select %23, %245, %246 : vector<16x128xi1>, vector<16x128xf32>
    %c15_i32_100 = arith.constant 15 : i32
    %248 = tpu.dynamic_rotate %244 by %c15_i32_100 dim 0 : vector<16x128xf32>, i32 -> vector<16x128xf32>
    %cst_101 = arith.constant 0.000000e+00 : f32
    %249 = vector.broadcast %cst_101 : f32 to vector<16x128xf32>
    %250 = arith.select %25, %248, %249 : vector<16x128xi1>, vector<16x128xf32>
    %251 = arith.addf %247, %229 : vector<16x128xf32>
    %252 = arith.addf %251, %250 : vector<16x128xf32>
    %cst_102 = arith.constant dense<0.000000e+00> : vector<128xf32>
    %253 = vector.multi_reduction <add>, %252, %cst_102 [0] : vector<16x128xf32> to vector<128xf32>
    %254 = vector.shape_cast %253 : vector<128xf32> to vector<1x128xf32>
    %c1_i32_103 = arith.constant 1 : i32
    %255 = tpu.dynamic_rotate %254 by %c1_i32_103 dim 1 : vector<1x128xf32>, i32 -> vector<1x128xf32>
    %256 = arith.addf %254, %255 : vector<1x128xf32>
    %c2_i32 = arith.constant 2 : i32
    %257 = tpu.dynamic_rotate %256 by %c2_i32 dim 1 : vector<1x128xf32>, i32 -> vector<1x128xf32>
    %258 = arith.addf %256, %257 : vector<1x128xf32>
    %c4_i32 = arith.constant 4 : i32
    %259 = tpu.dynamic_rotate %258 by %c4_i32 dim 1 : vector<1x128xf32>, i32 -> vector<1x128xf32>
    %260 = arith.addf %258, %259 : vector<1x128xf32>
    %c8_i32 = arith.constant 8 : i32
    %261 = tpu.dynamic_rotate %260 by %c8_i32 dim 1 : vector<1x128xf32>, i32 -> vector<1x128xf32>
    %262 = arith.addf %260, %261 : vector<1x128xf32>
    %cst_104 = arith.constant 0.000000e+00 : f32
    %263 = vector.broadcast %cst_104 : f32 to vector<1x128xf32>
    %264 = arith.select %44, %262, %263 : vector<1x128xi1>, vector<1x128xf32>
    %c127_i32_105 = arith.constant 127 : i32
    %265 = tpu.dynamic_rotate %264 by %c127_i32_105 dim 1 : vector<1x128xf32>, i32 -> vector<1x128xf32>
    %266 = arith.addf %264, %265 : vector<1x128xf32>
    %c126_i32 = arith.constant 126 : i32
    %267 = tpu.dynamic_rotate %266 by %c126_i32 dim 1 : vector<1x128xf32>, i32 -> vector<1x128xf32>
    %268 = arith.addf %266, %267 : vector<1x128xf32>
    %c124_i32 = arith.constant 124 : i32
    %269 = tpu.dynamic_rotate %268 by %c124_i32 dim 1 : vector<1x128xf32>, i32 -> vector<1x128xf32>
    %270 = arith.addf %268, %269 : vector<1x128xf32>
    %c120_i32 = arith.constant 120 : i32
    %271 = tpu.dynamic_rotate %270 by %c120_i32 dim 1 : vector<1x128xf32>, i32 -> vector<1x128xf32>
    %272 = arith.addf %270, %271 : vector<1x128xf32>
    %cst_106 = arith.constant 3.906250e-03 : f32
    %273 = vector.broadcast %cst_106 : f32 to vector<1x128xf32>
    %274 = arith.mulf %272, %273 : vector<1x128xf32>
    %275 = vector.broadcast %274 : vector<1x128xf32> to vector<16x128xf32>
    %276 = arith.subf %252, %275 : vector<16x128xf32>
    %277 = arith.mulf %276, %276 : vector<16x128xf32>
    %cst_107 = arith.constant dense<0.000000e+00> : vector<128xf32>
    %278 = vector.multi_reduction <add>, %277, %cst_107 [0] : vector<16x128xf32> to vector<128xf32>
    %279 = vector.shape_cast %278 : vector<128xf32> to vector<1x128xf32>
    %c1_i32_108 = arith.constant 1 : i32
    %280 = tpu.dynamic_rotate %279 by %c1_i32_108 dim 1 : vector<1x128xf32>, i32 -> vector<1x128xf32>
    %281 = arith.addf %279, %280 : vector<1x128xf32>
    %c2_i32_109 = arith.constant 2 : i32
    %282 = tpu.dynamic_rotate %281 by %c2_i32_109 dim 1 : vector<1x128xf32>, i32 -> vector<1x128xf32>
    %283 = arith.addf %281, %282 : vector<1x128xf32>
    %c4_i32_110 = arith.constant 4 : i32
    %284 = tpu.dynamic_rotate %283 by %c4_i32_110 dim 1 : vector<1x128xf32>, i32 -> vector<1x128xf32>
    %285 = arith.addf %283, %284 : vector<1x128xf32>
    %c8_i32_111 = arith.constant 8 : i32
    %286 = tpu.dynamic_rotate %285 by %c8_i32_111 dim 1 : vector<1x128xf32>, i32 -> vector<1x128xf32>
    %287 = arith.addf %285, %286 : vector<1x128xf32>
    %cst_112 = arith.constant 0.000000e+00 : f32
    %288 = vector.broadcast %cst_112 : f32 to vector<1x128xf32>
    %289 = arith.select %44, %287, %288 : vector<1x128xi1>, vector<1x128xf32>
    %c127_i32_113 = arith.constant 127 : i32
    %290 = tpu.dynamic_rotate %289 by %c127_i32_113 dim 1 : vector<1x128xf32>, i32 -> vector<1x128xf32>
    %291 = arith.addf %289, %290 : vector<1x128xf32>
    %c126_i32_114 = arith.constant 126 : i32
    %292 = tpu.dynamic_rotate %291 by %c126_i32_114 dim 1 : vector<1x128xf32>, i32 -> vector<1x128xf32>
    %293 = arith.addf %291, %292 : vector<1x128xf32>
    %c124_i32_115 = arith.constant 124 : i32
    %294 = tpu.dynamic_rotate %293 by %c124_i32_115 dim 1 : vector<1x128xf32>, i32 -> vector<1x128xf32>
    %295 = arith.addf %293, %294 : vector<1x128xf32>
    %c120_i32_116 = arith.constant 120 : i32
    %296 = tpu.dynamic_rotate %295 by %c120_i32_116 dim 1 : vector<1x128xf32>, i32 -> vector<1x128xf32>
    %297 = arith.addf %295, %296 : vector<1x128xf32>
    %cst_117 = arith.constant 3.906250e-03 : f32
    %298 = vector.broadcast %cst_117 : f32 to vector<1x128xf32>
    %299 = arith.mulf %297, %298 : vector<1x128xf32>
    %cst_118 = arith.constant 9.99999974E-6 : f32
    %300 = vector.broadcast %cst_118 : f32 to vector<1x128xf32>
    %301 = arith.addf %299, %300 : vector<1x128xf32>
    %302 = math.rsqrt %301 : vector<1x128xf32>
    %303 = vector.broadcast %302 : vector<1x128xf32> to vector<16x128xf32>
    %304 = arith.mulf %276, %303 : vector<16x128xf32>
    %cst_119 = arith.constant 0.000000e+00 : f32
    %305 = vector.broadcast %cst_119 : f32 to vector<16x128xf32>
    %306 = arith.maximumf %304, %305 : vector<16x128xf32>
    %c1_i32_120 = arith.constant 1 : i32
    %307 = tpu.dynamic_rotate %306 by %c1_i32_120 dim 1 : vector<16x128xf32>, i32 -> vector<16x128xf32>
    %cst_121 = arith.constant 0.000000e+00 : f32
    %308 = vector.broadcast %cst_121 : f32 to vector<16x128xf32>
    %309 = arith.select %19, %307, %308 : vector<16x128xi1>, vector<16x128xf32>
    %c127_i32_122 = arith.constant 127 : i32
    %310 = tpu.dynamic_rotate %306 by %c127_i32_122 dim 1 : vector<16x128xf32>, i32 -> vector<16x128xf32>
    %cst_123 = arith.constant 0.000000e+00 : f32
    %311 = vector.broadcast %cst_123 : f32 to vector<16x128xf32>
    %312 = arith.select %21, %310, %311 : vector<16x128xi1>, vector<16x128xf32>
    %cst_124 = arith.constant 0.000000e+00 : f32
    %313 = vector.broadcast %cst_124 : f32 to vector<16x128xf32>
    %cst_125 = arith.constant 0.000000e+00 : f32
    %314 = vector.broadcast %cst_125 : f32 to vector<16x128xf32>
    %cst_126 = arith.constant 0.000000e+00 : f32
    %315 = vector.broadcast %cst_126 : f32 to vector<16x128xf32>
    %c0_127 = arith.constant 0 : index
    %c0_128 = arith.constant 0 : index
    %c0_129 = arith.constant 0 : index
    %316 = vector.load %arg3[%c0_127, %c0_128, %c0_129] : memref<72x1x128xf32, #tpu.memory_space<vmem>>, vector<1x1x128xf32>
    %317 = vector.shape_cast %316 : vector<1x1x128xf32> to vector<1x128xf32>
    %318 = vector.broadcast %317 : vector<1x128xf32> to vector<16x128xf32>
    %319 = arith.mulf %309, %318 : vector<16x128xf32>
    %320 = arith.addf %313, %319 : vector<16x128xf32>
    %c1_130 = arith.constant 1 : index
    %c0_131 = arith.constant 0 : index
    %c0_132 = arith.constant 0 : index
    %321 = vector.load %arg3[%c1_130, %c0_131, %c0_132] : memref<72x1x128xf32, #tpu.memory_space<vmem>>, vector<1x1x128xf32>
    %322 = vector.shape_cast %321 : vector<1x1x128xf32> to vector<1x128xf32>
    %323 = vector.broadcast %322 : vector<1x128xf32> to vector<16x128xf32>
    %324 = arith.mulf %306, %323 : vector<16x128xf32>
    %325 = arith.addf %320, %324 : vector<16x128xf32>
    %c2_133 = arith.constant 2 : index
    %c0_134 = arith.constant 0 : index
    %c0_135 = arith.constant 0 : index
    %326 = vector.load %arg3[%c2_133, %c0_134, %c0_135] : memref<72x1x128xf32, #tpu.memory_space<vmem>>, vector<1x1x128xf32>
    %327 = vector.shape_cast %326 : vector<1x1x128xf32> to vector<1x128xf32>
    %328 = vector.broadcast %327 : vector<1x128xf32> to vector<16x128xf32>
    %329 = arith.mulf %312, %328 : vector<16x128xf32>
    %330 = arith.addf %325, %329 : vector<16x128xf32>
    %c3_136 = arith.constant 3 : index
    %c0_137 = arith.constant 0 : index
    %c0_138 = arith.constant 0 : index
    %331 = vector.load %arg3[%c3_136, %c0_137, %c0_138] : memref<72x1x128xf32, #tpu.memory_space<vmem>>, vector<1x1x128xf32>
    %332 = vector.shape_cast %331 : vector<1x1x128xf32> to vector<1x128xf32>
    %333 = vector.broadcast %332 : vector<1x128xf32> to vector<16x128xf32>
    %334 = arith.mulf %309, %333 : vector<16x128xf32>
    %335 = arith.addf %314, %334 : vector<16x128xf32>
    %c4_139 = arith.constant 4 : index
    %c0_140 = arith.constant 0 : index
    %c0_141 = arith.constant 0 : index
    %336 = vector.load %arg3[%c4_139, %c0_140, %c0_141] : memref<72x1x128xf32, #tpu.memory_space<vmem>>, vector<1x1x128xf32>
    %337 = vector.shape_cast %336 : vector<1x1x128xf32> to vector<1x128xf32>
    %338 = vector.broadcast %337 : vector<1x128xf32> to vector<16x128xf32>
    %339 = arith.mulf %306, %338 : vector<16x128xf32>
    %340 = arith.addf %335, %339 : vector<16x128xf32>
    %c5_142 = arith.constant 5 : index
    %c0_143 = arith.constant 0 : index
    %c0_144 = arith.constant 0 : index
    %341 = vector.load %arg3[%c5_142, %c0_143, %c0_144] : memref<72x1x128xf32, #tpu.memory_space<vmem>>, vector<1x1x128xf32>
    %342 = vector.shape_cast %341 : vector<1x1x128xf32> to vector<1x128xf32>
    %343 = vector.broadcast %342 : vector<1x128xf32> to vector<16x128xf32>
    %344 = arith.mulf %312, %343 : vector<16x128xf32>
    %345 = arith.addf %340, %344 : vector<16x128xf32>
    %c6_145 = arith.constant 6 : index
    %c0_146 = arith.constant 0 : index
    %c0_147 = arith.constant 0 : index
    %346 = vector.load %arg3[%c6_145, %c0_146, %c0_147] : memref<72x1x128xf32, #tpu.memory_space<vmem>>, vector<1x1x128xf32>
    %347 = vector.shape_cast %346 : vector<1x1x128xf32> to vector<1x128xf32>
    %348 = vector.broadcast %347 : vector<1x128xf32> to vector<16x128xf32>
    %349 = arith.mulf %309, %348 : vector<16x128xf32>
    %350 = arith.addf %315, %349 : vector<16x128xf32>
    %c7_148 = arith.constant 7 : index
    %c0_149 = arith.constant 0 : index
    %c0_150 = arith.constant 0 : index
    %351 = vector.load %arg3[%c7_148, %c0_149, %c0_150] : memref<72x1x128xf32, #tpu.memory_space<vmem>>, vector<1x1x128xf32>
    %352 = vector.shape_cast %351 : vector<1x1x128xf32> to vector<1x128xf32>
    %353 = vector.broadcast %352 : vector<1x128xf32> to vector<16x128xf32>
    %354 = arith.mulf %306, %353 : vector<16x128xf32>
    %355 = arith.addf %350, %354 : vector<16x128xf32>
    %c8_151 = arith.constant 8 : index
    %c0_152 = arith.constant 0 : index
    %c0_153 = arith.constant 0 : index
    %356 = vector.load %arg3[%c8_151, %c0_152, %c0_153] : memref<72x1x128xf32, #tpu.memory_space<vmem>>, vector<1x1x128xf32>
    %357 = vector.shape_cast %356 : vector<1x1x128xf32> to vector<1x128xf32>
    %358 = vector.broadcast %357 : vector<1x128xf32> to vector<16x128xf32>
    %359 = arith.mulf %312, %358 : vector<16x128xf32>
    %360 = arith.addf %355, %359 : vector<16x128xf32>
    %c112_i32_154 = arith.constant 112 : i32
    %361 = tpu.dynamic_rotate %306 by %c112_i32_154 dim 1 : vector<16x128xf32>, i32 -> vector<16x128xf32>
    %c112_i32_155 = arith.constant 112 : i32
    %362 = tpu.dynamic_rotate %309 by %c112_i32_155 dim 1 : vector<16x128xf32>, i32 -> vector<16x128xf32>
    %c112_i32_156 = arith.constant 112 : i32
    %363 = tpu.dynamic_rotate %312 by %c112_i32_156 dim 1 : vector<16x128xf32>, i32 -> vector<16x128xf32>
    %c9_157 = arith.constant 9 : index
    %c0_158 = arith.constant 0 : index
    %c0_159 = arith.constant 0 : index
    %364 = vector.load %arg3[%c9_157, %c0_158, %c0_159] : memref<72x1x128xf32, #tpu.memory_space<vmem>>, vector<1x1x128xf32>
    %365 = vector.shape_cast %364 : vector<1x1x128xf32> to vector<1x128xf32>
    %366 = vector.broadcast %365 : vector<1x128xf32> to vector<16x128xf32>
    %367 = arith.mulf %362, %366 : vector<16x128xf32>
    %368 = arith.addf %330, %367 : vector<16x128xf32>
    %c10_160 = arith.constant 10 : index
    %c0_161 = arith.constant 0 : index
    %c0_162 = arith.constant 0 : index
    %369 = vector.load %arg3[%c10_160, %c0_161, %c0_162] : memref<72x1x128xf32, #tpu.memory_space<vmem>>, vector<1x1x128xf32>
    %370 = vector.shape_cast %369 : vector<1x1x128xf32> to vector<1x128xf32>
    %371 = vector.broadcast %370 : vector<1x128xf32> to vector<16x128xf32>
    %372 = arith.mulf %361, %371 : vector<16x128xf32>
    %373 = arith.addf %368, %372 : vector<16x128xf32>
    %c11_163 = arith.constant 11 : index
    %c0_164 = arith.constant 0 : index
    %c0_165 = arith.constant 0 : index
    %374 = vector.load %arg3[%c11_163, %c0_164, %c0_165] : memref<72x1x128xf32, #tpu.memory_space<vmem>>, vector<1x1x128xf32>
    %375 = vector.shape_cast %374 : vector<1x1x128xf32> to vector<1x128xf32>
    %376 = vector.broadcast %375 : vector<1x128xf32> to vector<16x128xf32>
    %377 = arith.mulf %363, %376 : vector<16x128xf32>
    %378 = arith.addf %373, %377 : vector<16x128xf32>
    %c12_166 = arith.constant 12 : index
    %c0_167 = arith.constant 0 : index
    %c0_168 = arith.constant 0 : index
    %379 = vector.load %arg3[%c12_166, %c0_167, %c0_168] : memref<72x1x128xf32, #tpu.memory_space<vmem>>, vector<1x1x128xf32>
    %380 = vector.shape_cast %379 : vector<1x1x128xf32> to vector<1x128xf32>
    %381 = vector.broadcast %380 : vector<1x128xf32> to vector<16x128xf32>
    %382 = arith.mulf %362, %381 : vector<16x128xf32>
    %383 = arith.addf %345, %382 : vector<16x128xf32>
    %c13_169 = arith.constant 13 : index
    %c0_170 = arith.constant 0 : index
    %c0_171 = arith.constant 0 : index
    %384 = vector.load %arg3[%c13_169, %c0_170, %c0_171] : memref<72x1x128xf32, #tpu.memory_space<vmem>>, vector<1x1x128xf32>
    %385 = vector.shape_cast %384 : vector<1x1x128xf32> to vector<1x128xf32>
    %386 = vector.broadcast %385 : vector<1x128xf32> to vector<16x128xf32>
    %387 = arith.mulf %361, %386 : vector<16x128xf32>
    %388 = arith.addf %383, %387 : vector<16x128xf32>
    %c14_172 = arith.constant 14 : index
    %c0_173 = arith.constant 0 : index
    %c0_174 = arith.constant 0 : index
    %389 = vector.load %arg3[%c14_172, %c0_173, %c0_174] : memref<72x1x128xf32, #tpu.memory_space<vmem>>, vector<1x1x128xf32>
    %390 = vector.shape_cast %389 : vector<1x1x128xf32> to vector<1x128xf32>
    %391 = vector.broadcast %390 : vector<1x128xf32> to vector<16x128xf32>
    %392 = arith.mulf %363, %391 : vector<16x128xf32>
    %393 = arith.addf %388, %392 : vector<16x128xf32>
    %c15_175 = arith.constant 15 : index
    %c0_176 = arith.constant 0 : index
    %c0_177 = arith.constant 0 : index
    %394 = vector.load %arg3[%c15_175, %c0_176, %c0_177] : memref<72x1x128xf32, #tpu.memory_space<vmem>>, vector<1x1x128xf32>
    %395 = vector.shape_cast %394 : vector<1x1x128xf32> to vector<1x128xf32>
    %396 = vector.broadcast %395 : vector<1x128xf32> to vector<16x128xf32>
    %397 = arith.mulf %362, %396 : vector<16x128xf32>
    %398 = arith.addf %360, %397 : vector<16x128xf32>
    %c16_178 = arith.constant 16 : index
    %c0_179 = arith.constant 0 : index
    %c0_180 = arith.constant 0 : index
    %399 = vector.load %arg3[%c16_178, %c0_179, %c0_180] : memref<72x1x128xf32, #tpu.memory_space<vmem>>, vector<1x1x128xf32>
    %400 = vector.shape_cast %399 : vector<1x1x128xf32> to vector<1x128xf32>
    %401 = vector.broadcast %400 : vector<1x128xf32> to vector<16x128xf32>
    %402 = arith.mulf %361, %401 : vector<16x128xf32>
    %403 = arith.addf %398, %402 : vector<16x128xf32>
    %c17_181 = arith.constant 17 : index
    %c0_182 = arith.constant 0 : index
    %c0_183 = arith.constant 0 : index
    %404 = vector.load %arg3[%c17_181, %c0_182, %c0_183] : memref<72x1x128xf32, #tpu.memory_space<vmem>>, vector<1x1x128xf32>
    %405 = vector.shape_cast %404 : vector<1x1x128xf32> to vector<1x128xf32>
    %406 = vector.broadcast %405 : vector<1x128xf32> to vector<16x128xf32>
    %407 = arith.mulf %363, %406 : vector<16x128xf32>
    %408 = arith.addf %403, %407 : vector<16x128xf32>
    %c96_i32_184 = arith.constant 96 : i32
    %409 = tpu.dynamic_rotate %306 by %c96_i32_184 dim 1 : vector<16x128xf32>, i32 -> vector<16x128xf32>
    %c96_i32_185 = arith.constant 96 : i32
    %410 = tpu.dynamic_rotate %309 by %c96_i32_185 dim 1 : vector<16x128xf32>, i32 -> vector<16x128xf32>
    %c96_i32_186 = arith.constant 96 : i32
    %411 = tpu.dynamic_rotate %312 by %c96_i32_186 dim 1 : vector<16x128xf32>, i32 -> vector<16x128xf32>
    %c18_187 = arith.constant 18 : index
    %c0_188 = arith.constant 0 : index
    %c0_189 = arith.constant 0 : index
    %412 = vector.load %arg3[%c18_187, %c0_188, %c0_189] : memref<72x1x128xf32, #tpu.memory_space<vmem>>, vector<1x1x128xf32>
    %413 = vector.shape_cast %412 : vector<1x1x128xf32> to vector<1x128xf32>
    %414 = vector.broadcast %413 : vector<1x128xf32> to vector<16x128xf32>
    %415 = arith.mulf %410, %414 : vector<16x128xf32>
    %416 = arith.addf %378, %415 : vector<16x128xf32>
    %c19_190 = arith.constant 19 : index
    %c0_191 = arith.constant 0 : index
    %c0_192 = arith.constant 0 : index
    %417 = vector.load %arg3[%c19_190, %c0_191, %c0_192] : memref<72x1x128xf32, #tpu.memory_space<vmem>>, vector<1x1x128xf32>
    %418 = vector.shape_cast %417 : vector<1x1x128xf32> to vector<1x128xf32>
    %419 = vector.broadcast %418 : vector<1x128xf32> to vector<16x128xf32>
    %420 = arith.mulf %409, %419 : vector<16x128xf32>
    %421 = arith.addf %416, %420 : vector<16x128xf32>
    %c20_193 = arith.constant 20 : index
    %c0_194 = arith.constant 0 : index
    %c0_195 = arith.constant 0 : index
    %422 = vector.load %arg3[%c20_193, %c0_194, %c0_195] : memref<72x1x128xf32, #tpu.memory_space<vmem>>, vector<1x1x128xf32>
    %423 = vector.shape_cast %422 : vector<1x1x128xf32> to vector<1x128xf32>
    %424 = vector.broadcast %423 : vector<1x128xf32> to vector<16x128xf32>
    %425 = arith.mulf %411, %424 : vector<16x128xf32>
    %426 = arith.addf %421, %425 : vector<16x128xf32>
    %c21_196 = arith.constant 21 : index
    %c0_197 = arith.constant 0 : index
    %c0_198 = arith.constant 0 : index
    %427 = vector.load %arg3[%c21_196, %c0_197, %c0_198] : memref<72x1x128xf32, #tpu.memory_space<vmem>>, vector<1x1x128xf32>
    %428 = vector.shape_cast %427 : vector<1x1x128xf32> to vector<1x128xf32>
    %429 = vector.broadcast %428 : vector<1x128xf32> to vector<16x128xf32>
    %430 = arith.mulf %410, %429 : vector<16x128xf32>
    %431 = arith.addf %393, %430 : vector<16x128xf32>
    %c22_199 = arith.constant 22 : index
    %c0_200 = arith.constant 0 : index
    %c0_201 = arith.constant 0 : index
    %432 = vector.load %arg3[%c22_199, %c0_200, %c0_201] : memref<72x1x128xf32, #tpu.memory_space<vmem>>, vector<1x1x128xf32>
    %433 = vector.shape_cast %432 : vector<1x1x128xf32> to vector<1x128xf32>
    %434 = vector.broadcast %433 : vector<1x128xf32> to vector<16x128xf32>
    %435 = arith.mulf %409, %434 : vector<16x128xf32>
    %436 = arith.addf %431, %435 : vector<16x128xf32>
    %c23_202 = arith.constant 23 : index
    %c0_203 = arith.constant 0 : index
    %c0_204 = arith.constant 0 : index
    %437 = vector.load %arg3[%c23_202, %c0_203, %c0_204] : memref<72x1x128xf32, #tpu.memory_space<vmem>>, vector<1x1x128xf32>
    %438 = vector.shape_cast %437 : vector<1x1x128xf32> to vector<1x128xf32>
    %439 = vector.broadcast %438 : vector<1x128xf32> to vector<16x128xf32>
    %440 = arith.mulf %411, %439 : vector<16x128xf32>
    %441 = arith.addf %436, %440 : vector<16x128xf32>
    %c24_205 = arith.constant 24 : index
    %c0_206 = arith.constant 0 : index
    %c0_207 = arith.constant 0 : index
    %442 = vector.load %arg3[%c24_205, %c0_206, %c0_207] : memref<72x1x128xf32, #tpu.memory_space<vmem>>, vector<1x1x128xf32>
    %443 = vector.shape_cast %442 : vector<1x1x128xf32> to vector<1x128xf32>
    %444 = vector.broadcast %443 : vector<1x128xf32> to vector<16x128xf32>
    %445 = arith.mulf %410, %444 : vector<16x128xf32>
    %446 = arith.addf %408, %445 : vector<16x128xf32>
    %c25_208 = arith.constant 25 : index
    %c0_209 = arith.constant 0 : index
    %c0_210 = arith.constant 0 : index
    %447 = vector.load %arg3[%c25_208, %c0_209, %c0_210] : memref<72x1x128xf32, #tpu.memory_space<vmem>>, vector<1x1x128xf32>
    %448 = vector.shape_cast %447 : vector<1x1x128xf32> to vector<1x128xf32>
    %449 = vector.broadcast %448 : vector<1x128xf32> to vector<16x128xf32>
    %450 = arith.mulf %409, %449 : vector<16x128xf32>
    %451 = arith.addf %446, %450 : vector<16x128xf32>
    %c26_211 = arith.constant 26 : index
    %c0_212 = arith.constant 0 : index
    %c0_213 = arith.constant 0 : index
    %452 = vector.load %arg3[%c26_211, %c0_212, %c0_213] : memref<72x1x128xf32, #tpu.memory_space<vmem>>, vector<1x1x128xf32>
    %453 = vector.shape_cast %452 : vector<1x1x128xf32> to vector<1x128xf32>
    %454 = vector.broadcast %453 : vector<1x128xf32> to vector<16x128xf32>
    %455 = arith.mulf %411, %454 : vector<16x128xf32>
    %456 = arith.addf %451, %455 : vector<16x128xf32>
    %c80_i32_214 = arith.constant 80 : i32
    %457 = tpu.dynamic_rotate %306 by %c80_i32_214 dim 1 : vector<16x128xf32>, i32 -> vector<16x128xf32>
    %c80_i32_215 = arith.constant 80 : i32
    %458 = tpu.dynamic_rotate %309 by %c80_i32_215 dim 1 : vector<16x128xf32>, i32 -> vector<16x128xf32>
    %c80_i32_216 = arith.constant 80 : i32
    %459 = tpu.dynamic_rotate %312 by %c80_i32_216 dim 1 : vector<16x128xf32>, i32 -> vector<16x128xf32>
    %c27_217 = arith.constant 27 : index
    %c0_218 = arith.constant 0 : index
    %c0_219 = arith.constant 0 : index
    %460 = vector.load %arg3[%c27_217, %c0_218, %c0_219] : memref<72x1x128xf32, #tpu.memory_space<vmem>>, vector<1x1x128xf32>
    %461 = vector.shape_cast %460 : vector<1x1x128xf32> to vector<1x128xf32>
    %462 = vector.broadcast %461 : vector<1x128xf32> to vector<16x128xf32>
    %463 = arith.mulf %458, %462 : vector<16x128xf32>
    %464 = arith.addf %426, %463 : vector<16x128xf32>
    %c28_220 = arith.constant 28 : index
    %c0_221 = arith.constant 0 : index
    %c0_222 = arith.constant 0 : index
    %465 = vector.load %arg3[%c28_220, %c0_221, %c0_222] : memref<72x1x128xf32, #tpu.memory_space<vmem>>, vector<1x1x128xf32>
    %466 = vector.shape_cast %465 : vector<1x1x128xf32> to vector<1x128xf32>
    %467 = vector.broadcast %466 : vector<1x128xf32> to vector<16x128xf32>
    %468 = arith.mulf %457, %467 : vector<16x128xf32>
    %469 = arith.addf %464, %468 : vector<16x128xf32>
    %c29_223 = arith.constant 29 : index
    %c0_224 = arith.constant 0 : index
    %c0_225 = arith.constant 0 : index
    %470 = vector.load %arg3[%c29_223, %c0_224, %c0_225] : memref<72x1x128xf32, #tpu.memory_space<vmem>>, vector<1x1x128xf32>
    %471 = vector.shape_cast %470 : vector<1x1x128xf32> to vector<1x128xf32>
    %472 = vector.broadcast %471 : vector<1x128xf32> to vector<16x128xf32>
    %473 = arith.mulf %459, %472 : vector<16x128xf32>
    %474 = arith.addf %469, %473 : vector<16x128xf32>
    %c30_226 = arith.constant 30 : index
    %c0_227 = arith.constant 0 : index
    %c0_228 = arith.constant 0 : index
    %475 = vector.load %arg3[%c30_226, %c0_227, %c0_228] : memref<72x1x128xf32, #tpu.memory_space<vmem>>, vector<1x1x128xf32>
    %476 = vector.shape_cast %475 : vector<1x1x128xf32> to vector<1x128xf32>
    %477 = vector.broadcast %476 : vector<1x128xf32> to vector<16x128xf32>
    %478 = arith.mulf %458, %477 : vector<16x128xf32>
    %479 = arith.addf %441, %478 : vector<16x128xf32>
    %c31_229 = arith.constant 31 : index
    %c0_230 = arith.constant 0 : index
    %c0_231 = arith.constant 0 : index
    %480 = vector.load %arg3[%c31_229, %c0_230, %c0_231] : memref<72x1x128xf32, #tpu.memory_space<vmem>>, vector<1x1x128xf32>
    %481 = vector.shape_cast %480 : vector<1x1x128xf32> to vector<1x128xf32>
    %482 = vector.broadcast %481 : vector<1x128xf32> to vector<16x128xf32>
    %483 = arith.mulf %457, %482 : vector<16x128xf32>
    %484 = arith.addf %479, %483 : vector<16x128xf32>
    %c32_232 = arith.constant 32 : index
    %c0_233 = arith.constant 0 : index
    %c0_234 = arith.constant 0 : index
    %485 = vector.load %arg3[%c32_232, %c0_233, %c0_234] : memref<72x1x128xf32, #tpu.memory_space<vmem>>, vector<1x1x128xf32>
    %486 = vector.shape_cast %485 : vector<1x1x128xf32> to vector<1x128xf32>
    %487 = vector.broadcast %486 : vector<1x128xf32> to vector<16x128xf32>
    %488 = arith.mulf %459, %487 : vector<16x128xf32>
    %489 = arith.addf %484, %488 : vector<16x128xf32>
    %c33_235 = arith.constant 33 : index
    %c0_236 = arith.constant 0 : index
    %c0_237 = arith.constant 0 : index
    %490 = vector.load %arg3[%c33_235, %c0_236, %c0_237] : memref<72x1x128xf32, #tpu.memory_space<vmem>>, vector<1x1x128xf32>
    %491 = vector.shape_cast %490 : vector<1x1x128xf32> to vector<1x128xf32>
    %492 = vector.broadcast %491 : vector<1x128xf32> to vector<16x128xf32>
    %493 = arith.mulf %458, %492 : vector<16x128xf32>
    %494 = arith.addf %456, %493 : vector<16x128xf32>
    %c34_238 = arith.constant 34 : index
    %c0_239 = arith.constant 0 : index
    %c0_240 = arith.constant 0 : index
    %495 = vector.load %arg3[%c34_238, %c0_239, %c0_240] : memref<72x1x128xf32, #tpu.memory_space<vmem>>, vector<1x1x128xf32>
    %496 = vector.shape_cast %495 : vector<1x1x128xf32> to vector<1x128xf32>
    %497 = vector.broadcast %496 : vector<1x128xf32> to vector<16x128xf32>
    %498 = arith.mulf %457, %497 : vector<16x128xf32>
    %499 = arith.addf %494, %498 : vector<16x128xf32>
    %c35_241 = arith.constant 35 : index
    %c0_242 = arith.constant 0 : index
    %c0_243 = arith.constant 0 : index
    %500 = vector.load %arg3[%c35_241, %c0_242, %c0_243] : memref<72x1x128xf32, #tpu.memory_space<vmem>>, vector<1x1x128xf32>
    %501 = vector.shape_cast %500 : vector<1x1x128xf32> to vector<1x128xf32>
    %502 = vector.broadcast %501 : vector<1x128xf32> to vector<16x128xf32>
    %503 = arith.mulf %459, %502 : vector<16x128xf32>
    %504 = arith.addf %499, %503 : vector<16x128xf32>
    %c64_i32 = arith.constant 64 : i32
    %505 = tpu.dynamic_rotate %306 by %c64_i32 dim 1 : vector<16x128xf32>, i32 -> vector<16x128xf32>
    %c64_i32_244 = arith.constant 64 : i32
    %506 = tpu.dynamic_rotate %309 by %c64_i32_244 dim 1 : vector<16x128xf32>, i32 -> vector<16x128xf32>
    %c64_i32_245 = arith.constant 64 : i32
    %507 = tpu.dynamic_rotate %312 by %c64_i32_245 dim 1 : vector<16x128xf32>, i32 -> vector<16x128xf32>
    %c36 = arith.constant 36 : index
    %c0_246 = arith.constant 0 : index
    %c0_247 = arith.constant 0 : index
    %508 = vector.load %arg3[%c36, %c0_246, %c0_247] : memref<72x1x128xf32, #tpu.memory_space<vmem>>, vector<1x1x128xf32>
    %509 = vector.shape_cast %508 : vector<1x1x128xf32> to vector<1x128xf32>
    %510 = vector.broadcast %509 : vector<1x128xf32> to vector<16x128xf32>
    %511 = arith.mulf %506, %510 : vector<16x128xf32>
    %512 = arith.addf %474, %511 : vector<16x128xf32>
    %c37 = arith.constant 37 : index
    %c0_248 = arith.constant 0 : index
    %c0_249 = arith.constant 0 : index
    %513 = vector.load %arg3[%c37, %c0_248, %c0_249] : memref<72x1x128xf32, #tpu.memory_space<vmem>>, vector<1x1x128xf32>
    %514 = vector.shape_cast %513 : vector<1x1x128xf32> to vector<1x128xf32>
    %515 = vector.broadcast %514 : vector<1x128xf32> to vector<16x128xf32>
    %516 = arith.mulf %505, %515 : vector<16x128xf32>
    %517 = arith.addf %512, %516 : vector<16x128xf32>
    %c38 = arith.constant 38 : index
    %c0_250 = arith.constant 0 : index
    %c0_251 = arith.constant 0 : index
    %518 = vector.load %arg3[%c38, %c0_250, %c0_251] : memref<72x1x128xf32, #tpu.memory_space<vmem>>, vector<1x1x128xf32>
    %519 = vector.shape_cast %518 : vector<1x1x128xf32> to vector<1x128xf32>
    %520 = vector.broadcast %519 : vector<1x128xf32> to vector<16x128xf32>
    %521 = arith.mulf %507, %520 : vector<16x128xf32>
    %522 = arith.addf %517, %521 : vector<16x128xf32>
    %c39 = arith.constant 39 : index
    %c0_252 = arith.constant 0 : index
    %c0_253 = arith.constant 0 : index
    %523 = vector.load %arg3[%c39, %c0_252, %c0_253] : memref<72x1x128xf32, #tpu.memory_space<vmem>>, vector<1x1x128xf32>
    %524 = vector.shape_cast %523 : vector<1x1x128xf32> to vector<1x128xf32>
    %525 = vector.broadcast %524 : vector<1x128xf32> to vector<16x128xf32>
    %526 = arith.mulf %506, %525 : vector<16x128xf32>
    %527 = arith.addf %489, %526 : vector<16x128xf32>
    %c40 = arith.constant 40 : index
    %c0_254 = arith.constant 0 : index
    %c0_255 = arith.constant 0 : index
    %528 = vector.load %arg3[%c40, %c0_254, %c0_255] : memref<72x1x128xf32, #tpu.memory_space<vmem>>, vector<1x1x128xf32>
    %529 = vector.shape_cast %528 : vector<1x1x128xf32> to vector<1x128xf32>
    %530 = vector.broadcast %529 : vector<1x128xf32> to vector<16x128xf32>
    %531 = arith.mulf %505, %530 : vector<16x128xf32>
    %532 = arith.addf %527, %531 : vector<16x128xf32>
    %c41 = arith.constant 41 : index
    %c0_256 = arith.constant 0 : index
    %c0_257 = arith.constant 0 : index
    %533 = vector.load %arg3[%c41, %c0_256, %c0_257] : memref<72x1x128xf32, #tpu.memory_space<vmem>>, vector<1x1x128xf32>
    %534 = vector.shape_cast %533 : vector<1x1x128xf32> to vector<1x128xf32>
    %535 = vector.broadcast %534 : vector<1x128xf32> to vector<16x128xf32>
    %536 = arith.mulf %507, %535 : vector<16x128xf32>
    %537 = arith.addf %532, %536 : vector<16x128xf32>
    %c42 = arith.constant 42 : index
    %c0_258 = arith.constant 0 : index
    %c0_259 = arith.constant 0 : index
    %538 = vector.load %arg3[%c42, %c0_258, %c0_259] : memref<72x1x128xf32, #tpu.memory_space<vmem>>, vector<1x1x128xf32>
    %539 = vector.shape_cast %538 : vector<1x1x128xf32> to vector<1x128xf32>
    %540 = vector.broadcast %539 : vector<1x128xf32> to vector<16x128xf32>
    %541 = arith.mulf %506, %540 : vector<16x128xf32>
    %542 = arith.addf %504, %541 : vector<16x128xf32>
    %c43 = arith.constant 43 : index
    %c0_260 = arith.constant 0 : index
    %c0_261 = arith.constant 0 : index
    %543 = vector.load %arg3[%c43, %c0_260, %c0_261] : memref<72x1x128xf32, #tpu.memory_space<vmem>>, vector<1x1x128xf32>
    %544 = vector.shape_cast %543 : vector<1x1x128xf32> to vector<1x128xf32>
    %545 = vector.broadcast %544 : vector<1x128xf32> to vector<16x128xf32>
    %546 = arith.mulf %505, %545 : vector<16x128xf32>
    %547 = arith.addf %542, %546 : vector<16x128xf32>
    %c44 = arith.constant 44 : index
    %c0_262 = arith.constant 0 : index
    %c0_263 = arith.constant 0 : index
    %548 = vector.load %arg3[%c44, %c0_262, %c0_263] : memref<72x1x128xf32, #tpu.memory_space<vmem>>, vector<1x1x128xf32>
    %549 = vector.shape_cast %548 : vector<1x1x128xf32> to vector<1x128xf32>
    %550 = vector.broadcast %549 : vector<1x128xf32> to vector<16x128xf32>
    %551 = arith.mulf %507, %550 : vector<16x128xf32>
    %552 = arith.addf %547, %551 : vector<16x128xf32>
    %c48_i32 = arith.constant 48 : i32
    %553 = tpu.dynamic_rotate %306 by %c48_i32 dim 1 : vector<16x128xf32>, i32 -> vector<16x128xf32>
    %c48_i32_264 = arith.constant 48 : i32
    %554 = tpu.dynamic_rotate %309 by %c48_i32_264 dim 1 : vector<16x128xf32>, i32 -> vector<16x128xf32>
    %c48_i32_265 = arith.constant 48 : i32
    %555 = tpu.dynamic_rotate %312 by %c48_i32_265 dim 1 : vector<16x128xf32>, i32 -> vector<16x128xf32>
    %c45 = arith.constant 45 : index
    %c0_266 = arith.constant 0 : index
    %c0_267 = arith.constant 0 : index
    %556 = vector.load %arg3[%c45, %c0_266, %c0_267] : memref<72x1x128xf32, #tpu.memory_space<vmem>>, vector<1x1x128xf32>
    %557 = vector.shape_cast %556 : vector<1x1x128xf32> to vector<1x128xf32>
    %558 = vector.broadcast %557 : vector<1x128xf32> to vector<16x128xf32>
    %559 = arith.mulf %554, %558 : vector<16x128xf32>
    %560 = arith.addf %522, %559 : vector<16x128xf32>
    %c46 = arith.constant 46 : index
    %c0_268 = arith.constant 0 : index
    %c0_269 = arith.constant 0 : index
    %561 = vector.load %arg3[%c46, %c0_268, %c0_269] : memref<72x1x128xf32, #tpu.memory_space<vmem>>, vector<1x1x128xf32>
    %562 = vector.shape_cast %561 : vector<1x1x128xf32> to vector<1x128xf32>
    %563 = vector.broadcast %562 : vector<1x128xf32> to vector<16x128xf32>
    %564 = arith.mulf %553, %563 : vector<16x128xf32>
    %565 = arith.addf %560, %564 : vector<16x128xf32>
    %c47 = arith.constant 47 : index
    %c0_270 = arith.constant 0 : index
    %c0_271 = arith.constant 0 : index
    %566 = vector.load %arg3[%c47, %c0_270, %c0_271] : memref<72x1x128xf32, #tpu.memory_space<vmem>>, vector<1x1x128xf32>
    %567 = vector.shape_cast %566 : vector<1x1x128xf32> to vector<1x128xf32>
    %568 = vector.broadcast %567 : vector<1x128xf32> to vector<16x128xf32>
    %569 = arith.mulf %555, %568 : vector<16x128xf32>
    %570 = arith.addf %565, %569 : vector<16x128xf32>
    %c48 = arith.constant 48 : index
    %c0_272 = arith.constant 0 : index
    %c0_273 = arith.constant 0 : index
    %571 = vector.load %arg3[%c48, %c0_272, %c0_273] : memref<72x1x128xf32, #tpu.memory_space<vmem>>, vector<1x1x128xf32>
    %572 = vector.shape_cast %571 : vector<1x1x128xf32> to vector<1x128xf32>
    %573 = vector.broadcast %572 : vector<1x128xf32> to vector<16x128xf32>
    %574 = arith.mulf %554, %573 : vector<16x128xf32>
    %575 = arith.addf %537, %574 : vector<16x128xf32>
    %c49 = arith.constant 49 : index
    %c0_274 = arith.constant 0 : index
    %c0_275 = arith.constant 0 : index
    %576 = vector.load %arg3[%c49, %c0_274, %c0_275] : memref<72x1x128xf32, #tpu.memory_space<vmem>>, vector<1x1x128xf32>
    %577 = vector.shape_cast %576 : vector<1x1x128xf32> to vector<1x128xf32>
    %578 = vector.broadcast %577 : vector<1x128xf32> to vector<16x128xf32>
    %579 = arith.mulf %553, %578 : vector<16x128xf32>
    %580 = arith.addf %575, %579 : vector<16x128xf32>
    %c50 = arith.constant 50 : index
    %c0_276 = arith.constant 0 : index
    %c0_277 = arith.constant 0 : index
    %581 = vector.load %arg3[%c50, %c0_276, %c0_277] : memref<72x1x128xf32, #tpu.memory_space<vmem>>, vector<1x1x128xf32>
    %582 = vector.shape_cast %581 : vector<1x1x128xf32> to vector<1x128xf32>
    %583 = vector.broadcast %582 : vector<1x128xf32> to vector<16x128xf32>
    %584 = arith.mulf %555, %583 : vector<16x128xf32>
    %585 = arith.addf %580, %584 : vector<16x128xf32>
    %c51 = arith.constant 51 : index
    %c0_278 = arith.constant 0 : index
    %c0_279 = arith.constant 0 : index
    %586 = vector.load %arg3[%c51, %c0_278, %c0_279] : memref<72x1x128xf32, #tpu.memory_space<vmem>>, vector<1x1x128xf32>
    %587 = vector.shape_cast %586 : vector<1x1x128xf32> to vector<1x128xf32>
    %588 = vector.broadcast %587 : vector<1x128xf32> to vector<16x128xf32>
    %589 = arith.mulf %554, %588 : vector<16x128xf32>
    %590 = arith.addf %552, %589 : vector<16x128xf32>
    %c52 = arith.constant 52 : index
    %c0_280 = arith.constant 0 : index
    %c0_281 = arith.constant 0 : index
    %591 = vector.load %arg3[%c52, %c0_280, %c0_281] : memref<72x1x128xf32, #tpu.memory_space<vmem>>, vector<1x1x128xf32>
    %592 = vector.shape_cast %591 : vector<1x1x128xf32> to vector<1x128xf32>
    %593 = vector.broadcast %592 : vector<1x128xf32> to vector<16x128xf32>
    %594 = arith.mulf %553, %593 : vector<16x128xf32>
    %595 = arith.addf %590, %594 : vector<16x128xf32>
    %c53 = arith.constant 53 : index
    %c0_282 = arith.constant 0 : index
    %c0_283 = arith.constant 0 : index
    %596 = vector.load %arg3[%c53, %c0_282, %c0_283] : memref<72x1x128xf32, #tpu.memory_space<vmem>>, vector<1x1x128xf32>
    %597 = vector.shape_cast %596 : vector<1x1x128xf32> to vector<1x128xf32>
    %598 = vector.broadcast %597 : vector<1x128xf32> to vector<16x128xf32>
    %599 = arith.mulf %555, %598 : vector<16x128xf32>
    %600 = arith.addf %595, %599 : vector<16x128xf32>
    %c32_i32 = arith.constant 32 : i32
    %601 = tpu.dynamic_rotate %306 by %c32_i32 dim 1 : vector<16x128xf32>, i32 -> vector<16x128xf32>
    %c32_i32_284 = arith.constant 32 : i32
    %602 = tpu.dynamic_rotate %309 by %c32_i32_284 dim 1 : vector<16x128xf32>, i32 -> vector<16x128xf32>
    %c32_i32_285 = arith.constant 32 : i32
    %603 = tpu.dynamic_rotate %312 by %c32_i32_285 dim 1 : vector<16x128xf32>, i32 -> vector<16x128xf32>
    %c54 = arith.constant 54 : index
    %c0_286 = arith.constant 0 : index
    %c0_287 = arith.constant 0 : index
    %604 = vector.load %arg3[%c54, %c0_286, %c0_287] : memref<72x1x128xf32, #tpu.memory_space<vmem>>, vector<1x1x128xf32>
    %605 = vector.shape_cast %604 : vector<1x1x128xf32> to vector<1x128xf32>
    %606 = vector.broadcast %605 : vector<1x128xf32> to vector<16x128xf32>
    %607 = arith.mulf %602, %606 : vector<16x128xf32>
    %608 = arith.addf %570, %607 : vector<16x128xf32>
    %c55 = arith.constant 55 : index
    %c0_288 = arith.constant 0 : index
    %c0_289 = arith.constant 0 : index
    %609 = vector.load %arg3[%c55, %c0_288, %c0_289] : memref<72x1x128xf32, #tpu.memory_space<vmem>>, vector<1x1x128xf32>
    %610 = vector.shape_cast %609 : vector<1x1x128xf32> to vector<1x128xf32>
    %611 = vector.broadcast %610 : vector<1x128xf32> to vector<16x128xf32>
    %612 = arith.mulf %601, %611 : vector<16x128xf32>
    %613 = arith.addf %608, %612 : vector<16x128xf32>
    %c56 = arith.constant 56 : index
    %c0_290 = arith.constant 0 : index
    %c0_291 = arith.constant 0 : index
    %614 = vector.load %arg3[%c56, %c0_290, %c0_291] : memref<72x1x128xf32, #tpu.memory_space<vmem>>, vector<1x1x128xf32>
    %615 = vector.shape_cast %614 : vector<1x1x128xf32> to vector<1x128xf32>
    %616 = vector.broadcast %615 : vector<1x128xf32> to vector<16x128xf32>
    %617 = arith.mulf %603, %616 : vector<16x128xf32>
    %618 = arith.addf %613, %617 : vector<16x128xf32>
    %c57 = arith.constant 57 : index
    %c0_292 = arith.constant 0 : index
    %c0_293 = arith.constant 0 : index
    %619 = vector.load %arg3[%c57, %c0_292, %c0_293] : memref<72x1x128xf32, #tpu.memory_space<vmem>>, vector<1x1x128xf32>
    %620 = vector.shape_cast %619 : vector<1x1x128xf32> to vector<1x128xf32>
    %621 = vector.broadcast %620 : vector<1x128xf32> to vector<16x128xf32>
    %622 = arith.mulf %602, %621 : vector<16x128xf32>
    %623 = arith.addf %585, %622 : vector<16x128xf32>
    %c58 = arith.constant 58 : index
    %c0_294 = arith.constant 0 : index
    %c0_295 = arith.constant 0 : index
    %624 = vector.load %arg3[%c58, %c0_294, %c0_295] : memref<72x1x128xf32, #tpu.memory_space<vmem>>, vector<1x1x128xf32>
    %625 = vector.shape_cast %624 : vector<1x1x128xf32> to vector<1x128xf32>
    %626 = vector.broadcast %625 : vector<1x128xf32> to vector<16x128xf32>
    %627 = arith.mulf %601, %626 : vector<16x128xf32>
    %628 = arith.addf %623, %627 : vector<16x128xf32>
    %c59 = arith.constant 59 : index
    %c0_296 = arith.constant 0 : index
    %c0_297 = arith.constant 0 : index
    %629 = vector.load %arg3[%c59, %c0_296, %c0_297] : memref<72x1x128xf32, #tpu.memory_space<vmem>>, vector<1x1x128xf32>
    %630 = vector.shape_cast %629 : vector<1x1x128xf32> to vector<1x128xf32>
    %631 = vector.broadcast %630 : vector<1x128xf32> to vector<16x128xf32>
    %632 = arith.mulf %603, %631 : vector<16x128xf32>
    %633 = arith.addf %628, %632 : vector<16x128xf32>
    %c60 = arith.constant 60 : index
    %c0_298 = arith.constant 0 : index
    %c0_299 = arith.constant 0 : index
    %634 = vector.load %arg3[%c60, %c0_298, %c0_299] : memref<72x1x128xf32, #tpu.memory_space<vmem>>, vector<1x1x128xf32>
    %635 = vector.shape_cast %634 : vector<1x1x128xf32> to vector<1x128xf32>
    %636 = vector.broadcast %635 : vector<1x128xf32> to vector<16x128xf32>
    %637 = arith.mulf %602, %636 : vector<16x128xf32>
    %638 = arith.addf %600, %637 : vector<16x128xf32>
    %c61 = arith.constant 61 : index
    %c0_300 = arith.constant 0 : index
    %c0_301 = arith.constant 0 : index
    %639 = vector.load %arg3[%c61, %c0_300, %c0_301] : memref<72x1x128xf32, #tpu.memory_space<vmem>>, vector<1x1x128xf32>
    %640 = vector.shape_cast %639 : vector<1x1x128xf32> to vector<1x128xf32>
    %641 = vector.broadcast %640 : vector<1x128xf32> to vector<16x128xf32>
    %642 = arith.mulf %601, %641 : vector<16x128xf32>
    %643 = arith.addf %638, %642 : vector<16x128xf32>
    %c62 = arith.constant 62 : index
    %c0_302 = arith.constant 0 : index
    %c0_303 = arith.constant 0 : index
    %644 = vector.load %arg3[%c62, %c0_302, %c0_303] : memref<72x1x128xf32, #tpu.memory_space<vmem>>, vector<1x1x128xf32>
    %645 = vector.shape_cast %644 : vector<1x1x128xf32> to vector<1x128xf32>
    %646 = vector.broadcast %645 : vector<1x128xf32> to vector<16x128xf32>
    %647 = arith.mulf %603, %646 : vector<16x128xf32>
    %648 = arith.addf %643, %647 : vector<16x128xf32>
    %c16_i32_304 = arith.constant 16 : i32
    %649 = tpu.dynamic_rotate %306 by %c16_i32_304 dim 1 : vector<16x128xf32>, i32 -> vector<16x128xf32>
    %c16_i32_305 = arith.constant 16 : i32
    %650 = tpu.dynamic_rotate %309 by %c16_i32_305 dim 1 : vector<16x128xf32>, i32 -> vector<16x128xf32>
    %c16_i32_306 = arith.constant 16 : i32
    %651 = tpu.dynamic_rotate %312 by %c16_i32_306 dim 1 : vector<16x128xf32>, i32 -> vector<16x128xf32>
    %c63 = arith.constant 63 : index
    %c0_307 = arith.constant 0 : index
    %c0_308 = arith.constant 0 : index
    %652 = vector.load %arg3[%c63, %c0_307, %c0_308] : memref<72x1x128xf32, #tpu.memory_space<vmem>>, vector<1x1x128xf32>
    %653 = vector.shape_cast %652 : vector<1x1x128xf32> to vector<1x128xf32>
    %654 = vector.broadcast %653 : vector<1x128xf32> to vector<16x128xf32>
    %655 = arith.mulf %650, %654 : vector<16x128xf32>
    %656 = arith.addf %618, %655 : vector<16x128xf32>
    %c64 = arith.constant 64 : index
    %c0_309 = arith.constant 0 : index
    %c0_310 = arith.constant 0 : index
    %657 = vector.load %arg3[%c64, %c0_309, %c0_310] : memref<72x1x128xf32, #tpu.memory_space<vmem>>, vector<1x1x128xf32>
    %658 = vector.shape_cast %657 : vector<1x1x128xf32> to vector<1x128xf32>
    %659 = vector.broadcast %658 : vector<1x128xf32> to vector<16x128xf32>
    %660 = arith.mulf %649, %659 : vector<16x128xf32>
    %661 = arith.addf %656, %660 : vector<16x128xf32>
    %c65 = arith.constant 65 : index
    %c0_311 = arith.constant 0 : index
    %c0_312 = arith.constant 0 : index
    %662 = vector.load %arg3[%c65, %c0_311, %c0_312] : memref<72x1x128xf32, #tpu.memory_space<vmem>>, vector<1x1x128xf32>
    %663 = vector.shape_cast %662 : vector<1x1x128xf32> to vector<1x128xf32>
    %664 = vector.broadcast %663 : vector<1x128xf32> to vector<16x128xf32>
    %665 = arith.mulf %651, %664 : vector<16x128xf32>
    %666 = arith.addf %661, %665 : vector<16x128xf32>
    %c66 = arith.constant 66 : index
    %c0_313 = arith.constant 0 : index
    %c0_314 = arith.constant 0 : index
    %667 = vector.load %arg3[%c66, %c0_313, %c0_314] : memref<72x1x128xf32, #tpu.memory_space<vmem>>, vector<1x1x128xf32>
    %668 = vector.shape_cast %667 : vector<1x1x128xf32> to vector<1x128xf32>
    %669 = vector.broadcast %668 : vector<1x128xf32> to vector<16x128xf32>
    %670 = arith.mulf %650, %669 : vector<16x128xf32>
    %671 = arith.addf %633, %670 : vector<16x128xf32>
    %c67 = arith.constant 67 : index
    %c0_315 = arith.constant 0 : index
    %c0_316 = arith.constant 0 : index
    %672 = vector.load %arg3[%c67, %c0_315, %c0_316] : memref<72x1x128xf32, #tpu.memory_space<vmem>>, vector<1x1x128xf32>
    %673 = vector.shape_cast %672 : vector<1x1x128xf32> to vector<1x128xf32>
    %674 = vector.broadcast %673 : vector<1x128xf32> to vector<16x128xf32>
    %675 = arith.mulf %649, %674 : vector<16x128xf32>
    %676 = arith.addf %671, %675 : vector<16x128xf32>
    %c68 = arith.constant 68 : index
    %c0_317 = arith.constant 0 : index
    %c0_318 = arith.constant 0 : index
    %677 = vector.load %arg3[%c68, %c0_317, %c0_318] : memref<72x1x128xf32, #tpu.memory_space<vmem>>, vector<1x1x128xf32>
    %678 = vector.shape_cast %677 : vector<1x1x128xf32> to vector<1x128xf32>
    %679 = vector.broadcast %678 : vector<1x128xf32> to vector<16x128xf32>
    %680 = arith.mulf %651, %679 : vector<16x128xf32>
    %681 = arith.addf %676, %680 : vector<16x128xf32>
    %c69 = arith.constant 69 : index
    %c0_319 = arith.constant 0 : index
    %c0_320 = arith.constant 0 : index
    %682 = vector.load %arg3[%c69, %c0_319, %c0_320] : memref<72x1x128xf32, #tpu.memory_space<vmem>>, vector<1x1x128xf32>
    %683 = vector.shape_cast %682 : vector<1x1x128xf32> to vector<1x128xf32>
    %684 = vector.broadcast %683 : vector<1x128xf32> to vector<16x128xf32>
    %685 = arith.mulf %650, %684 : vector<16x128xf32>
    %686 = arith.addf %648, %685 : vector<16x128xf32>
    %c70 = arith.constant 70 : index
    %c0_321 = arith.constant 0 : index
    %c0_322 = arith.constant 0 : index
    %687 = vector.load %arg3[%c70, %c0_321, %c0_322] : memref<72x1x128xf32, #tpu.memory_space<vmem>>, vector<1x1x128xf32>
    %688 = vector.shape_cast %687 : vector<1x1x128xf32> to vector<1x128xf32>
    %689 = vector.broadcast %688 : vector<1x128xf32> to vector<16x128xf32>
    %690 = arith.mulf %649, %689 : vector<16x128xf32>
    %691 = arith.addf %686, %690 : vector<16x128xf32>
    %c71 = arith.constant 71 : index
    %c0_323 = arith.constant 0 : index
    %c0_324 = arith.constant 0 : index
    %692 = vector.load %arg3[%c71, %c0_323, %c0_324] : memref<72x1x128xf32, #tpu.memory_space<vmem>>, vector<1x1x128xf32>
    %693 = vector.shape_cast %692 : vector<1x1x128xf32> to vector<1x128xf32>
    %694 = vector.broadcast %693 : vector<1x128xf32> to vector<16x128xf32>
    %695 = arith.mulf %651, %694 : vector<16x128xf32>
    %696 = arith.addf %691, %695 : vector<16x128xf32>
    %c1_i32_325 = arith.constant 1 : i32
    %697 = tpu.dynamic_rotate %666 by %c1_i32_325 dim 0 : vector<16x128xf32>, i32 -> vector<16x128xf32>
    %cst_326 = arith.constant 0.000000e+00 : f32
    %698 = vector.broadcast %cst_326 : f32 to vector<16x128xf32>
    %699 = arith.select %23, %697, %698 : vector<16x128xi1>, vector<16x128xf32>
    %c15_i32_327 = arith.constant 15 : i32
    %700 = tpu.dynamic_rotate %696 by %c15_i32_327 dim 0 : vector<16x128xf32>, i32 -> vector<16x128xf32>
    %cst_328 = arith.constant 0.000000e+00 : f32
    %701 = vector.broadcast %cst_328 : f32 to vector<16x128xf32>
    %702 = arith.select %25, %700, %701 : vector<16x128xi1>, vector<16x128xf32>
    %703 = arith.addf %699, %681 : vector<16x128xf32>
    %704 = arith.addf %703, %702 : vector<16x128xf32>
    %cst_329 = arith.constant dense<0.000000e+00> : vector<128xf32>
    %705 = vector.multi_reduction <add>, %704, %cst_329 [0] : vector<16x128xf32> to vector<128xf32>
    %706 = vector.shape_cast %705 : vector<128xf32> to vector<1x128xf32>
    %c1_i32_330 = arith.constant 1 : i32
    %707 = tpu.dynamic_rotate %706 by %c1_i32_330 dim 1 : vector<1x128xf32>, i32 -> vector<1x128xf32>
    %708 = arith.addf %706, %707 : vector<1x128xf32>
    %c2_i32_331 = arith.constant 2 : i32
    %709 = tpu.dynamic_rotate %708 by %c2_i32_331 dim 1 : vector<1x128xf32>, i32 -> vector<1x128xf32>
    %710 = arith.addf %708, %709 : vector<1x128xf32>
    %c4_i32_332 = arith.constant 4 : i32
    %711 = tpu.dynamic_rotate %710 by %c4_i32_332 dim 1 : vector<1x128xf32>, i32 -> vector<1x128xf32>
    %712 = arith.addf %710, %711 : vector<1x128xf32>
    %c8_i32_333 = arith.constant 8 : i32
    %713 = tpu.dynamic_rotate %712 by %c8_i32_333 dim 1 : vector<1x128xf32>, i32 -> vector<1x128xf32>
    %714 = arith.addf %712, %713 : vector<1x128xf32>
    %cst_334 = arith.constant 0.000000e+00 : f32
    %715 = vector.broadcast %cst_334 : f32 to vector<1x128xf32>
    %716 = arith.select %44, %714, %715 : vector<1x128xi1>, vector<1x128xf32>
    %c127_i32_335 = arith.constant 127 : i32
    %717 = tpu.dynamic_rotate %716 by %c127_i32_335 dim 1 : vector<1x128xf32>, i32 -> vector<1x128xf32>
    %718 = arith.addf %716, %717 : vector<1x128xf32>
    %c126_i32_336 = arith.constant 126 : i32
    %719 = tpu.dynamic_rotate %718 by %c126_i32_336 dim 1 : vector<1x128xf32>, i32 -> vector<1x128xf32>
    %720 = arith.addf %718, %719 : vector<1x128xf32>
    %c124_i32_337 = arith.constant 124 : i32
    %721 = tpu.dynamic_rotate %720 by %c124_i32_337 dim 1 : vector<1x128xf32>, i32 -> vector<1x128xf32>
    %722 = arith.addf %720, %721 : vector<1x128xf32>
    %c120_i32_338 = arith.constant 120 : i32
    %723 = tpu.dynamic_rotate %722 by %c120_i32_338 dim 1 : vector<1x128xf32>, i32 -> vector<1x128xf32>
    %724 = arith.addf %722, %723 : vector<1x128xf32>
    %cst_339 = arith.constant 3.906250e-03 : f32
    %725 = vector.broadcast %cst_339 : f32 to vector<1x128xf32>
    %726 = arith.mulf %724, %725 : vector<1x128xf32>
    %727 = vector.broadcast %726 : vector<1x128xf32> to vector<16x128xf32>
    %728 = arith.subf %704, %727 : vector<16x128xf32>
    %729 = arith.mulf %728, %728 : vector<16x128xf32>
    %cst_340 = arith.constant dense<0.000000e+00> : vector<128xf32>
    %730 = vector.multi_reduction <add>, %729, %cst_340 [0] : vector<16x128xf32> to vector<128xf32>
    %731 = vector.shape_cast %730 : vector<128xf32> to vector<1x128xf32>
    %c1_i32_341 = arith.constant 1 : i32
    %732 = tpu.dynamic_rotate %731 by %c1_i32_341 dim 1 : vector<1x128xf32>, i32 -> vector<1x128xf32>
    %733 = arith.addf %731, %732 : vector<1x128xf32>
    %c2_i32_342 = arith.constant 2 : i32
    %734 = tpu.dynamic_rotate %733 by %c2_i32_342 dim 1 : vector<1x128xf32>, i32 -> vector<1x128xf32>
    %735 = arith.addf %733, %734 : vector<1x128xf32>
    %c4_i32_343 = arith.constant 4 : i32
    %736 = tpu.dynamic_rotate %735 by %c4_i32_343 dim 1 : vector<1x128xf32>, i32 -> vector<1x128xf32>
    %737 = arith.addf %735, %736 : vector<1x128xf32>
    %c8_i32_344 = arith.constant 8 : i32
    %738 = tpu.dynamic_rotate %737 by %c8_i32_344 dim 1 : vector<1x128xf32>, i32 -> vector<1x128xf32>
    %739 = arith.addf %737, %738 : vector<1x128xf32>
    %cst_345 = arith.constant 0.000000e+00 : f32
    %740 = vector.broadcast %cst_345 : f32 to vector<1x128xf32>
    %741 = arith.select %44, %739, %740 : vector<1x128xi1>, vector<1x128xf32>
    %c127_i32_346 = arith.constant 127 : i32
    %742 = tpu.dynamic_rotate %741 by %c127_i32_346 dim 1 : vector<1x128xf32>, i32 -> vector<1x128xf32>
    %743 = arith.addf %741, %742 : vector<1x128xf32>
    %c126_i32_347 = arith.constant 126 : i32
    %744 = tpu.dynamic_rotate %743 by %c126_i32_347 dim 1 : vector<1x128xf32>, i32 -> vector<1x128xf32>
    %745 = arith.addf %743, %744 : vector<1x128xf32>
    %c124_i32_348 = arith.constant 124 : i32
    %746 = tpu.dynamic_rotate %745 by %c124_i32_348 dim 1 : vector<1x128xf32>, i32 -> vector<1x128xf32>
    %747 = arith.addf %745, %746 : vector<1x128xf32>
    %c120_i32_349 = arith.constant 120 : i32
    %748 = tpu.dynamic_rotate %747 by %c120_i32_349 dim 1 : vector<1x128xf32>, i32 -> vector<1x128xf32>
    %749 = arith.addf %747, %748 : vector<1x128xf32>
    %cst_350 = arith.constant 3.906250e-03 : f32
    %750 = vector.broadcast %cst_350 : f32 to vector<1x128xf32>
    %751 = arith.mulf %749, %750 : vector<1x128xf32>
    %cst_351 = arith.constant 9.99999974E-6 : f32
    %752 = vector.broadcast %cst_351 : f32 to vector<1x128xf32>
    %753 = arith.addf %751, %752 : vector<1x128xf32>
    %754 = math.rsqrt %753 : vector<1x128xf32>
    %755 = vector.broadcast %754 : vector<1x128xf32> to vector<16x128xf32>
    %756 = arith.mulf %728, %755 : vector<16x128xf32>
    %cst_352 = arith.constant 0.000000e+00 : f32
    %757 = vector.broadcast %cst_352 : f32 to vector<16x128xf32>
    %758 = arith.maximumf %756, %757 : vector<16x128xf32>
    %c0_353 = arith.constant 0 : index
    %c0_354 = arith.constant 0 : index
    %c0_355 = arith.constant 0 : index
    %759 = vector.load %arg4[%c0_353, %c0_354, %c0_355] : memref<1x16x128xf32, #tpu.memory_space<vmem>>, vector<1x16x128xf32>
    %760 = vector.shape_cast %759 : vector<1x16x128xf32> to vector<16x128xf32>
    %761 = vector.shape_cast %758 : vector<16x128xf32> to vector<1x16x128xf32>
    tpu.vector_store %arg4[%c0_353, %c0_354, %c0_355], %761 {strides = array<i32>} : memref<1x16x128xf32, #tpu.memory_space<vmem>>, vector<1x16x128xf32>,
    return
  }
  func.func @transform_0(%arg0: i32) -> (i32, i32, i32) {
    %c0_i32 = arith.constant 0 : i32
    %c0_i32_0 = arith.constant 0 : i32
    %c0_i32_1 = arith.constant 0 : i32
    return %arg0, %c0_i32, %c0_i32_0 : i32, i32, i32
  }
  func.func @transform_1(%arg0: i32) -> (i32, i32, i32) {
    %c0_i32 = arith.constant 0 : i32
    %c0_i32_0 = arith.constant 0 : i32
    %c0_i32_1 = arith.constant 0 : i32
    %c0_i32_2 = arith.constant 0 : i32
    return %c0_i32, %c0_i32_0, %c0_i32_1 : i32, i32, i32
  }
  func.func @transform_2(%arg0: i32) -> (i32, i32, i32) {
    %c0_i32 = arith.constant 0 : i32
    %c0_i32_0 = arith.constant 0 : i32
    %c0_i32_1 = arith.constant 0 : i32
    %c0_i32_2 = arith.constant 0 : i32
    return %c0_i32, %c0_i32_0, %c0_i32_1 : i32, i32, i32
  }
  func.func @transform_3(%arg0: i32) -> (i32, i32, i32) {
    %c0_i32 = arith.constant 0 : i32
    %c0_i32_0 = arith.constant 0 : i32
    %c0_i32_1 = arith.constant 0 : i32
    return %arg0, %c0_i32, %c0_i32_0 : i32, i32, i32
  }
}

</mosaic_0001>

<llo_original>
// kernel: tile.7
$region0: #{tile.7}
  %s0 = inlined_call_operand.vmem [shape: f32[2,16,2,64], index: 0, kind: input, shape index: {}]
  %s1 = inlined_call_operand.vmem [shape: f32[2,16,128], index: 1, kind: output, shape index: {}]
  $region1: #{tile.7} parent=0
    #allocation0 [shape = 'u8[131072]{0}', space=vmem, size = 0x20000, scoped, tag = 'scoped mem for input reshape']
    %s3 = sshllo.u32 0, 2
    %s4 = smul.addr 2, 31
    %s5 = scalar_lea.vmem %s0, %s4
    %v6 = vld [vmem:[%s5] sm:%s3]
    %s7 = scalar_lea.vmem [#allocation0], 248
    %8 = vst [vmem:[%s7] sm:%s3] %v6
    %s9 = smul.addr 2, 30
    %s10 = scalar_lea.vmem %s0, %s9
    %v11 = vld [vmem:[%s10] sm:%s3]
    %s12 = scalar_lea.vmem [#allocation0], 240
    %13 = vst [vmem:[%s12] sm:%s3] %v11
    %s14 = smul.addr 2, 29
    %s15 = scalar_lea.vmem %s0, %s14
    %v16 = vld [vmem:[%s15] sm:%s3]
    %s17 = scalar_lea.vmem [#allocation0], 232
    %18 = vst [vmem:[%s17] sm:%s3] %v16
    %s19 = smul.addr 2, 28
    %s20 = scalar_lea.vmem %s0, %s19
    %v21 = vld [vmem:[%s20] sm:%s3]
    %s22 = scalar_lea.vmem [#allocation0], 224
    %23 = vst [vmem:[%s22] sm:%s3] %v21
    %s24 = smul.addr 2, 27
    %s25 = scalar_lea.vmem %s0, %s24
    %v26 = vld [vmem:[%s25] sm:%s3]
    %s27 = scalar_lea.vmem [#allocation0], 216
    %28 = vst [vmem:[%s27] sm:%s3] %v26
    %s29 = smul.addr 2, 26
    %s30 = scalar_lea.vmem %s0, %s29
    %v31 = vld [vmem:[%s30] sm:%s3]
    %s32 = scalar_lea.vmem [#allocation0], 208
    %33 = vst [vmem:[%s32] sm:%s3] %v31
    %s34 = smul.addr 2, 25
    %s35 = scalar_lea.vmem %s0, %s34
    %v36 = vld [vmem:[%s35] sm:%s3]
    %s37 = scalar_lea.vmem [#allocation0], 200
    %38 = vst [vmem:[%s37] sm:%s3] %v36
    %s39 = smul.addr 2, 24
    %s40 = scalar_lea.vmem %s0, %s39
    %v41 = vld [vmem:[%s40] sm:%s3]
    %s42 = scalar_lea.vmem [#allocation0], 192
    %43 = vst [vmem:[%s42] sm:%s3] %v41
    %s44 = smul.addr 2, 23
    %s45 = scalar_lea.vmem %s0, %s44
    %v46 = vld [vmem:[%s45] sm:%s3]
    %s47 = scalar_lea.vmem [#allocation0], 184
    %48 = vst [vmem:[%s47] sm:%s3] %v46
    %s49 = smul.addr 2, 22
    %s50 = scalar_lea.vmem %s0, %s49
    %v51 = vld [vmem:[%s50] sm:%s3]
    %s52 = scalar_lea.vmem [#allocation0], 176
    %53 = vst [vmem:[%s52] sm:%s3] %v51
    %s54 = smul.addr 2, 21
    %s55 = scalar_lea.vmem %s0, %s54
    %v56 = vld [vmem:[%s55] sm:%s3]
    %s57 = scalar_lea.vmem [#allocation0], 168
    %58 = vst [vmem:[%s57] sm:%s3] %v56
    %s59 = smul.addr 2, 20
    %s60 = scalar_lea.vmem %s0, %s59
    %v61 = vld [vmem:[%s60] sm:%s3]
    %s62 = scalar_lea.vmem [#allocation0], 160
    %63 = vst [vmem:[%s62] sm:%s3] %v61
    %s64 = smul.addr 2, 19
    %s65 = scalar_lea.vmem %s0, %s64
    %v66 = vld [vmem:[%s65] sm:%s3]
    %s67 = scalar_lea.vmem [#allocation0], 152
    %68 = vst [vmem:[%s67] sm:%s3] %v66
    %s69 = smul.addr 2, 18
    %s70 = scalar_lea.vmem %s0, %s69
    %v71 = vld [vmem:[%s70] sm:%s3]
    %s72 = scalar_lea.vmem [#allocation0], 144
    %73 = vst [vmem:[%s72] sm:%s3] %v71
    %s74 = smul.addr 2, 17
    %s75 = scalar_lea.vmem %s0, %s74
    %v76 = vld [vmem:[%s75] sm:%s3]
    %s77 = scalar_lea.vmem [#allocation0], 136
    %78 = vst [vmem:[%s77] sm:%s3] %v76
    %s79 = smul.addr 2, 16
    %s80 = scalar_lea.vmem %s0, %s79
    %v81 = vld [vmem:[%s80] sm:%s3]
    %s82 = scalar_lea.vmem [#allocation0], 128
    %83 = vst [vmem:[%s82] sm:%s3] %v81
    %s84 = smul.addr 2, 15
    %s85 = scalar_lea.vmem %s0, %s84
    %v86 = vld [vmem:[%s85] sm:%s3]
    %s87 = scalar_lea.vmem [#allocation0], 120
    %88 = vst [vmem:[%s87] sm:%s3] %v86
    %s89 = smul.addr 2, 14
    %s90 = scalar_lea.vmem %s0, %s89
    %v91 = vld [vmem:[%s90] sm:%s3]
    %s92 = scalar_lea.vmem [#allocation0], 112
    %93 = vst [vmem:[%s92] sm:%s3] %v91
    %s94 = smul.addr 2, 13
    %s95 = scalar_lea.vmem %s0, %s94
    %v96 = vld [vmem:[%s95] sm:%s3]
    %s97 = scalar_lea.vmem [#allocation0], 104
    %98 = vst [vmem:[%s97] sm:%s3] %v96
    %s99 = smul.addr 2, 12
    %s100 = scalar_lea.vmem %s0, %s99
    %v101 = vld [vmem:[%s100] sm:%s3]
    %s102 = scalar_lea.vmem [#allocation0], 96
    %103 = vst [vmem:[%s102] sm:%s3] %v101
    %s104 = smul.addr 2, 11
    %s105 = scalar_lea.vmem %s0, %s104
    %v106 = vld [vmem:[%s105] sm:%s3]
    %s107 = scalar_lea.vmem [#allocation0], 88
    %108 = vst [vmem:[%s107] sm:%s3] %v106
    %s109 = smul.addr 2, 10
    %s110 = scalar_lea.vmem %s0, %s109
    %v111 = vld [vmem:[%s110] sm:%s3]
    %s112 = scalar_lea.vmem [#allocation0], 80
    %113 = vst [vmem:[%s112] sm:%s3] %v111
    %s114 = smul.addr 2, 9
    %s115 = scalar_lea.vmem %s0, %s114
    %v116 = vld [vmem:[%s115] sm:%s3]
    %s117 = scalar_lea.vmem [#allocation0], 72
    %118 = vst [vmem:[%s117] sm:%s3] %v116
    %s119 = smul.addr 2, 8
    %s120 = scalar_lea.vmem %s0, %s119
    %v121 = vld [vmem:[%s120] sm:%s3]
    %s122 = scalar_lea.vmem [#allocation0], 64
    %123 = vst [vmem:[%s122] sm:%s3] %v121
    %s124 = smul.addr 2, 7
    %s125 = scalar_lea.vmem %s0, %s124
    %v126 = vld [vmem:[%s125] sm:%s3]
    %s127 = scalar_lea.vmem [#allocation0], 56
    %128 = vst [vmem:[%s127] sm:%s3] %v126
    %s129 = smul.addr 2, 6
    %s130 = scalar_lea.vmem %s0, %s129
    %v131 = vld [vmem:[%s130] sm:%s3]
    %s132 = scalar_lea.vmem [#allocation0], 48
    %133 = vst [vmem:[%s132] sm:%s3] %v131
    %s134 = smul.addr 2, 5
    %s135 = scalar_lea.vmem %s0, %s134
    %v136 = vld [vmem:[%s135] sm:%s3]
    %s137 = scalar_lea.vmem [#allocation0], 40
    %138 = vst [vmem:[%s137] sm:%s3] %v136
    %s139 = smul.addr 2, 4
    %s140 = scalar_lea.vmem %s0, %s139
    %v141 = vld [vmem:[%s140] sm:%s3]
    %s142 = scalar_lea.vmem [#allocation0], 32
    %143 = vst [vmem:[%s142] sm:%s3] %v141
    %s144 = smul.addr 2, 3
    %s145 = scalar_lea.vmem %s0, %s144
    %v146 = vld [vmem:[%s145] sm:%s3]
    %s147 = scalar_lea.vmem [#allocation0], 24
    %148 = vst [vmem:[%s147] sm:%s3] %v146
    %s149 = smul.addr 2, 2
    %s150 = scalar_lea.vmem %s0, %s149
    %v151 = vld [vmem:[%s150] sm:%s3]
    %s152 = scalar_lea.vmem [#allocation0], 16
    %153 = vst [vmem:[%s152] sm:%s3] %v151
    %s154 = scalar_lea.vmem %s0, 2
    %v155 = vld [vmem:[%s154] sm:%s3]
    %s156 = scalar_lea.vmem [#allocation0], 8
    %157 = vst [vmem:[%s156] sm:%s3] %v155
    %v158 = vld [vmem:[%s0] sm:%s3]
    %159 = vst [vmem:[#allocation0] sm:%s3] %v158
    %v160 = vld [vmem:[#allocation0] ss:$8 sm:$0xf]
    %v161 = vld [vmem:[#allocation0] ss:$8 sm:$0xf0]
    %vm162 = vcmask 1047556
    %v163 = vsel %vm162, %v161, %v160
    %vm164 = vcmask 523264
    %165 = vst.msk [vmem:[%s1] sm:$0xff] %vm164, %v163
    %s166 = scalar_lea.vmem [#allocation0], 64
    %v167 = vld [vmem:[%s166] ss:$8 sm:$0xf]
    %s168 = scalar_lea.vmem [#allocation0], 64
    %v169 = vld [vmem:[%s168] ss:$8 sm:$0xf0]
    %vm170 = vcmask 1047556
    %v171 = vsel %vm170, %v169, %v167
    %vm172 = vcmask 523264
    %s173 = scalar_lea.vmem %s1, 8
    %174 = vst.msk [vmem:[%s173] sm:$0xff] %vm172, %v171
    %s175 = scalar_lea.vmem [#allocation0], 128
    %v176 = vld [vmem:[%s175] ss:$8 sm:$0xf]
    %s177 = scalar_lea.vmem [#allocation0], 128
    %v178 = vld [vmem:[%s177] ss:$8 sm:$0xf0]
    %vm179 = vcmask 1047556
    %v180 = vsel %vm179, %v178, %v176
    %vm181 = vcmask 523264
    %s182 = scalar_lea.vmem %s1, 16
    %183 = vst.msk [vmem:[%s182] sm:$0xff] %vm181, %v180
    %s184 = scalar_lea.vmem [#allocation0], 192
    %v185 = vld [vmem:[%s184] ss:$8 sm:$0xf]
    %s186 = scalar_lea.vmem [#allocation0], 192
    %v187 = vld [vmem:[%s186] ss:$8 sm:$0xf0]
    %vm188 = vcmask 1047556
    %v189 = vsel %vm188, %v187, %v185
    %vm190 = vcmask 523264
    %s191 = scalar_lea.vmem %s1, 24
    %192 = vst.msk [vmem:[%s191] sm:$0xff] %vm190, %v189
    %s193 = scalar_lea.vmem [#allocation0], 1
    %v194 = vld [vmem:[%s193] ss:$8 sm:$0xf]
    %s195 = scalar_lea.vmem [#allocation0], 1
    %v196 = vld [vmem:[%s195] ss:$8 sm:$0xf0]
    %vm197 = vcmask 1047556
    %v198 = vsel %vm197, %v196, %v194
    %199 = vrot.lane.b32.xlu0 %v198, 64
    %v200 = vpop.permute.xlu0 %199
    %vm201 = vcmask 1048064
    %202 = vst.msk [vmem:[%s1] sm:$0xff] %vm201, %v200
    %s203 = scalar_lea.vmem [#allocation0], 65
    %v204 = vld [vmem:[%s203] ss:$8 sm:$0xf]
    %s205 = scalar_lea.vmem [#allocation0], 65
    %v206 = vld [vmem:[%s205] ss:$8 sm:$0xf0]
    %vm207 = vcmask 1047556
    %v208 = vsel %vm207, %v206, %v204
    %209 = vrot.lane.b32.xlu0 %v208, 64
    %v210 = vpop.permute.xlu0 %209
    %vm211 = vcmask 1048064
    %s212 = scalar_lea.vmem %s1, 8
    %213 = vst.msk [vmem:[%s212] sm:$0xff] %vm211, %v210
    %s214 = scalar_lea.vmem [#allocation0], 129
    %v215 = vld [vmem:[%s214] ss:$8 sm:$0xf]
    %s216 = scalar_lea.vmem [#allocation0], 129
    %v217 = vld [vmem:[%s216] ss:$8 sm:$0xf0]
    %vm218 = vcmask 1047556
    %v219 = vsel %vm218, %v217, %v215
    %220 = vrot.lane.b32.xlu0 %v219, 64
    %v221 = vpop.permute.xlu0 %220
    %vm222 = vcmask 1048064
    %s223 = scalar_lea.vmem %s1, 16
    %224 = vst.msk [vmem:[%s223] sm:$0xff] %vm222, %v221
    %s225 = scalar_lea.vmem [#allocation0], 193
    %v226 = vld [vmem:[%s225] ss:$8 sm:$0xf]
    %s227 = scalar_lea.vmem [#allocation0], 193
    %v228 = vld [vmem:[%s227] ss:$8 sm:$0xf0]
    %vm229 = vcmask 1047556
    %v230 = vsel %vm229, %v228, %v226
    %231 = vrot.lane.b32.xlu0 %v230, 64
    %v232 = vpop.permute.xlu0 %231
    %vm233 = vcmask 1048064
    %s234 = scalar_lea.vmem %s1, 24
    %235 = vst.msk [vmem:[%s234] sm:$0xff] %vm233, %v232

// kernel: double_conv.1
$region0: #{double_conv.1}
  #allocation0 [shape = 'u32[]', space=smem, size = 0x4, offset = 0x4, fixed_abs, tag = 'smem constant byte address 0x4 - core index']
  #allocation1 [shape = 'u32[144,128]{1,0:T(1,128)}', space=vmem, size = 0x12000, scoped, tag = 'internal scratch']
  %s0 = inlined_call_operand.vmem [shape: f32[2,16,128], index: 0, kind: input, shape index: {}]
  %s1 = inlined_call_operand.vmem [shape: f32[36,1,128], index: 1, kind: input, shape index: {}]
  %s2 = inlined_call_operand.vmem [shape: f32[72,1,128], index: 2, kind: input, shape index: {}]
  %s3 = inlined_call_operand.vmem [shape: f32[2,16,128], index: 3, kind: output, shape index: {}]
  %s4 = sld [smem:[#allocation0]]
  $region45: #{double_conv.1} parent=0
    _
  %s6 = ssub.s32 1, %s4
  %s7 = scalar_select 0, %s6, %s4
  loop: start=0, step=1, limit=4
  $region2: #{double_conv.1} parent=0 // loop_pre_header
    _
  $region3: #{double_conv.1} parent=0 // loop_header
    %s9 = sphi 0, %s13
    %p10 = scmp.ge.s32.totalorder %s9, 4
    %s19 = sphi 0, %s21
    %s22 = sphi 0, %s19
    %s23 = sphi 0, %s22
    %s39 = sphi 0, %s23
    %s43 = sphi 0, %s43
    %s45 = sphi 0, %s43
    %s46 = sphi 0, %s45
    %s60 = sphi 0, %s46
    %s64 = sphi 0, %s64
    %s66 = sphi 0, %s64
    %s67 = sphi 0, %s66
    %s81 = sphi 0, %s67
    %s87 = sphi 0, %s89
    %s90 = sphi 0, %s87
    %s91 = sphi 0, %s90
    %s107 = sphi 0, %s91
  $region4: #{double_conv.1} parent=0 // loop_header_branch
    %12 = sbr.rel (%p10) target = $region8
  $region5: #{double_conv.1} parent=0 // loop_body
    %s14 = ssub.s32 %s9, 1
    %s15 = ssub.s32 %s9, 2
    %s16 = sadd.s32 %s9, 1
    %s17 = ssub.s32 %s9, %s16
    %p18 = scmp.eq.s32.totalorder %s17, 0
    %s20 = sadd.s32 %s19, 1
    %s21 = scalar_select %p18, %s19, %s20
    %p24 = pneg %p18
    %p25 = scmp.eq.s32.totalorder %s9, 1
    %p26 = por %p24, %p25
    %p27 = scmp.ne.s32.totalorder %s19, %s22
    %p28 = scmp.eq.s32.totalorder %s9, 0
    %p29 = por %p27, %p28
    %p30 = scmp.ne.s32.totalorder %s19, %s22
    %p31 = scmp.eq.s32.totalorder %s14, 1
    %p32 = por %p30, %p31
    %p33 = scmp.ne.s32.totalorder %s22, %s23
    %p34 = scmp.eq.s32.totalorder %s14, 0
    %p35 = por %p33, %p34
    %p36 = scmp.ne.s32.totalorder %s22, %s23
    %p37 = scmp.eq.s32.totalorder %s15, 1
    %p38 = por %p36, %p37
    %p40 = scmp.ne.s32.totalorder %s23, %s39
    %p41 = scmp.eq.s32.totalorder %s15, 0
    %p42 = por %p40, %p41
    %s44 = sadd.s32 %s43, 1
    %p47 = scmp.eq.s32.totalorder %s9, 1
    %p48 = scmp.ne.s32.totalorder %s43, %s45
    %p49 = scmp.eq.s32.totalorder %s9, 0
    %p50 = por %p48, %p49
    %p51 = scmp.ne.s32.totalorder %s43, %s45
    %p52 = scmp.eq.s32.totalorder %s14, 1
    %p53 = por %p51, %p52
    %p54 = scmp.ne.s32.totalorder %s45, %s46
    %p55 = scmp.eq.s32.totalorder %s14, 0
    %p56 = por %p54, %p55
    %p57 = scmp.ne.s32.totalorder %s45, %s46
    %p58 = scmp.eq.s32.totalorder %s15, 1
    %p59 = por %p57, %p58
    %p61 = scmp.ne.s32.totalorder %s46, %s60
    %p62 = scmp.eq.s32.totalorder %s15, 0
    %p63 = por %p61, %p62
    %s65 = sadd.s32 %s64, 1
    %p68 = scmp.eq.s32.totalorder %s9, 1
    %p69 = scmp.ne.s32.totalorder %s64, %s66
    %p70 = scmp.eq.s32.totalorder %s9, 0
    %p71 = por %p69, %p70
    %p72 = scmp.ne.s32.totalorder %s64, %s66
    %p73 = scmp.eq.s32.totalorder %s14, 1
    %p74 = por %p72, %p73
    %p75 = scmp.ne.s32.totalorder %s66, %s67
    %p76 = scmp.eq.s32.totalorder %s14, 0
    %p77 = por %p75, %p76
    %p78 = scmp.ne.s32.totalorder %s66, %s67
    %p79 = scmp.eq.s32.totalorder %s15, 1
    %p80 = por %p78, %p79
    %p82 = scmp.ne.s32.totalorder %s67, %s81
    %p83 = scmp.eq.s32.totalorder %s15, 0
    %p84 = por %p82, %p83
    %s85 = ssub.s32 %s9, %s16
    %p86 = scmp.eq.s32.totalorder %s85, 0
    %s88 = sadd.s32 %s87, 1
    %s89 = scalar_select %p86, %s87, %s88
    %p92 = pneg %p86
    %p93 = scmp.eq.s32.totalorder %s9, 1
    %p94 = por %p92, %p93
    %p95 = scmp.ne.s32.totalorder %s87, %s90
    %p96 = scmp.eq.s32.totalorder %s9, 0
    %p97 = por %p95, %p96
    %p98 = scmp.ne.s32.totalorder %s87, %s90
    %p99 = scmp.eq.s32.totalorder %s14, 1
    %p100 = por %p98, %p99
    %p101 = scmp.ne.s32.totalorder %s90, %s91
    %p102 = scmp.eq.s32.totalorder %s14, 0
    %p103 = por %p101, %p102
    %p104 = scmp.ne.s32.totalorder %s90, %s91
    %p105 = scmp.eq.s32.totalorder %s15, 1
    %p106 = por %p104, %p105
    %p108 = scmp.ne.s32.totalorder %s91, %s107
    %p109 = scmp.eq.s32.totalorder %s15, 0
    %p110 = por %p108, %p109
    %p111 = scmp.le.s32.totalorder 1, %s9
    %p112 = scmp.lt.s32.totalorder %s9, 3
    %p113 = pnand %p111, %p112
    %p114 = pneg %p113
    // Predicated region
    $region9: #{double_conv.1} parent=5 // pred_check
      _
    $region10: #{double_conv.1} parent=5 // pred_check_branch
      %116 = sbr.rel (%p113) target = $region12
    $region11: #{double_conv.1} parent=5 // pred_region
      %s117 = ssub.s32 %s9, 1
      // Predicated region
      $region13: #{double_conv.1} parent=11 // pred_check
        %p118 = pneg %p56
      $region14: #{double_conv.1} parent=11 // pred_check_branch
        %120 = sbr.rel (%p118) target = $region16
      $region15: #{double_conv.1} parent=11 // pred_region
        _
      $region16: #{double_conv.1} parent=11 // pred_fallthru
        _
      // Predicated region
      $region17: #{double_conv.1} parent=11 // pred_check
        %p121 = pneg %p77
      $region18: #{double_conv.1} parent=11 // pred_check_branch
        %123 = sbr.rel (%p121) target = $region20
      $region19: #{double_conv.1} parent=11 // pred_region
        _
      $region20: #{double_conv.1} parent=11 // pred_fallthru
        _
    $region12: #{double_conv.1} parent=5 // pred_fallthru
      _
    %p124 = scmp.lt.s32.totalorder %s9, 2
    // Predicated region
    $region21: #{double_conv.1} parent=5 // pred_check
      %p125 = pneg %p124
    $region22: #{double_conv.1} parent=5 // pred_check_branch
      %127 = sbr.rel (%p125) target = $region24
    $region23: #{double_conv.1} parent=5 // pred_region
      // Predicated region
      $region25: #{double_conv.1} parent=23 // pred_check
        %p128 = pneg %p29
      $region26: #{double_conv.1} parent=23 // pred_check_branch
        %130 = sbr.rel (%p128) target = $region28
      $region27: #{double_conv.1} parent=23 // pred_region
        %p131 = scmp.lt.s32.totalorder %s9, 1
        %s132 = scalar_select %p131, %s9, 1
        %s133 = smul.addr %s132, 2
        %s134 = smul.addr %s133, 8
        %s135 = scalar_lea.vmem %s0, %s134
      $region28: #{double_conv.1} parent=23 // pred_fallthru
        _
    $region24: #{double_conv.1} parent=5 // pred_fallthru
      _
    %p136 = scmp.le.s32.totalorder 1, %s9
    %p137 = scmp.lt.s32.totalorder %s9, 3
    %p138 = pnand %p136, %p137
    %p139 = pneg %p138
    // Predicated region
    $region29: #{double_conv.1} parent=5 // pred_check
      _
    $region30: #{double_conv.1} parent=5 // pred_check_branch
      %141 = sbr.rel (%p138) target = $region32
    $region31: #{double_conv.1} parent=5 // pred_region
      %s142 = ssub.s32 %s9, 1
      %p143 = scmp.lt.s32.totalorder %s14, 1
      %s144 = scalar_select %p143, %s14, 1
      %s145 = smul.addr %s144, 2
      %s146 = smul.addr %s145, 8
      %s147 = scalar_lea.vmem %s0, %s146
      %p148 = pneg %p35
      %p149 = pneg %p32
      %p150 = pneg %p56
      %p151 = pneg %p53
      %p152 = pneg %p77
      %p153 = pneg %p74
      %p154 = pneg %p103
      %p155 = pneg %p100
      %p156 = scmp.lt.s32.totalorder %s14, 1
      %s157 = scalar_select %p156, %s14, 1
      %s158 = smul.addr %s157, 2
      %s159 = smul.addr %s158, 8
      %s160 = scalar_lea.vmem %s3, %s159
      %p161 = scmp.lt.s32.totalorder %s14, 1
      %s162 = scalar_select %p161, %s14, 1
      %s163 = smul.addr %s162, 2
      %s164 = smul.addr %s163, 8
      %s165 = scalar_lea.vmem %s0, %s164
      %p166 = scmp.lt.s32.totalorder %s14, 1
      %s167 = scalar_select %p166, %s14, 1
      %s168 = smul.addr %s167, 2
      %s169 = smul.addr %s168, 8
      %s170 = scalar_lea.vmem %s3, %s169
      %v171 = vlaneseq
      %v172 = vand.u32 %v171, 127
      %vm173 = vcmp.lt.s32.totalorder %v172, 0
      %v174 = vsub.s32 0, %v172
      %v175 = vsel %vm173, %v174, %v172
      %v176 = vshrl.u32 %v175, 4
      %v177 = vand.u32 %v175, 15
      %v178 = vsub.s32 0, %v177
      %v179 = vsel %vm173, %v178, %v177
      %vm180 = vcmp.ne.s32.totalorder %v179, 0
      %vm181 = vcmp.lt.s32.totalorder %v179, 0
      %vm182 = vmand %vm181, %vm180
      %v183 = vadd.s32 %v179, 16
      %v184 = vsel %vm182, %v183, %v179
      %v185 = vlaneseq
      %v186 = vshrl.u32 %v185, 7
      %v187 = vadd.s32 %v186, 8
      %vm188 = vcmp.ge.s32.totalorder %v184, 1
      %vm189 = vcmp.le.s32.totalorder %v184, 14
      %vm190 = vcmp.ge.s32.totalorder %v186, 1
      %vm191 = vcmp.ge.s32.totalorder %v187, 1
      %vm192 = vcmp.le.s32.totalorder %v186, 14
      %vm193 = vcmp.le.s32.totalorder %v187, 14
      %vm194 = vcmp.eq.s32.totalorder %v184, 15
      %v195 = vld [vmem:[%s165] sm:$0xff]
      %v196 = vld [vmem:[%s165 + $0x8] sm:$0xff]
      %197 = vrot.lane.b32.xlu0 %v195, 1
      %v198 = vpop.permute.xlu0 %197
      %199 = vrot.lane.b32.xlu0 %v196, 1
      %v200 = vpop.permute.xlu0 %199
      %v201 = vsel %vm188, %v198, 0.0
      %v202 = vsel %vm188, %v200, 0.0
      %203 = vrot.lane.b32.xlu0 %v195, 127
      %v204 = vpop.permute.xlu0 %203
      %205 = vrot.lane.b32.xlu0 %v196, 127
      %v206 = vpop.permute.xlu0 %205
      %v207 = vsel %vm189, %v204, 0.0
      %v208 = vsel %vm189, %v206, 0.0
      %v209 = vld [vmem:[%s1] sm:$0x1]
      %v211 = vlaneseq
      %v212 = vshrl.u32 %v211, 7
      %v213 = vsub.s32 0, %v212
      %v214 = vrot.slane %v209, %v213
      %v216 = vmul.f32 %v201, %v214
      %v217 = vmul.f32 %v202, %v214
      %v218 = vadd.f32 %v216, 0.0
      %v219 = vadd.f32 %v217, 0.0
      %s220 = scalar_lea.vmem %s1, 1
      %v221 = vld [vmem:[%s220] sm:$0x1]
      %v223 = vlaneseq
      %v224 = vshrl.u32 %v223, 7
      %v225 = vsub.s32 0, %v224
      %v226 = vrot.slane %v221, %v225
      %v228 = vmul.f32 %v195, %v226
      %v229 = vmul.f32 %v196, %v226
      %v230 = vadd.f32 %v218, %v228
      %v231 = vadd.f32 %v219, %v229
      %s232 = scalar_lea.vmem %s1, 2
      %v233 = vld [vmem:[%s232] sm:$0x1]
      %v235 = vlaneseq
      %v236 = vshrl.u32 %v235, 7
      %v237 = vsub.s32 0, %v236
      %v238 = vrot.slane %v233, %v237
      %v240 = vmul.f32 %v207, %v238
      %v241 = vmul.f32 %v208, %v238
      %v242 = vadd.f32 %v230, %v240
      %v243 = vadd.f32 %v231, %v241
      %s244 = scalar_lea.vmem %s1, 3
      %v245 = vld [vmem:[%s244] sm:$0x1]
      %v247 = vlaneseq
      %v248 = vshrl.u32 %v247, 7
      %v249 = vsub.s32 0, %v248
      %v250 = vrot.slane %v245, %v249
      %v252 = vmul.f32 %v201, %v250
      %v253 = vmul.f32 %v202, %v250
      %v254 = vadd.f32 %v252, 0.0
      %v255 = vadd.f32 %v253, 0.0
      %s256 = scalar_lea.vmem %s1, 4
      %v257 = vld [vmem:[%s256] sm:$0x1]
      %v259 = vlaneseq
      %v260 = vshrl.u32 %v259, 7
      %v261 = vsub.s32 0, %v260
      %v262 = vrot.slane %v257, %v261
      %v264 = vmul.f32 %v195, %v262
      %v265 = vmul.f32 %v196, %v262
      %v266 = vadd.f32 %v254, %v264
      %v267 = vadd.f32 %v255, %v265
      %s268 = scalar_lea.vmem %s1, 5
      %v269 = vld [vmem:[%s268] sm:$0x1]
      %v271 = vlaneseq
      %v272 = vshrl.u32 %v271, 7
      %v273 = vsub.s32 0, %v272
      %v274 = vrot.slane %v269, %v273
      %v276 = vmul.f32 %v207, %v274
      %v277 = vmul.f32 %v208, %v274
      %v278 = vadd.f32 %v266, %v276
      %v279 = vadd.f32 %v267, %v277
      %s280 = scalar_lea.vmem %s1, 6
      %v281 = vld [vmem:[%s280] sm:$0x1]
      %v283 = vlaneseq
      %v284 = vshrl.u32 %v283, 7
      %v285 = vsub.s32 0, %v284
      %v286 = vrot.slane %v281, %v285
      %v288 = vmul.f32 %v201, %v286
      %v289 = vmul.f32 %v202, %v286
      %v290 = vadd.f32 %v288, 0.0
      %v291 = vadd.f32 %v289, 0.0
      %s292 = scalar_lea.vmem %s1, 7
      %v293 = vld [vmem:[%s292] sm:$0x1]
      %v295 = vlaneseq
      %v296 = vshrl.u32 %v295, 7
      %v297 = vsub.s32 0, %v296
      %v298 = vrot.slane %v293, %v297
      %v300 = vmul.f32 %v195, %v298
      %v301 = vmul.f32 %v196, %v298
      %v302 = vadd.f32 %v290, %v300
      %v303 = vadd.f32 %v291, %v301
      %s304 = scalar_lea.vmem %s1, 8
      %v305 = vld [vmem:[%s304] sm:$0x1]
      %v307 = vlaneseq
      %v308 = vshrl.u32 %v307, 7
      %v309 = vsub.s32 0, %v308
      %v310 = vrot.slane %v305, %v309
      %v312 = vmul.f32 %v207, %v310
      %v313 = vmul.f32 %v208, %v310
      %v314 = vadd.f32 %v302, %v312
      %v315 = vadd.f32 %v303, %v313
      %316 = vrot.lane.b32.xlu0 %v195, 112
      %v317 = vpop.permute.xlu0 %316
      %318 = vrot.lane.b32.xlu0 %v196, 112
      %v319 = vpop.permute.xlu0 %318
      %320 = vrot.lane.b32.xlu0 %v201, 112
      %v321 = vpop.permute.xlu0 %320
      %322 = vrot.lane.b32.xlu0 %v202, 112
      %v323 = vpop.permute.xlu0 %322
      %324 = vrot.lane.b32.xlu0 %v207, 112
      %v325 = vpop.permute.xlu0 %324
      %326 = vrot.lane.b32.xlu0 %v208, 112
      %v327 = vpop.permute.xlu0 %326
      %s328 = scalar_lea.vmem %s1, 9
      %v329 = vld [vmem:[%s328] sm:$0x1]
      %v331 = vlaneseq
      %v332 = vshrl.u32 %v331, 7
      %v333 = vsub.s32 0, %v332
      %v334 = vrot.slane %v329, %v333
      %v336 = vmul.f32 %v321, %v334
      %v337 = vmul.f32 %v323, %v334
      %v338 = vadd.f32 %v242, %v336
      %v339 = vadd.f32 %v243, %v337
      %s340 = scalar_lea.vmem %s1, 10
      %v341 = vld [vmem:[%s340] sm:$0x1]
      %v343 = vlaneseq
      %v344 = vshrl.u32 %v343, 7
      %v345 = vsub.s32 0, %v344
      %v346 = vrot.slane %v341, %v345
      %v348 = vmul.f32 %v317, %v346
      %v349 = vmul.f32 %v319, %v346
      %v350 = vadd.f32 %v338, %v348
      %v351 = vadd.f32 %v339, %v349
      %s352 = scalar_lea.vmem %s1, 11
      %v353 = vld [vmem:[%s352] sm:$0x1]
      %v355 = vlaneseq
      %v356 = vshrl.u32 %v355, 7
      %v357 = vsub.s32 0, %v356
      %v358 = vrot.slane %v353, %v357
      %v360 = vmul.f32 %v325, %v358
      %v361 = vmul.f32 %v327, %v358
      %v362 = vadd.f32 %v350, %v360
      %v363 = vadd.f32 %v351, %v361
      %s364 = scalar_lea.vmem %s1, 12
      %v365 = vld [vmem:[%s364] sm:$0x1]
      %v367 = vlaneseq
      %v368 = vshrl.u32 %v367, 7
      %v369 = vsub.s32 0, %v368
      %v370 = vrot.slane %v365, %v369
      %v372 = vmul.f32 %v321, %v370
      %v373 = vmul.f32 %v323, %v370
      %v374 = vadd.f32 %v278, %v372
      %v375 = vadd.f32 %v279, %v373
      %s376 = scalar_lea.vmem %s1, 13
      %v377 = vld [vmem:[%s376] sm:$0x1]
      %v379 = vlaneseq
      %v380 = vshrl.u32 %v379, 7
      %v381 = vsub.s32 0, %v380
      %v382 = vrot.slane %v377, %v381
      %v384 = vmul.f32 %v317, %v382
      %v385 = vmul.f32 %v319, %v382
      %v386 = vadd.f32 %v374, %v384
      %v387 = vadd.f32 %v375, %v385
      %s388 = scalar_lea.vmem %s1, 14
      %v389 = vld [vmem:[%s388] sm:$0x1]
      %v391 = vlaneseq
      %v392 = vshrl.u32 %v391, 7
      %v393 = vsub.s32 0, %v392
      %v394 = vrot.slane %v389, %v393
      %v396 = vmul.f32 %v325, %v394
      %v397 = vmul.f32 %v327, %v394
      %v398 = vadd.f32 %v386, %v396
      %v399 = vadd.f32 %v387, %v397
      %s400 = scalar_lea.vmem %s1, 15
      %v401 = vld [vmem:[%s400] sm:$0x1]
      %v403 = vlaneseq
      %v404 = vshrl.u32 %v403, 7
      %v405 = vsub.s32 0, %v404
      %v406 = vrot.slane %v401, %v405
      %v408 = vmul.f32 %v321, %v406
      %v409 = vmul.f32 %v323, %v406
      %v410 = vadd.f32 %v314, %v408
      %v411 = vadd.f32 %v315, %v409
      %s412 = scalar_lea.vmem %s1, 16
      %v413 = vld [vmem:[%s412] sm:$0x1]
      %v415 = vlaneseq
      %v416 = vshrl.u32 %v415, 7
      %v417 = vsub.s32 0, %v416
      %v418 = vrot.slane %v413, %v417
      %v420 = vmul.f32 %v317, %v418
      %v421 = vmul.f32 %v319, %v418
      %v422 = vadd.f32 %v410, %v420
      %v423 = vadd.f32 %v411, %v421
      %s424 = scalar_lea.vmem %s1, 17
      %v425 = vld [vmem:[%s424] sm:$0x1]
      %v427 = vlaneseq
      %v428 = vshrl.u32 %v427, 7
      %v429 = vsub.s32 0, %v428
      %v430 = vrot.slane %v425, %v429
      %v432 = vmul.f32 %v325, %v430
      %v433 = vmul.f32 %v327, %v430
      %v434 = vadd.f32 %v422, %v432
      %v435 = vadd.f32 %v423, %v433
      %436 = vrot.lane.b32.xlu0 %v195, 96
      %v437 = vpop.permute.xlu0 %436
      %438 = vrot.lane.b32.xlu0 %v196, 96
      %v439 = vpop.permute.xlu0 %438
      %440 = vrot.lane.b32.xlu0 %v201, 96
      %v441 = vpop.permute.xlu0 %440
      %442 = vrot.lane.b32.xlu0 %v202, 96
      %v443 = vpop.permute.xlu0 %442
      %444 = vrot.lane.b32.xlu0 %v207, 96
      %v445 = vpop.permute.xlu0 %444
      %446 = vrot.lane.b32.xlu0 %v208, 96
      %v447 = vpop.permute.xlu0 %446
      %s448 = scalar_lea.vmem %s1, 18
      %v449 = vld [vmem:[%s448] sm:$0x1]
      %v451 = vlaneseq
      %v452 = vshrl.u32 %v451, 7
      %v453 = vsub.s32 0, %v452
      %v454 = vrot.slane %v449, %v453
      %v456 = vmul.f32 %v441, %v454
      %v457 = vmul.f32 %v443, %v454
      %v458 = vadd.f32 %v362, %v456
      %v459 = vadd.f32 %v363, %v457
      %s460 = scalar_lea.vmem %s1, 19
      %v461 = vld [vmem:[%s460] sm:$0x1]
      %v463 = vlaneseq
      %v464 = vshrl.u32 %v463, 7
      %v465 = vsub.s32 0, %v464
      %v466 = vrot.slane %v461, %v465
      %v468 = vmul.f32 %v437, %v466
      %v469 = vmul.f32 %v439, %v466
      %v470 = vadd.f32 %v458, %v468
      %v471 = vadd.f32 %v459, %v469
      %s472 = scalar_lea.vmem %s1, 20
      %v473 = vld [vmem:[%s472] sm:$0x1]
      %v475 = vlaneseq
      %v476 = vshrl.u32 %v475, 7
      %v477 = vsub.s32 0, %v476
      %v478 = vrot.slane %v473, %v477
      %v480 = vmul.f32 %v445, %v478
      %v481 = vmul.f32 %v447, %v478
      %v482 = vadd.f32 %v470, %v480
      %v483 = vadd.f32 %v471, %v481
      %s484 = scalar_lea.vmem %s1, 21
      %v485 = vld [vmem:[%s484] sm:$0x1]
      %v487 = vlaneseq
      %v488 = vshrl.u32 %v487, 7
      %v489 = vsub.s32 0, %v488
      %v490 = vrot.slane %v485, %v489
      %v492 = vmul.f32 %v441, %v490
      %v493 = vmul.f32 %v443, %v490
      %v494 = vadd.f32 %v398, %v492
      %v495 = vadd.f32 %v399, %v493
      %s496 = scalar_lea.vmem %s1, 22
      %v497 = vld [vmem:[%s496] sm:$0x1]
      %v499 = vlaneseq
      %v500 = vshrl.u32 %v499, 7
      %v501 = vsub.s32 0, %v500
      %v502 = vrot.slane %v497, %v501
      %v504 = vmul.f32 %v437, %v502
      %v505 = vmul.f32 %v439, %v502
      %v506 = vadd.f32 %v494, %v504
      %v507 = vadd.f32 %v495, %v505
      %s508 = scalar_lea.vmem %s1, 23
      %v509 = vld [vmem:[%s508] sm:$0x1]
      %v511 = vlaneseq
      %v512 = vshrl.u32 %v511, 7
      %v513 = vsub.s32 0, %v512
      %v514 = vrot.slane %v509, %v513
      %v516 = vmul.f32 %v445, %v514
      %v517 = vmul.f32 %v447, %v514
      %v518 = vadd.f32 %v506, %v516
      %v519 = vadd.f32 %v507, %v517
      %s520 = scalar_lea.vmem %s1, 24
      %v521 = vld [vmem:[%s520] sm:$0x1]
      %v523 = vlaneseq
      %v524 = vshrl.u32 %v523, 7
      %v525 = vsub.s32 0, %v524
      %v526 = vrot.slane %v521, %v525
      %v528 = vmul.f32 %v441, %v526
      %v529 = vmul.f32 %v443, %v526
      %v530 = vadd.f32 %v434, %v528
      %v531 = vadd.f32 %v435, %v529
      %s532 = scalar_lea.vmem %s1, 25
      %v533 = vld [vmem:[%s532] sm:$0x1]
      %v535 = vlaneseq
      %v536 = vshrl.u32 %v535, 7
      %v537 = vsub.s32 0, %v536
      %v538 = vrot.slane %v533, %v537
      %v540 = vmul.f32 %v437, %v538
      %v541 = vmul.f32 %v439, %v538
      %v542 = vadd.f32 %v530, %v540
      %v543 = vadd.f32 %v531, %v541
      %s544 = scalar_lea.vmem %s1, 26
      %v545 = vld [vmem:[%s544] sm:$0x1]
      %v547 = vlaneseq
      %v548 = vshrl.u32 %v547, 7
      %v549 = vsub.s32 0, %v548
      %v550 = vrot.slane %v545, %v549
      %v552 = vmul.f32 %v445, %v550
      %v553 = vmul.f32 %v447, %v550
      %v554 = vadd.f32 %v542, %v552
      %v555 = vadd.f32 %v543, %v553
      %556 = vrot.lane.b32.xlu0 %v195, 80
      %v557 = vpop.permute.xlu0 %556
      %558 = vrot.lane.b32.xlu0 %v196, 80
      %v559 = vpop.permute.xlu0 %558
      %560 = vrot.lane.b32.xlu0 %v201, 80
      %v561 = vpop.permute.xlu0 %560
      %562 = vrot.lane.b32.xlu0 %v202, 80
      %v563 = vpop.permute.xlu0 %562
      %564 = vrot.lane.b32.xlu0 %v207, 80
      %v565 = vpop.permute.xlu0 %564
      %566 = vrot.lane.b32.xlu0 %v208, 80
      %v567 = vpop.permute.xlu0 %566
      %s568 = scalar_lea.vmem %s1, 27
      %v569 = vld [vmem:[%s568] sm:$0x1]
      %v571 = vlaneseq
      %v572 = vshrl.u32 %v571, 7
      %v573 = vsub.s32 0, %v572
      %v574 = vrot.slane %v569, %v573
      %v576 = vmul.f32 %v561, %v574
      %v577 = vmul.f32 %v563, %v574
      %v578 = vadd.f32 %v482, %v576
      %v579 = vadd.f32 %v483, %v577
      %s580 = scalar_lea.vmem %s1, 28
      %v581 = vld [vmem:[%s580] sm:$0x1]
      %v583 = vlaneseq
      %v584 = vshrl.u32 %v583, 7
      %v585 = vsub.s32 0, %v584
      %v586 = vrot.slane %v581, %v585
      %v588 = vmul.f32 %v557, %v586
      %v589 = vmul.f32 %v559, %v586
      %v590 = vadd.f32 %v578, %v588
      %v591 = vadd.f32 %v579, %v589
      %s592 = scalar_lea.vmem %s1, 29
      %v593 = vld [vmem:[%s592] sm:$0x1]
      %v595 = vlaneseq
      %v596 = vshrl.u32 %v595, 7
      %v597 = vsub.s32 0, %v596
      %v598 = vrot.slane %v593, %v597
      %v600 = vmul.f32 %v565, %v598
      %v601 = vmul.f32 %v567, %v598
      %v602 = vadd.f32 %v590, %v600
      %v603 = vadd.f32 %v591, %v601
      %s604 = scalar_lea.vmem %s1, 30
      %v605 = vld [vmem:[%s604] sm:$0x1]
      %v607 = vlaneseq
      %v608 = vshrl.u32 %v607, 7
      %v609 = vsub.s32 0, %v608
      %v610 = vrot.slane %v605, %v609
      %v612 = vmul.f32 %v561, %v610
      %v613 = vmul.f32 %v563, %v610
      %v614 = vadd.f32 %v518, %v612
      %v615 = vadd.f32 %v519, %v613
      %s616 = scalar_lea.vmem %s1, 31
      %v617 = vld [vmem:[%s616] sm:$0x1]
      %v619 = vlaneseq
      %v620 = vshrl.u32 %v619, 7
      %v621 = vsub.s32 0, %v620
      %v622 = vrot.slane %v617, %v621
      %v624 = vmul.f32 %v557, %v622
      %v625 = vmul.f32 %v559, %v622
      %v626 = vadd.f32 %v614, %v624
      %v627 = vadd.f32 %v615, %v625
      %s628 = scalar_lea.vmem %s1, 32
      %v629 = vld [vmem:[%s628] sm:$0x1]
      %v631 = vlaneseq
      %v632 = vshrl.u32 %v631, 7
      %v633 = vsub.s32 0, %v632
      %v634 = vrot.slane %v629, %v633
      %v636 = vmul.f32 %v565, %v634
      %v637 = vmul.f32 %v567, %v634
      %v638 = vadd.f32 %v626, %v636
      %v639 = vadd.f32 %v627, %v637
      %s640 = scalar_lea.vmem %s1, 33
      %v641 = vld [vmem:[%s640] sm:$0x1]
      %v643 = vlaneseq
      %v644 = vshrl.u32 %v643, 7
      %v645 = vsub.s32 0, %v644
      %v646 = vrot.slane %v641, %v645
      %v648 = vmul.f32 %v561, %v646
      %v649 = vmul.f32 %v563, %v646
      %v650 = vadd.f32 %v554, %v648
      %v651 = vadd.f32 %v555, %v649
      %s652 = scalar_lea.vmem %s1, 34
      %v653 = vld [vmem:[%s652] sm:$0x1]
      %v655 = vlaneseq
      %v656 = vshrl.u32 %v655, 7
      %v657 = vsub.s32 0, %v656
      %v658 = vrot.slane %v653, %v657
      %v660 = vmul.f32 %v557, %v658
      %v661 = vmul.f32 %v559, %v658
      %v662 = vadd.f32 %v650, %v660
      %v663 = vadd.f32 %v651, %v661
      %s664 = scalar_lea.vmem %s1, 35
      %v665 = vld [vmem:[%s664] sm:$0x1]
      %v667 = vlaneseq
      %v668 = vshrl.u32 %v667, 7
      %v669 = vsub.s32 0, %v668
      %v670 = vrot.slane %v665, %v669
      %v672 = vmul.f32 %v565, %v670
      %v673 = vmul.f32 %v567, %v670
      %v674 = vadd.f32 %v662, %v672
      %v675 = vadd.f32 %v663, %v673
      %v676 = vrot.slane %v602, 7
      %v677 = vrot.slane %v603, 7
      %vm678 = vcmp.lt.s32.totalorder %v186, 1
      %v679 = vsel %vm678, %v676, %v677
      %v680 = vsel %vm678, %v677, %v676
      %v681 = vsel %vm190, %v680, 0.0
      %v682 = vsel %vm191, %v679, 0.0
      %v683 = vrot.slane %v674, 1
      %v684 = vrot.slane %v675, 1
      %vm685 = vcmp.lt.s32.totalorder %v186, 7
      %v686 = vsel %vm685, %v683, %v684
      %v687 = vsel %vm685, %v684, %v683
      %v688 = vsel %vm192, %v686, 0.0
      %v689 = vsel %vm193, %v687, 0.0
      %v690 = vadd.f32 %v681, %v638
      %v691 = vadd.f32 %v682, %v639
      %v692 = vadd.f32 %v690, %v688
      %v693 = vadd.f32 %v691, %v689
      %v694 = vadd.f32 %v692, %v693
      %v695 = vrot.slane %v694, 4
      %v696 = vadd.f32 %v694, %v695
      %v697 = vrot.slane %v696, 2
      %v698 = vadd.f32 %v696, %v697
      %v699 = vrot.slane %v698, 1
      %v700 = vadd.f32 %v698, %v699
      %701 = vrot.lane.b32.xlu0 %v700, 1
      %v702 = vpop.permute.xlu0 %701
      %v703 = vadd.f32 %v700, %v702
      %704 = vrot.lane.b32.xlu0 %v703, 2
      %v705 = vpop.permute.xlu0 %704
      %v706 = vadd.f32 %v703, %v705
      %707 = vrot.lane.b32.xlu0 %v706, 4
      %v708 = vpop.permute.xlu0 %707
      %v709 = vadd.f32 %v706, %v708
      %710 = vrot.lane.b32.xlu0 %v709, 8
      %v711 = vpop.permute.xlu0 %710
      %v712 = vadd.f32 %v709, %v711
      %v713 = vsel %vm194, %v712, 0.0
      %714 = vrot.lane.b32.xlu0 %v713, 127
      %v715 = vpop.permute.xlu0 %714
      %v716 = vadd.f32 %v713, %v715
      %717 = vrot.lane.b32.xlu0 %v716, 126
      %v718 = vpop.permute.xlu0 %717
      %v719 = vadd.f32 %v716, %v718
      %720 = vrot.lane.b32.xlu0 %v719, 124
      %v721 = vpop.permute.xlu0 %720
      %v722 = vadd.f32 %v719, %v721
      %723 = vrot.lane.b32.xlu0 %v722, 120
      %v724 = vpop.permute.xlu0 %723
      %v725 = vadd.f32 %v722, %v724
      %v726 = vmul.f32 %v725, 0.00390625
      %v727 = vlaneseq
      %v728 = vshrl.u32 %v727, 7
      %v729 = vsub.s32 0, %v728
      %v730 = vrot.slane %v726, %v729
      %v731 = vsub.f32 %v692, %v730
      %v732 = vsub.f32 %v693, %v730
      %v733 = vmul.f32 %v731, %v731
      %v734 = vmul.f32 %v732, %v732
      %v735 = vadd.f32 %v733, %v734
      %v736 = vrot.slane %v735, 4
      %v737 = vadd.f32 %v735, %v736
      %v738 = vrot.slane %v737, 2
      %v739 = vadd.f32 %v737, %v738
      %v740 = vrot.slane %v739, 1
      %v741 = vadd.f32 %v739, %v740
      %742 = vrot.lane.b32.xlu0 %v741, 1
      %v743 = vpop.permute.xlu0 %742
      %v744 = vadd.f32 %v741, %v743
      %745 = vrot.lane.b32.xlu0 %v744, 2
      %v746 = vpop.permute.xlu0 %745
      %v747 = vadd.f32 %v744, %v746
      %748 = vrot.lane.b32.xlu0 %v747, 4
      %v749 = vpop.permute.xlu0 %748
      %v750 = vadd.f32 %v747, %v749
      %751 = vrot.lane.b32.xlu0 %v750, 8
      %v752 = vpop.permute.xlu0 %751
      %v753 = vadd.f32 %v750, %v752
      %v754 = vsel %vm194, %v753, 0.0
      %755 = vrot.lane.b32.xlu0 %v754, 127
      %v756 = vpop.permute.xlu0 %755
      %v757 = vadd.f32 %v754, %v756
      %758 = vrot.lane.b32.xlu0 %v757, 126
      %v759 = vpop.permute.xlu0 %758
      %v760 = vadd.f32 %v757, %v759
      %761 = vrot.lane.b32.xlu0 %v760, 124
      %v762 = vpop.permute.xlu0 %761
      %v763 = vadd.f32 %v760, %v762
      %764 = vrot.lane.b32.xlu0 %v763, 120
      %v765 = vpop.permute.xlu0 %764
      %v766 = vadd.f32 %v763, %v765
      %v767 = vmul.f32 %v766, 0.00390625
      %v768 = vadd.f32 %v767, 1e-05
      %v769 = vrsqrt.pop %v768
      %v770 = vlaneseq
      %v771 = vshrl.u32 %v770, 7
      %v772 = vsub.s32 0, %v771
      %v773 = vrot.slane %v769, %v772
      %v774 = vmul.f32 %v731, %v773
      %v775 = vmul.f32 %v732, %v773
      %v776 = vmax.f32 %v774, 0.0
      %v777 = vmax.f32 %v775, 0.0
      %778 = vrot.lane.b32.xlu0 %v776, 1
      %v779 = vpop.permute.xlu0 %778
      %780 = vrot.lane.b32.xlu0 %v777, 1
      %v781 = vpop.permute.xlu0 %780
      %v782 = vsel %vm188, %v779, 0.0
      %v783 = vsel %vm188, %v781, 0.0
      %784 = vrot.lane.b32.xlu0 %v776, 127
      %v785 = vpop.permute.xlu0 %784
      %786 = vrot.lane.b32.xlu0 %v777, 127
      %v787 = vpop.permute.xlu0 %786
      %v788 = vsel %vm189, %v785, 0.0
      %v789 = vsel %vm189, %v787, 0.0
      %v790 = vld [vmem:[%s2] sm:$0x1]
      %v792 = vlaneseq
      %v793 = vshrl.u32 %v792, 7
      %v794 = vsub.s32 0, %v793
      %v795 = vrot.slane %v790, %v794
      %v797 = vmul.f32 %v782, %v795
      %v798 = vmul.f32 %v783, %v795
      %v799 = vadd.f32 %v797, 0.0
      %v800 = vadd.f32 %v798, 0.0
      %s801 = scalar_lea.vmem %s2, 1
      %v802 = vld [vmem:[%s801] sm:$0x1]
      %v804 = vlaneseq
      %v805 = vshrl.u32 %v804, 7
      %v806 = vsub.s32 0, %v805
      %v807 = vrot.slane %v802, %v806
      %v809 = vmul.f32 %v776, %v807
      %v810 = vmul.f32 %v777, %v807
      %v811 = vadd.f32 %v799, %v809
      %v812 = vadd.f32 %v800, %v810
      %s813 = scalar_lea.vmem %s2, 2
      %v814 = vld [vmem:[%s813] sm:$0x1]
      %v816 = vlaneseq
      %v817 = vshrl.u32 %v816, 7
      %v818 = vsub.s32 0, %v817
      %v819 = vrot.slane %v814, %v818
      %v821 = vmul.f32 %v788, %v819
      %v822 = vmul.f32 %v789, %v819
      %v823 = vadd.f32 %v811, %v821
      %v824 = vadd.f32 %v812, %v822
      %s825 = scalar_lea.vmem %s2, 3
      %v826 = vld [vmem:[%s825] sm:$0x1]
      %v828 = vlaneseq
      %v829 = vshrl.u32 %v828, 7
      %v830 = vsub.s32 0, %v829
      %v831 = vrot.slane %v826, %v830
      %v833 = vmul.f32 %v782, %v831
      %v834 = vmul.f32 %v783, %v831
      %v835 = vadd.f32 %v833, 0.0
      %v836 = vadd.f32 %v834, 0.0
      %s837 = scalar_lea.vmem %s2, 4
      %v838 = vld [vmem:[%s837] sm:$0x1]
      %v840 = vlaneseq
      %v841 = vshrl.u32 %v840, 7
      %v842 = vsub.s32 0, %v841
      %v843 = vrot.slane %v838, %v842
      %v845 = vmul.f32 %v776, %v843
      %v846 = vmul.f32 %v777, %v843
      %v847 = vadd.f32 %v835, %v845
      %v848 = vadd.f32 %v836, %v846
      %s849 = scalar_lea.vmem %s2, 5
      %v850 = vld [vmem:[%s849] sm:$0x1]
      %v852 = vlaneseq
      %v853 = vshrl.u32 %v852, 7
      %v854 = vsub.s32 0, %v853
      %v855 = vrot.slane %v850, %v854
      %v857 = vmul.f32 %v788, %v855
      %v858 = vmul.f32 %v789, %v855
      %v859 = vadd.f32 %v847, %v857
      %v860 = vadd.f32 %v848, %v858
      %s861 = scalar_lea.vmem %s2, 6
      %v862 = vld [vmem:[%s861] sm:$0x1]
      %v864 = vlaneseq
      %v865 = vshrl.u32 %v864, 7
      %v866 = vsub.s32 0, %v865
      %v867 = vrot.slane %v862, %v866
      %v869 = vmul.f32 %v782, %v867
      %v870 = vmul.f32 %v783, %v867
      %v871 = vadd.f32 %v869, 0.0
      %v872 = vadd.f32 %v870, 0.0
      %s873 = scalar_lea.vmem %s2, 7
      %v874 = vld [vmem:[%s873] sm:$0x1]
      %v876 = vlaneseq
      %v877 = vshrl.u32 %v876, 7
      %v878 = vsub.s32 0, %v877
      %v879 = vrot.slane %v874, %v878
      %v881 = vmul.f32 %v776, %v879
      %v882 = vmul.f32 %v777, %v879
      %v883 = vadd.f32 %v871, %v881
      %v884 = vadd.f32 %v872, %v882
      %s885 = scalar_lea.vmem %s2, 8
      %v886 = vld [vmem:[%s885] sm:$0x1]
      %v888 = vlaneseq
      %v889 = vshrl.u32 %v888, 7
      %v890 = vsub.s32 0, %v889
      %v891 = vrot.slane %v886, %v890
      %v893 = vmul.f32 %v788, %v891
      %v894 = vmul.f32 %v789, %v891
      %v895 = vadd.f32 %v883, %v893
      %v896 = vadd.f32 %v884, %v894
      %897 = vrot.lane.b32.xlu0 %v776, 112
      %v898 = vpop.permute.xlu0 %897
      %899 = vrot.lane.b32.xlu0 %v777, 112
      %v900 = vpop.permute.xlu0 %899
      %901 = vrot.lane.b32.xlu0 %v782, 112
      %v902 = vpop.permute.xlu0 %901
      %903 = vrot.lane.b32.xlu0 %v783, 112
      %v904 = vpop.permute.xlu0 %903
      %905 = vrot.lane.b32.xlu0 %v788, 112
      %v906 = vpop.permute.xlu0 %905
      %907 = vrot.lane.b32.xlu0 %v789, 112
      %v908 = vpop.permute.xlu0 %907
      %s909 = scalar_lea.vmem %s2, 9
      %v910 = vld [vmem:[%s909] sm:$0x1]
      %v912 = vlaneseq
      %v913 = vshrl.u32 %v912, 7
      %v914 = vsub.s32 0, %v913
      %v915 = vrot.slane %v910, %v914
      %v917 = vmul.f32 %v902, %v915
      %v918 = vmul.f32 %v904, %v915
      %v919 = vadd.f32 %v823, %v917
      %v920 = vadd.f32 %v824, %v918
      %s921 = scalar_lea.vmem %s2, 10
      %v922 = vld [vmem:[%s921] sm:$0x1]
      %v924 = vlaneseq
      %v925 = vshrl.u32 %v924, 7
      %v926 = vsub.s32 0, %v925
      %v927 = vrot.slane %v922, %v926
      %v929 = vmul.f32 %v898, %v927
      %v930 = vmul.f32 %v900, %v927
      %v931 = vadd.f32 %v919, %v929
      %v932 = vadd.f32 %v920, %v930
      %s933 = scalar_lea.vmem %s2, 11
      %v934 = vld [vmem:[%s933] sm:$0x1]
      %v936 = vlaneseq
      %v937 = vshrl.u32 %v936, 7
      %v938 = vsub.s32 0, %v937
      %v939 = vrot.slane %v934, %v938
      %v941 = vmul.f32 %v906, %v939
      %v942 = vmul.f32 %v908, %v939
      %v943 = vadd.f32 %v931, %v941
      %v944 = vadd.f32 %v932, %v942
      %s945 = scalar_lea.vmem %s2, 12
      %v946 = vld [vmem:[%s945] sm:$0x1]
      %v948 = vlaneseq
      %v949 = vshrl.u32 %v948, 7
      %v950 = vsub.s32 0, %v949
      %v951 = vrot.slane %v946, %v950
      %v953 = vmul.f32 %v902, %v951
      %v954 = vmul.f32 %v904, %v951
      %v955 = vadd.f32 %v859, %v953
      %v956 = vadd.f32 %v860, %v954
      %s957 = scalar_lea.vmem %s2, 13
      %v958 = vld [vmem:[%s957] sm:$0x1]
      %v960 = vlaneseq
      %v961 = vshrl.u32 %v960, 7
      %v962 = vsub.s32 0, %v961
      %v963 = vrot.slane %v958, %v962
      %v965 = vmul.f32 %v898, %v963
      %v966 = vmul.f32 %v900, %v963
      %v967 = vadd.f32 %v955, %v965
      %v968 = vadd.f32 %v956, %v966
      %s969 = scalar_lea.vmem %s2, 14
      %v970 = vld [vmem:[%s969] sm:$0x1]
      %v972 = vlaneseq
      %v973 = vshrl.u32 %v972, 7
      %v974 = vsub.s32 0, %v973
      %v975 = vrot.slane %v970, %v974
      %v977 = vmul.f32 %v906, %v975
      %v978 = vmul.f32 %v908, %v975
      %v979 = vadd.f32 %v967, %v977
      %v980 = vadd.f32 %v968, %v978
      %s981 = scalar_lea.vmem %s2, 15
      %v982 = vld [vmem:[%s981] sm:$0x1]
      %v984 = vlaneseq
      %v985 = vshrl.u32 %v984, 7
      %v986 = vsub.s32 0, %v985
      %v987 = vrot.slane %v982, %v986
      %v989 = vmul.f32 %v902, %v987
      %v990 = vmul.f32 %v904, %v987
      %v991 = vadd.f32 %v895, %v989
      %v992 = vadd.f32 %v896, %v990
      %s993 = scalar_lea.vmem %s2, 16
      %v994 = vld [vmem:[%s993] sm:$0x1]
      %v996 = vlaneseq
      %v997 = vshrl.u32 %v996, 7
      %v998 = vsub.s32 0, %v997
      %v999 = vrot.slane %v994, %v998
      %v1001 = vmul.f32 %v898, %v999
      %v1002 = vmul.f32 %v900, %v999
      %v1003 = vadd.f32 %v991, %v1001
      %v1004 = vadd.f32 %v992, %v1002
      %s1005 = scalar_lea.vmem %s2, 17
      %v1006 = vld [vmem:[%s1005] sm:$0x1]
      %v1008 = vlaneseq
      %v1009 = vshrl.u32 %v1008, 7
      %v1010 = vsub.s32 0, %v1009
      %v1011 = vrot.slane %v1006, %v1010
      %v1013 = vmul.f32 %v906, %v1011
      %v1014 = vmul.f32 %v908, %v1011
      %v1015 = vadd.f32 %v1003, %v1013
      %v1016 = vadd.f32 %v1004, %v1014
      %1017 = vrot.lane.b32.xlu0 %v776, 96
      %v1018 = vpop.permute.xlu0 %1017
      %1019 = vrot.lane.b32.xlu0 %v777, 96
      %v1020 = vpop.permute.xlu0 %1019
      %1021 = vrot.lane.b32.xlu0 %v782, 96
      %v1022 = vpop.permute.xlu0 %1021
      %1023 = vrot.lane.b32.xlu0 %v783, 96
      %v1024 = vpop.permute.xlu0 %1023
      %1025 = vrot.lane.b32.xlu0 %v788, 96
      %v1026 = vpop.permute.xlu0 %1025
      %1027 = vrot.lane.b32.xlu0 %v789, 96
      %v1028 = vpop.permute.xlu0 %1027
      %s1029 = scalar_lea.vmem %s2, 18
      %v1030 = vld [vmem:[%s1029] sm:$0x1]
      %v1032 = vlaneseq
      %v1033 = vshrl.u32 %v1032, 7
      %v1034 = vsub.s32 0, %v1033
      %v1035 = vrot.slane %v1030, %v1034
      %v1037 = vmul.f32 %v1022, %v1035
      %v1038 = vmul.f32 %v1024, %v1035
      %v1039 = vadd.f32 %v943, %v1037
      %v1040 = vadd.f32 %v944, %v1038
      %s1041 = scalar_lea.vmem %s2, 19
      %v1042 = vld [vmem:[%s1041] sm:$0x1]
      %v1044 = vlaneseq
      %v1045 = vshrl.u32 %v1044, 7
      %v1046 = vsub.s32 0, %v1045
      %v1047 = vrot.slane %v1042, %v1046
      %v1049 = vmul.f32 %v1018, %v1047
      %v1050 = vmul.f32 %v1020, %v1047
      %v1051 = vadd.f32 %v1039, %v1049
      %v1052 = vadd.f32 %v1040, %v1050
      %s1053 = scalar_lea.vmem %s2, 20
      %v1054 = vld [vmem:[%s1053] sm:$0x1]
      %v1056 = vlaneseq
      %v1057 = vshrl.u32 %v1056, 7
      %v1058 = vsub.s32 0, %v1057
      %v1059 = vrot.slane %v1054, %v1058
      %v1061 = vmul.f32 %v1026, %v1059
      %v1062 = vmul.f32 %v1028, %v1059
      %v1063 = vadd.f32 %v1051, %v1061
      %v1064 = vadd.f32 %v1052, %v1062
      %s1065 = scalar_lea.vmem %s2, 21
      %v1066 = vld [vmem:[%s1065] sm:$0x1]
      %v1068 = vlaneseq
      %v1069 = vshrl.u32 %v1068, 7
      %v1070 = vsub.s32 0, %v1069
      %v1071 = vrot.slane %v1066, %v1070
      %v1073 = vmul.f32 %v1022, %v1071
      %v1074 = vmul.f32 %v1024, %v1071
      %v1075 = vadd.f32 %v979, %v1073
      %v1076 = vadd.f32 %v980, %v1074
      %s1077 = scalar_lea.vmem %s2, 22
      %v1078 = vld [vmem:[%s1077] sm:$0x1]
      %v1080 = vlaneseq
      %v1081 = vshrl.u32 %v1080, 7
      %v1082 = vsub.s32 0, %v1081
      %v1083 = vrot.slane %v1078, %v1082
      %v1085 = vmul.f32 %v1018, %v1083
      %v1086 = vmul.f32 %v1020, %v1083
      %v1087 = vadd.f32 %v1075, %v1085
      %v1088 = vadd.f32 %v1076, %v1086
      %s1089 = scalar_lea.vmem %s2, 23
      %v1090 = vld [vmem:[%s1089] sm:$0x1]
      %v1092 = vlaneseq
      %v1093 = vshrl.u32 %v1092, 7
      %v1094 = vsub.s32 0, %v1093
      %v1095 = vrot.slane %v1090, %v1094
      %v1097 = vmul.f32 %v1026, %v1095
      %v1098 = vmul.f32 %v1028, %v1095
      %v1099 = vadd.f32 %v1087, %v1097
      %v1100 = vadd.f32 %v1088, %v1098
      %s1101 = scalar_lea.vmem %s2, 24
      %v1102 = vld [vmem:[%s1101] sm:$0x1]
      %v1104 = vlaneseq
      %v1105 = vshrl.u32 %v1104, 7
      %v1106 = vsub.s32 0, %v1105
      %v1107 = vrot.slane %v1102, %v1106
      %v1109 = vmul.f32 %v1022, %v1107
      %v1110 = vmul.f32 %v1024, %v1107
      %v1111 = vadd.f32 %v1015, %v1109
      %v1112 = vadd.f32 %v1016, %v1110
      %s1113 = scalar_lea.vmem %s2, 25
      %v1114 = vld [vmem:[%s1113] sm:$0x1]
      %v1116 = vlaneseq
      %v1117 = vshrl.u32 %v1116, 7
      %v1118 = vsub.s32 0, %v1117
      %v1119 = vrot.slane %v1114, %v1118
      %v1121 = vmul.f32 %v1018, %v1119
      %v1122 = vmul.f32 %v1020, %v1119
      %v1123 = vadd.f32 %v1111, %v1121
      %v1124 = vadd.f32 %v1112, %v1122
      %s1125 = scalar_lea.vmem %s2, 26
      %v1126 = vld [vmem:[%s1125] sm:$0x1]
      %v1128 = vlaneseq
      %v1129 = vshrl.u32 %v1128, 7
      %v1130 = vsub.s32 0, %v1129
      %v1131 = vrot.slane %v1126, %v1130
      %v1133 = vmul.f32 %v1026, %v1131
      %v1134 = vmul.f32 %v1028, %v1131
      %v1135 = vadd.f32 %v1123, %v1133
      %v1136 = vadd.f32 %v1124, %v1134
      %1137 = vrot.lane.b32.xlu0 %v776, 80
      %v1138 = vpop.permute.xlu0 %1137
      %1139 = vrot.lane.b32.xlu0 %v777, 80
      %v1140 = vpop.permute.xlu0 %1139
      %1141 = vrot.lane.b32.xlu0 %v782, 80
      %v1142 = vpop.permute.xlu0 %1141
      %1143 = vrot.lane.b32.xlu0 %v783, 80
      %v1144 = vpop.permute.xlu0 %1143
      %1145 = vrot.lane.b32.xlu0 %v788, 80
      %v1146 = vpop.permute.xlu0 %1145
      %1147 = vrot.lane.b32.xlu0 %v789, 80
      %v1148 = vpop.permute.xlu0 %1147
      %s1149 = scalar_lea.vmem %s2, 27
      %v1150 = vld [vmem:[%s1149] sm:$0x1]
      %v1152 = vlaneseq
      %v1153 = vshrl.u32 %v1152, 7
      %v1154 = vsub.s32 0, %v1153
      %v1155 = vrot.slane %v1150, %v1154
      %v1157 = vmul.f32 %v1142, %v1155
      %v1158 = vmul.f32 %v1144, %v1155
      %v1159 = vadd.f32 %v1063, %v1157
      %v1160 = vadd.f32 %v1064, %v1158
      %s1161 = scalar_lea.vmem %s2, 28
      %v1162 = vld [vmem:[%s1161] sm:$0x1]
      %v1164 = vlaneseq
      %v1165 = vshrl.u32 %v1164, 7
      %v1166 = vsub.s32 0, %v1165
      %v1167 = vrot.slane %v1162, %v1166
      %v1169 = vmul.f32 %v1138, %v1167
      %v1170 = vmul.f32 %v1140, %v1167
      %v1171 = vadd.f32 %v1159, %v1169
      %v1172 = vadd.f32 %v1160, %v1170
      %s1173 = scalar_lea.vmem %s2, 29
      %v1174 = vld [vmem:[%s1173] sm:$0x1]
      %v1176 = vlaneseq
      %v1177 = vshrl.u32 %v1176, 7
      %v1178 = vsub.s32 0, %v1177
      %v1179 = vrot.slane %v1174, %v1178
      %v1181 = vmul.f32 %v1146, %v1179
      %v1182 = vmul.f32 %v1148, %v1179
      %v1183 = vadd.f32 %v1171, %v1181
      %v1184 = vadd.f32 %v1172, %v1182
      %s1185 = scalar_lea.vmem %s2, 30
      %v1186 = vld [vmem:[%s1185] sm:$0x1]
      %v1188 = vlaneseq
      %v1189 = vshrl.u32 %v1188, 7
      %v1190 = vsub.s32 0, %v1189
      %v1191 = vrot.slane %v1186, %v1190
      %v1193 = vmul.f32 %v1142, %v1191
      %v1194 = vmul.f32 %v1144, %v1191
      %v1195 = vadd.f32 %v1099, %v1193
      %v1196 = vadd.f32 %v1100, %v1194
      %s1197 = scalar_lea.vmem %s2, 31
      %v1198 = vld [vmem:[%s1197] sm:$0x1]
      %v1200 = vlaneseq
      %v1201 = vshrl.u32 %v1200, 7
      %v1202 = vsub.s32 0, %v1201
      %v1203 = vrot.slane %v1198, %v1202
      %v1205 = vmul.f32 %v1138, %v1203
      %v1206 = vmul.f32 %v1140, %v1203
      %v1207 = vadd.f32 %v1195, %v1205
      %v1208 = vadd.f32 %v1196, %v1206
      %s1209 = scalar_lea.vmem %s2, 32
      %v1210 = vld [vmem:[%s1209] sm:$0x1]
      %v1212 = vlaneseq
      %v1213 = vshrl.u32 %v1212, 7
      %v1214 = vsub.s32 0, %v1213
      %v1215 = vrot.slane %v1210, %v1214
      %v1217 = vmul.f32 %v1146, %v1215
      %v1218 = vmul.f32 %v1148, %v1215
      %v1219 = vadd.f32 %v1207, %v1217
      %v1220 = vadd.f32 %v1208, %v1218
      %s1221 = scalar_lea.vmem %s2, 33
      %v1222 = vld [vmem:[%s1221] sm:$0x1]
      %v1224 = vlaneseq
      %v1225 = vshrl.u32 %v1224, 7
      %v1226 = vsub.s32 0, %v1225
      %v1227 = vrot.slane %v1222, %v1226
      %v1229 = vmul.f32 %v1142, %v1227
      %v1230 = vmul.f32 %v1144, %v1227
      %v1231 = vadd.f32 %v1135, %v1229
      %v1232 = vadd.f32 %v1136, %v1230
      %s1233 = scalar_lea.vmem %s2, 34
      %v1234 = vld [vmem:[%s1233] sm:$0x1]
      %v1236 = vlaneseq
      %v1237 = vshrl.u32 %v1236, 7
      %v1238 = vsub.s32 0, %v1237
      %v1239 = vrot.slane %v1234, %v1238
      %v1241 = vmul.f32 %v1138, %v1239
      %v1242 = vmul.f32 %v1140, %v1239
      %v1243 = vadd.f32 %v1231, %v1241
      %v1244 = vadd.f32 %v1232, %v1242
      %s1245 = scalar_lea.vmem %s2, 35
      %v1246 = vld [vmem:[%s1245] sm:$0x1]
      %v1248 = vlaneseq
      %v1249 = vshrl.u32 %v1248, 7
      %v1250 = vsub.s32 0, %v1249
      %v1251 = vrot.slane %v1246, %v1250
      %v1253 = vmul.f32 %v1146, %v1251
      %v1254 = vmul.f32 %v1148, %v1251
      %v1255 = vadd.f32 %v1243, %v1253
      %v1256 = vadd.f32 %v1244, %v1254
      %1257 = vrot.lane.b32.xlu0 %v776, 64
      %v1258 = vpop.permute.xlu0 %1257
      %1259 = vrot.lane.b32.xlu0 %v777, 64
      %v1260 = vpop.permute.xlu0 %1259
      %1261 = vrot.lane.b32.xlu0 %v782, 64
      %v1262 = vpop.permute.xlu0 %1261
      %1263 = vrot.lane.b32.xlu0 %v783, 64
      %v1264 = vpop.permute.xlu0 %1263
      %1265 = vrot.lane.b32.xlu0 %v788, 64
      %v1266 = vpop.permute.xlu0 %1265
      %1267 = vrot.lane.b32.xlu0 %v789, 64
      %v1268 = vpop.permute.xlu0 %1267
      %s1269 = scalar_lea.vmem %s2, 36
      %v1270 = vld [vmem:[%s1269] sm:$0x1]
      %v1272 = vlaneseq
      %v1273 = vshrl.u32 %v1272, 7
      %v1274 = vsub.s32 0, %v1273
      %v1275 = vrot.slane %v1270, %v1274
      %v1277 = vmul.f32 %v1262, %v1275
      %v1278 = vmul.f32 %v1264, %v1275
      %v1279 = vadd.f32 %v1183, %v1277
      %v1280 = vadd.f32 %v1184, %v1278
      %s1281 = scalar_lea.vmem %s2, 37
      %v1282 = vld [vmem:[%s1281] sm:$0x1]
      %v1284 = vlaneseq
      %v1285 = vshrl.u32 %v1284, 7
      %v1286 = vsub.s32 0, %v1285
      %v1287 = vrot.slane %v1282, %v1286
      %v1289 = vmul.f32 %v1258, %v1287
      %v1290 = vmul.f32 %v1260, %v1287
      %v1291 = vadd.f32 %v1279, %v1289
      %v1292 = vadd.f32 %v1280, %v1290
      %s1293 = scalar_lea.vmem %s2, 38
      %v1294 = vld [vmem:[%s1293] sm:$0x1]
      %v1296 = vlaneseq
      %v1297 = vshrl.u32 %v1296, 7
      %v1298 = vsub.s32 0, %v1297
      %v1299 = vrot.slane %v1294, %v1298
      %v1301 = vmul.f32 %v1266, %v1299
      %v1302 = vmul.f32 %v1268, %v1299
      %v1303 = vadd.f32 %v1291, %v1301
      %v1304 = vadd.f32 %v1292, %v1302
      %s1305 = scalar_lea.vmem %s2, 39
      %v1306 = vld [vmem:[%s1305] sm:$0x1]
      %v1308 = vlaneseq
      %v1309 = vshrl.u32 %v1308, 7
      %v1310 = vsub.s32 0, %v1309
      %v1311 = vrot.slane %v1306, %v1310
      %v1313 = vmul.f32 %v1262, %v1311
      %v1314 = vmul.f32 %v1264, %v1311
      %v1315 = vadd.f32 %v1219, %v1313
      %v1316 = vadd.f32 %v1220, %v1314
      %s1317 = scalar_lea.vmem %s2, 40
      %v1318 = vld [vmem:[%s1317] sm:$0x1]
      %v1320 = vlaneseq
      %v1321 = vshrl.u32 %v1320, 7
      %v1322 = vsub.s32 0, %v1321
      %v1323 = vrot.slane %v1318, %v1322
      %v1325 = vmul.f32 %v1258, %v1323
      %v1326 = vmul.f32 %v1260, %v1323
      %v1327 = vadd.f32 %v1315, %v1325
      %v1328 = vadd.f32 %v1316, %v1326
      %s1329 = scalar_lea.vmem %s2, 41
      %v1330 = vld [vmem:[%s1329] sm:$0x1]
      %v1332 = vlaneseq
      %v1333 = vshrl.u32 %v1332, 7
      %v1334 = vsub.s32 0, %v1333
      %v1335 = vrot.slane %v1330, %v1334
      %v1337 = vmul.f32 %v1266, %v1335
      %v1338 = vmul.f32 %v1268, %v1335
      %v1339 = vadd.f32 %v1327, %v1337
      %v1340 = vadd.f32 %v1328, %v1338
      %s1341 = scalar_lea.vmem %s2, 42
      %v1342 = vld [vmem:[%s1341] sm:$0x1]
      %v1344 = vlaneseq
      %v1345 = vshrl.u32 %v1344, 7
      %v1346 = vsub.s32 0, %v1345
      %v1347 = vrot.slane %v1342, %v1346
      %v1349 = vmul.f32 %v1262, %v1347
      %v1350 = vmul.f32 %v1264, %v1347
      %v1351 = vadd.f32 %v1255, %v1349
      %v1352 = vadd.f32 %v1256, %v1350
      %s1353 = scalar_lea.vmem %s2, 43
      %v1354 = vld [vmem:[%s1353] sm:$0x1]
      %v1356 = vlaneseq
      %v1357 = vshrl.u32 %v1356, 7
      %v1358 = vsub.s32 0, %v1357
      %v1359 = vrot.slane %v1354, %v1358
      %v1361 = vmul.f32 %v1258, %v1359
      %v1362 = vmul.f32 %v1260, %v1359
      %v1363 = vadd.f32 %v1351, %v1361
      %v1364 = vadd.f32 %v1352, %v1362
      %s1365 = scalar_lea.vmem %s2, 44
      %v1366 = vld [vmem:[%s1365] sm:$0x1]
      %v1368 = vlaneseq
      %v1369 = vshrl.u32 %v1368, 7
      %v1370 = vsub.s32 0, %v1369
      %v1371 = vrot.slane %v1366, %v1370
      %v1373 = vmul.f32 %v1266, %v1371
      %v1374 = vmul.f32 %v1268, %v1371
      %v1375 = vadd.f32 %v1363, %v1373
      %v1376 = vadd.f32 %v1364, %v1374
      %1377 = vrot.lane.b32.xlu0 %v776, 48
      %v1378 = vpop.permute.xlu0 %1377
      %1379 = vrot.lane.b32.xlu0 %v777, 48
      %v1380 = vpop.permute.xlu0 %1379
      %1381 = vrot.lane.b32.xlu0 %v782, 48
      %v1382 = vpop.permute.xlu0 %1381
      %1383 = vrot.lane.b32.xlu0 %v783, 48
      %v1384 = vpop.permute.xlu0 %1383
      %1385 = vrot.lane.b32.xlu0 %v788, 48
      %v1386 = vpop.permute.xlu0 %1385
      %1387 = vrot.lane.b32.xlu0 %v789, 48
      %v1388 = vpop.permute.xlu0 %1387
      %s1389 = scalar_lea.vmem %s2, 45
      %v1390 = vld [vmem:[%s1389] sm:$0x1]
      %v1392 = vlaneseq
      %v1393 = vshrl.u32 %v1392, 7
      %v1394 = vsub.s32 0, %v1393
      %v1395 = vrot.slane %v1390, %v1394
      %v1397 = vmul.f32 %v1382, %v1395
      %v1398 = vmul.f32 %v1384, %v1395
      %v1399 = vadd.f32 %v1303, %v1397
      %v1400 = vadd.f32 %v1304, %v1398
      %s1401 = scalar_lea.vmem %s2, 46
      %v1402 = vld [vmem:[%s1401] sm:$0x1]
      %v1404 = vlaneseq
      %v1405 = vshrl.u32 %v1404, 7
      %v1406 = vsub.s32 0, %v1405
      %v1407 = vrot.slane %v1402, %v1406
      %v1409 = vmul.f32 %v1378, %v1407
      %v1410 = vmul.f32 %v1380, %v1407
      %v1411 = vadd.f32 %v1399, %v1409
      %v1412 = vadd.f32 %v1400, %v1410
      %s1413 = scalar_lea.vmem %s2, 47
      %v1414 = vld [vmem:[%s1413] sm:$0x1]
      %v1416 = vlaneseq
      %v1417 = vshrl.u32 %v1416, 7
      %v1418 = vsub.s32 0, %v1417
      %v1419 = vrot.slane %v1414, %v1418
      %v1421 = vmul.f32 %v1386, %v1419
      %v1422 = vmul.f32 %v1388, %v1419
      %v1423 = vadd.f32 %v1411, %v1421
      %v1424 = vadd.f32 %v1412, %v1422
      %s1425 = scalar_lea.vmem %s2, 48
      %v1426 = vld [vmem:[%s1425] sm:$0x1]
      %v1428 = vlaneseq
      %v1429 = vshrl.u32 %v1428, 7
      %v1430 = vsub.s32 0, %v1429
      %v1431 = vrot.slane %v1426, %v1430
      %v1433 = vmul.f32 %v1382, %v1431
      %v1434 = vmul.f32 %v1384, %v1431
      %v1435 = vadd.f32 %v1339, %v1433
      %v1436 = vadd.f32 %v1340, %v1434
      %s1437 = scalar_lea.vmem %s2, 49
      %v1438 = vld [vmem:[%s1437] sm:$0x1]
      %v1440 = vlaneseq
      %v1441 = vshrl.u32 %v1440, 7
      %v1442 = vsub.s32 0, %v1441
      %v1443 = vrot.slane %v1438, %v1442
      %v1445 = vmul.f32 %v1378, %v1443
      %v1446 = vmul.f32 %v1380, %v1443
      %v1447 = vadd.f32 %v1435, %v1445
      %v1448 = vadd.f32 %v1436, %v1446
      %s1449 = scalar_lea.vmem %s2, 50
      %v1450 = vld [vmem:[%s1449] sm:$0x1]
      %v1452 = vlaneseq
      %v1453 = vshrl.u32 %v1452, 7
      %v1454 = vsub.s32 0, %v1453
      %v1455 = vrot.slane %v1450, %v1454
      %v1457 = vmul.f32 %v1386, %v1455
      %v1458 = vmul.f32 %v1388, %v1455
      %v1459 = vadd.f32 %v1447, %v1457
      %v1460 = vadd.f32 %v1448, %v1458
      %s1461 = scalar_lea.vmem %s2, 51
      %v1462 = vld [vmem:[%s1461] sm:$0x1]
      %v1464 = vlaneseq
      %v1465 = vshrl.u32 %v1464, 7
      %v1466 = vsub.s32 0, %v1465
      %v1467 = vrot.slane %v1462, %v1466
      %v1469 = vmul.f32 %v1382, %v1467
      %v1470 = vmul.f32 %v1384, %v1467
      %v1471 = vadd.f32 %v1375, %v1469
      %v1472 = vadd.f32 %v1376, %v1470
      %s1473 = scalar_lea.vmem %s2, 52
      %v1474 = vld [vmem:[%s1473] sm:$0x1]
      %v1476 = vlaneseq
      %v1477 = vshrl.u32 %v1476, 7
      %v1478 = vsub.s32 0, %v1477
      %v1479 = vrot.slane %v1474, %v1478
      %v1481 = vmul.f32 %v1378, %v1479
      %v1482 = vmul.f32 %v1380, %v1479
      %v1483 = vadd.f32 %v1471, %v1481
      %v1484 = vadd.f32 %v1472, %v1482
      %s1485 = scalar_lea.vmem %s2, 53
      %v1486 = vld [vmem:[%s1485] sm:$0x1]
      %v1488 = vlaneseq
      %v1489 = vshrl.u32 %v1488, 7
      %v1490 = vsub.s32 0, %v1489
      %v1491 = vrot.slane %v1486, %v1490
      %v1493 = vmul.f32 %v1386, %v1491
      %v1494 = vmul.f32 %v1388, %v1491
      %v1495 = vadd.f32 %v1483, %v1493
      %v1496 = vadd.f32 %v1484, %v1494
      %1497 = vrot.lane.b32.xlu0 %v776, 32
      %v1498 = vpop.permute.xlu0 %1497
      %1499 = vrot.lane.b32.xlu0 %v777, 32
      %v1500 = vpop.permute.xlu0 %1499
      %1501 = vrot.lane.b32.xlu0 %v782, 32
      %v1502 = vpop.permute.xlu0 %1501
      %1503 = vrot.lane.b32.xlu0 %v783, 32
      %v1504 = vpop.permute.xlu0 %1503
      %1505 = vrot.lane.b32.xlu0 %v788, 32
      %v1506 = vpop.permute.xlu0 %1505
      %1507 = vrot.lane.b32.xlu0 %v789, 32
      %v1508 = vpop.permute.xlu0 %1507
      %s1509 = scalar_lea.vmem %s2, 54
      %v1510 = vld [vmem:[%s1509] sm:$0x1]
      %v1512 = vlaneseq
      %v1513 = vshrl.u32 %v1512, 7
      %v1514 = vsub.s32 0, %v1513
      %v1515 = vrot.slane %v1510, %v1514
      %v1517 = vmul.f32 %v1502, %v1515
      %v1518 = vmul.f32 %v1504, %v1515
      %v1519 = vadd.f32 %v1423, %v1517
      %v1520 = vadd.f32 %v1424, %v1518
      %s1521 = scalar_lea.vmem %s2, 55
      %v1522 = vld [vmem:[%s1521] sm:$0x1]
      %v1524 = vlaneseq
      %v1525 = vshrl.u32 %v1524, 7
      %v1526 = vsub.s32 0, %v1525
      %v1527 = vrot.slane %v1522, %v1526
      %v1529 = vmul.f32 %v1498, %v1527
      %v1530 = vmul.f32 %v1500, %v1527
      %v1531 = vadd.f32 %v1519, %v1529
      %v1532 = vadd.f32 %v1520, %v1530
      %s1533 = scalar_lea.vmem %s2, 56
      %v1534 = vld [vmem:[%s1533] sm:$0x1]
      %v1536 = vlaneseq
      %v1537 = vshrl.u32 %v1536, 7
      %v1538 = vsub.s32 0, %v1537
      %v1539 = vrot.slane %v1534, %v1538
      %v1541 = vmul.f32 %v1506, %v1539
      %v1542 = vmul.f32 %v1508, %v1539
      %v1543 = vadd.f32 %v1531, %v1541
      %v1544 = vadd.f32 %v1532, %v1542
      %s1545 = scalar_lea.vmem %s2, 57
      %v1546 = vld [vmem:[%s1545] sm:$0x1]
      %v1548 = vlaneseq
      %v1549 = vshrl.u32 %v1548, 7
      %v1550 = vsub.s32 0, %v1549
      %v1551 = vrot.slane %v1546, %v1550
      %v1553 = vmul.f32 %v1502, %v1551
      %v1554 = vmul.f32 %v1504, %v1551
      %v1555 = vadd.f32 %v1459, %v1553
      %v1556 = vadd.f32 %v1460, %v1554
      %s1557 = scalar_lea.vmem %s2, 58
      %v1558 = vld [vmem:[%s1557] sm:$0x1]
      %v1560 = vlaneseq
      %v1561 = vshrl.u32 %v1560, 7
      %v1562 = vsub.s32 0, %v1561
      %v1563 = vrot.slane %v1558, %v1562
      %v1565 = vmul.f32 %v1498, %v1563
      %v1566 = vmul.f32 %v1500, %v1563
      %v1567 = vadd.f32 %v1555, %v1565
      %v1568 = vadd.f32 %v1556, %v1566
      %s1569 = scalar_lea.vmem %s2, 59
      %v1570 = vld [vmem:[%s1569] sm:$0x1]
      %v1572 = vlaneseq
      %v1573 = vshrl.u32 %v1572, 7
      %v1574 = vsub.s32 0, %v1573
      %v1575 = vrot.slane %v1570, %v1574
      %v1577 = vmul.f32 %v1506, %v1575
      %v1578 = vmul.f32 %v1508, %v1575
      %v1579 = vadd.f32 %v1567, %v1577
      %v1580 = vadd.f32 %v1568, %v1578
      %s1581 = scalar_lea.vmem %s2, 60
      %v1582 = vld [vmem:[%s1581] sm:$0x1]
      %v1584 = vlaneseq
      %v1585 = vshrl.u32 %v1584, 7
      %v1586 = vsub.s32 0, %v1585
      %v1587 = vrot.slane %v1582, %v1586
      %v1589 = vmul.f32 %v1502, %v1587
      %v1590 = vmul.f32 %v1504, %v1587
      %v1591 = vadd.f32 %v1495, %v1589
      %v1592 = vadd.f32 %v1496, %v1590
      %s1593 = scalar_lea.vmem %s2, 61
      %v1594 = vld [vmem:[%s1593] sm:$0x1]
      %v1596 = vlaneseq
      %v1597 = vshrl.u32 %v1596, 7
      %v1598 = vsub.s32 0, %v1597
      %v1599 = vrot.slane %v1594, %v1598
      %v1601 = vmul.f32 %v1498, %v1599
      %v1602 = vmul.f32 %v1500, %v1599
      %v1603 = vadd.f32 %v1591, %v1601
      %v1604 = vadd.f32 %v1592, %v1602
      %s1605 = scalar_lea.vmem %s2, 62
      %v1606 = vld [vmem:[%s1605] sm:$0x1]
      %v1608 = vlaneseq
      %v1609 = vshrl.u32 %v1608, 7
      %v1610 = vsub.s32 0, %v1609
      %v1611 = vrot.slane %v1606, %v1610
      %v1613 = vmul.f32 %v1506, %v1611
      %v1614 = vmul.f32 %v1508, %v1611
      %v1615 = vadd.f32 %v1603, %v1613
      %v1616 = vadd.f32 %v1604, %v1614
      %1617 = vrot.lane.b32.xlu0 %v776, 16
      %v1618 = vpop.permute.xlu0 %1617
      %1619 = vrot.lane.b32.xlu0 %v777, 16
      %v1620 = vpop.permute.xlu0 %1619
      %1621 = vrot.lane.b32.xlu0 %v782, 16
      %v1622 = vpop.permute.xlu0 %1621
      %1623 = vrot.lane.b32.xlu0 %v783, 16
      %v1624 = vpop.permute.xlu0 %1623
      %1625 = vrot.lane.b32.xlu0 %v788, 16
      %v1626 = vpop.permute.xlu0 %1625
      %1627 = vrot.lane.b32.xlu0 %v789, 16
      %v1628 = vpop.permute.xlu0 %1627
      %s1629 = scalar_lea.vmem %s2, 63
      %v1630 = vld [vmem:[%s1629] sm:$0x1]
      %v1632 = vlaneseq
      %v1633 = vshrl.u32 %v1632, 7
      %v1634 = vsub.s32 0, %v1633
      %v1635 = vrot.slane %v1630, %v1634
      %v1637 = vmul.f32 %v1622, %v1635
      %v1638 = vmul.f32 %v1624, %v1635
      %v1639 = vadd.f32 %v1543, %v1637
      %v1640 = vadd.f32 %v1544, %v1638
      %s1641 = scalar_lea.vmem %s2, 64
      %v1642 = vld [vmem:[%s1641] sm:$0x1]
      %v1644 = vlaneseq
      %v1645 = vshrl.u32 %v1644, 7
      %v1646 = vsub.s32 0, %v1645
      %v1647 = vrot.slane %v1642, %v1646
      %v1649 = vmul.f32 %v1618, %v1647
      %v1650 = vmul.f32 %v1620, %v1647
      %v1651 = vadd.f32 %v1639, %v1649
      %v1652 = vadd.f32 %v1640, %v1650
      %s1653 = scalar_lea.vmem %s2, 65
      %v1654 = vld [vmem:[%s1653] sm:$0x1]
      %v1656 = vlaneseq
      %v1657 = vshrl.u32 %v1656, 7
      %v1658 = vsub.s32 0, %v1657
      %v1659 = vrot.slane %v1654, %v1658
      %v1661 = vmul.f32 %v1626, %v1659
      %v1662 = vmul.f32 %v1628, %v1659
      %v1663 = vadd.f32 %v1651, %v1661
      %v1664 = vadd.f32 %v1652, %v1662
      %s1665 = scalar_lea.vmem %s2, 66
      %v1666 = vld [vmem:[%s1665] sm:$0x1]
      %v1668 = vlaneseq
      %v1669 = vshrl.u32 %v1668, 7
      %v1670 = vsub.s32 0, %v1669
      %v1671 = vrot.slane %v1666, %v1670
      %v1673 = vmul.f32 %v1622, %v1671
      %v1674 = vmul.f32 %v1624, %v1671
      %v1675 = vadd.f32 %v1579, %v1673
      %v1676 = vadd.f32 %v1580, %v1674
      %s1677 = scalar_lea.vmem %s2, 67
      %v1678 = vld [vmem:[%s1677] sm:$0x1]
      %v1680 = vlaneseq
      %v1681 = vshrl.u32 %v1680, 7
      %v1682 = vsub.s32 0, %v1681
      %v1683 = vrot.slane %v1678, %v1682
      %v1685 = vmul.f32 %v1618, %v1683
      %v1686 = vmul.f32 %v1620, %v1683
      %v1687 = vadd.f32 %v1675, %v1685
      %v1688 = vadd.f32 %v1676, %v1686
      %s1689 = scalar_lea.vmem %s2, 68
      %v1690 = vld [vmem:[%s1689] sm:$0x1]
      %v1692 = vlaneseq
      %v1693 = vshrl.u32 %v1692, 7
      %v1694 = vsub.s32 0, %v1693
      %v1695 = vrot.slane %v1690, %v1694
      %v1697 = vmul.f32 %v1626, %v1695
      %v1698 = vmul.f32 %v1628, %v1695
      %v1699 = vadd.f32 %v1687, %v1697
      %v1700 = vadd.f32 %v1688, %v1698
      %s1701 = scalar_lea.vmem %s2, 69
      %v1702 = vld [vmem:[%s1701] sm:$0x1]
      %v1704 = vlaneseq
      %v1705 = vshrl.u32 %v1704, 7
      %v1706 = vsub.s32 0, %v1705
      %v1707 = vrot.slane %v1702, %v1706
      %v1709 = vmul.f32 %v1622, %v1707
      %v1710 = vmul.f32 %v1624, %v1707
      %v1711 = vadd.f32 %v1615, %v1709
      %v1712 = vadd.f32 %v1616, %v1710
      %s1713 = scalar_lea.vmem %s2, 70
      %v1714 = vld [vmem:[%s1713] sm:$0x1]
      %v1716 = vlaneseq
      %v1717 = vshrl.u32 %v1716, 7
      %v1718 = vsub.s32 0, %v1717
      %v1719 = vrot.slane %v1714, %v1718
      %v1721 = vmul.f32 %v1618, %v1719
      %v1722 = vmul.f32 %v1620, %v1719
      %v1723 = vadd.f32 %v1711, %v1721
      %v1724 = vadd.f32 %v1712, %v1722
      %s1725 = scalar_lea.vmem %s2, 71
      %v1726 = vld [vmem:[%s1725] sm:$0x1]
      %v1728 = vlaneseq
      %v1729 = vshrl.u32 %v1728, 7
      %v1730 = vsub.s32 0, %v1729
      %v1731 = vrot.slane %v1726, %v1730
      %v1733 = vmul.f32 %v1626, %v1731
      %v1734 = vmul.f32 %v1628, %v1731
      %v1735 = vadd.f32 %v1723, %v1733
      %v1736 = vadd.f32 %v1724, %v1734
      %v1737 = vrot.slane %v1663, 7
      %v1738 = vrot.slane %v1664, 7
      %v1739 = vsel %vm678, %v1737, %v1738
      %v1740 = vsel %vm678, %v1738, %v1737
      %v1741 = vsel %vm190, %v1740, 0.0
      %v1742 = vsel %vm191, %v1739, 0.0
      %v1743 = vrot.slane %v1735, 1
      %v1744 = vrot.slane %v1736, 1
      %v1745 = vsel %vm685, %v1743, %v1744
      %v1746 = vsel %vm685, %v1744, %v1743
      %v1747 = vsel %vm192, %v1745, 0.0
      %v1748 = vsel %vm193, %v1746, 0.0
      %v1749 = vadd.f32 %v1741, %v1699
      %v1750 = vadd.f32 %v1742, %v1700
      %v1751 = vadd.f32 %v1749, %v1747
      %v1752 = vadd.f32 %v1750, %v1748
      %v1753 = vadd.f32 %v1751, %v1752
      %v1754 = vrot.slane %v1753, 4
      %v1755 = vadd.f32 %v1753, %v1754
      %v1756 = vrot.slane %v1755, 2
      %v1757 = vadd.f32 %v1755, %v1756
      %v1758 = vrot.slane %v1757, 1
      %v1759 = vadd.f32 %v1757, %v1758
      %1760 = vrot.lane.b32.xlu0 %v1759, 1
      %v1761 = vpop.permute.xlu0 %1760
      %v1762 = vadd.f32 %v1759, %v1761
      %1763 = vrot.lane.b32.xlu0 %v1762, 2
      %v1764 = vpop.permute.xlu0 %1763
      %v1765 = vadd.f32 %v1762, %v1764
      %1766 = vrot.lane.b32.xlu0 %v1765, 4
      %v1767 = vpop.permute.xlu0 %1766
      %v1768 = vadd.f32 %v1765, %v1767
      %1769 = vrot.lane.b32.xlu0 %v1768, 8
      %v1770 = vpop.permute.xlu0 %1769
      %v1771 = vadd.f32 %v1768, %v1770
      %v1772 = vsel %vm194, %v1771, 0.0
      %1773 = vrot.lane.b32.xlu0 %v1772, 127
      %v1774 = vpop.permute.xlu0 %1773
      %v1775 = vadd.f32 %v1772, %v1774
      %1776 = vrot.lane.b32.xlu0 %v1775, 126
      %v1777 = vpop.permute.xlu0 %1776
      %v1778 = vadd.f32 %v1775, %v1777
      %1779 = vrot.lane.b32.xlu0 %v1778, 124
      %v1780 = vpop.permute.xlu0 %1779
      %v1781 = vadd.f32 %v1778, %v1780
      %1782 = vrot.lane.b32.xlu0 %v1781, 120
      %v1783 = vpop.permute.xlu0 %1782
      %v1784 = vadd.f32 %v1781, %v1783
      %v1785 = vmul.f32 %v1784, 0.00390625
      %v1786 = vlaneseq
      %v1787 = vshrl.u32 %v1786, 7
      %v1788 = vsub.s32 0, %v1787
      %v1789 = vrot.slane %v1785, %v1788
      %v1790 = vsub.f32 %v1751, %v1789
      %v1791 = vsub.f32 %v1752, %v1789
      %v1792 = vmul.f32 %v1790, %v1790
      %v1793 = vmul.f32 %v1791, %v1791
      %v1794 = vadd.f32 %v1792, %v1793
      %v1795 = vrot.slane %v1794, 4
      %v1796 = vadd.f32 %v1794, %v1795
      %v1797 = vrot.slane %v1796, 2
      %v1798 = vadd.f32 %v1796, %v1797
      %v1799 = vrot.slane %v1798, 1
      %v1800 = vadd.f32 %v1798, %v1799
      %1801 = vrot.lane.b32.xlu0 %v1800, 1
      %v1802 = vpop.permute.xlu0 %1801
      %v1803 = vadd.f32 %v1800, %v1802
      %1804 = vrot.lane.b32.xlu0 %v1803, 2
      %v1805 = vpop.permute.xlu0 %1804
      %v1806 = vadd.f32 %v1803, %v1805
      %1807 = vrot.lane.b32.xlu0 %v1806, 4
      %v1808 = vpop.permute.xlu0 %1807
      %v1809 = vadd.f32 %v1806, %v1808
      %1810 = vrot.lane.b32.xlu0 %v1809, 8
      %v1811 = vpop.permute.xlu0 %1810
      %v1812 = vadd.f32 %v1809, %v1811
      %v1813 = vsel %vm194, %v1812, 0.0
      %1814 = vrot.lane.b32.xlu0 %v1813, 127
      %v1815 = vpop.permute.xlu0 %1814
      %v1816 = vadd.f32 %v1813, %v1815
      %1817 = vrot.lane.b32.xlu0 %v1816, 126
      %v1818 = vpop.permute.xlu0 %1817
      %v1819 = vadd.f32 %v1816, %v1818
      %1820 = vrot.lane.b32.xlu0 %v1819, 124
      %v1821 = vpop.permute.xlu0 %1820
      %v1822 = vadd.f32 %v1819, %v1821
      %1823 = vrot.lane.b32.xlu0 %v1822, 120
      %v1824 = vpop.permute.xlu0 %1823
      %v1825 = vadd.f32 %v1822, %v1824
      %v1826 = vmul.f32 %v1825, 0.00390625
      %v1827 = vadd.f32 %v1826, 1e-05
      %v1828 = vrsqrt.pop %v1827
      %v1829 = vlaneseq
      %v1830 = vshrl.u32 %v1829, 7
      %v1831 = vsub.s32 0, %v1830
      %v1832 = vrot.slane %v1828, %v1831
      %v1833 = vmul.f32 %v1790, %v1832
      %v1834 = vmul.f32 %v1791, %v1832
      %v1835 = vmax.f32 %v1833, 0.0
      %v1836 = vmax.f32 %v1834, 0.0
      %1837 = vst [vmem:[%s170] sm:$0xff] %v1835
      %1838 = vst [vmem:[%s170 + $0x8] sm:$0xff] %v1836
      %p1839 = scmp.lt.s32.totalorder %s14, 1
      %s1840 = scalar_select %p1839, %s14, 1
      %s1841 = smul.addr %s1840, 2
      %s1842 = smul.addr %s1841, 8
      %s1843 = scalar_lea.vmem %s3, %s1842
      // Predicated region
      $region33: #{double_conv.1} parent=31 // pred_check
        %p1844 = pneg %p100
      $region34: #{double_conv.1} parent=31 // pred_check_branch
        %1846 = sbr.rel (%p1844) target = $region36
      $region35: #{double_conv.1} parent=31 // pred_region
        _
      $region36: #{double_conv.1} parent=31 // pred_fallthru
        _
    $region32: #{double_conv.1} parent=5 // pred_fallthru
      _
    %p1847 = scmp.le.s32.totalorder 2, %s9
    // Predicated region
    $region37: #{double_conv.1} parent=5 // pred_check
      %p1848 = pneg %p1847
    $region38: #{double_conv.1} parent=5 // pred_check_branch
      %1850 = sbr.rel (%p1848) target = $region40
    $region39: #{double_conv.1} parent=5 // pred_region
      %s1851 = ssub.s32 %s9, 2
      // Predicated region
      $region41: #{double_conv.1} parent=39 // pred_check
        %p1852 = pneg %p106
      $region42: #{double_conv.1} parent=39 // pred_check_branch
        %1854 = sbr.rel (%p1852) target = $region44
      $region43: #{double_conv.1} parent=39 // pred_region
        %p1855 = scmp.lt.s32.totalorder %s15, 1
        %s1856 = scalar_select %p1855, %s15, 1
        %s1857 = smul.addr %s1856, 2
        %s1858 = smul.addr %s1857, 8
        %s1859 = scalar_lea.vmem %s3, %s1858
      $region44: #{double_conv.1} parent=39 // pred_fallthru
        _
    $region40: #{double_conv.1} parent=5 // pred_fallthru
      _
  $region6: #{double_conv.1} parent=0 // loop_footer
    %s13 = sadd.s32 1, %s9
  $region7: #{double_conv.1} parent=0 // loop_footer_branch
    %8 = sbr.rel target = $region3
  $region8: #{double_conv.1} parent=0 // loop_exit
    _

</llo_original>
